<compile_context>
chip_gen: v7x
topology: tpu7x:2x2x1
jax: 0.10.0
libtpu: 0.0.40
codegen_flags: <defaults>
</compile_context>

<pallas_src>
import functools

import jax
import jax.numpy as jnp
import numpy as np
from jax.experimental import pallas as pl
from jax.experimental.pallas import tpu as pltpu


PARAM_ORDER = ("w1f", "b1", "w2f", "b2", "w3f", "b3",
               "ca_w1", "ca_b1", "ca_w2", "ca_b2", "w4", "b4")


# ----------------------------- Pallas kernel --------------------------------
def block_kernel(x_ref,
                 w1_ref, b1_ref, w2_ref, b2_ref, w3_ref, b3_ref,
                 caw1_ref, cab1_ref, caw2_ref, cab2_ref,
                 w4_ref, b4_ref,
                 o_ref, *, L, Bt):
    C, N = x_ref.shape                         # (64, Bt*L)
    x = x_ref[...]                             # f32

    # Single (1, N) lane-position row (batch folded along lanes); broadcast in selects.
    pos = jax.lax.broadcasted_iota(jnp.int32, (1, N), 1) % L

    def conv_same(inp, w_ref, b_ref, K):
        # inp: (C, N) f32; w_ref: (Cout, K*C) bf16; b_ref: (Cout, 1) f32.
        pad = K // 2
        parts = []
        for k in range(K):
            s = k - pad                        # shifted[:, l] = inp[:, l + s]
            if s == 0:
                shifted = inp
            else:
                shifted = pltpu.roll(inp, shift=(-s) % N, axis=1)
                if s < 0:                      # zero-padding at left segment boundary
                    shifted = jnp.where(pos >= -s, shifted, 0.0)
                else:                          # zero-padding at right segment boundary
                    shifted = jnp.where(pos < L - s, shifted, 0.0)
            parts.append(shifted.astype(jnp.bfloat16))
        stacked = jnp.concatenate(parts, axis=0)          # (K*C, N) bf16
        acc = jnp.dot(w_ref[...], stacked, preferred_element_type=jnp.float32)
        return acc + b_ref[...]                # single hoisted bias broadcast

    h = jax.nn.relu(conv_same(x, w1_ref, b1_ref, 7))
    h = jax.nn.relu(conv_same(h, w2_ref, b2_ref, 5))
    h = jax.nn.relu(conv_same(h, w3_ref, b3_ref, 3))

    # Residual 1x1 conv on the original input (full lane width, one matmul).
    res = jnp.dot(w4_ref[...], x.astype(jnp.bfloat16),
                  preferred_element_type=jnp.float32) + b4_ref[...]

    # CALayer (squeeze-excite) per batch element, gate, residual add, ReLU.
    caw1, cab1 = caw1_ref[...], cab1_ref[...]
    caw2, cab2 = caw2_ref[...], cab2_ref[...]
    for b in range(Bt):                        # static unrolled loop, 128-aligned slices
        lo, hi = b * L, (b + 1) * L
        h_b = h[:, lo:hi]                                        # (C, L)
        pooled = jnp.mean(h_b, axis=1, keepdims=True)            # (C, 1)  XLU reduce
        z = jax.nn.relu(
            jnp.dot(caw1, pooled, preferred_element_type=jnp.float32) + cab1)
        att = jax.nn.sigmoid(
            jnp.dot(caw2, z, preferred_element_type=jnp.float32) + cab2)
        o_ref[:, lo:hi] = jax.nn.relu(h_b * att + res[:, lo:hi])


# ------------------------------ wrapper --------------------------------------
@jax.jit
def block_forward(x, kp):
    B, C, L = x.shape
    # Batch tile per grid step: largest divisor of B (amortize per-step overhead).
    if L % 128 == 0:
        Bt = next(d for d in (8, 4, 2, 1) if B % d == 0)
    else:
        Bt = B                    # full-array block is always a legal block shape
    N = Bt * L

    # Lane-dense layout: (B, C, L) -> (C, B*L); columns grouped per batch element.
    x2d = jnp.transpose(x, (1, 0, 2)).reshape(C, B * L)

    def full_spec(arr):
        nd = arr.ndim
        return pl.BlockSpec(arr.shape, lambda i, _nd=nd: (0,) * _nd)

    in_specs = [pl.BlockSpec((C, N), lambda i: (0, i))]
    in_specs += [full_spec(kp[name]) for name in PARAM_ORDER]
    out_spec = pl.BlockSpec((C, N), lambda i: (0, i))

    flops = 2 * B * L * C * C * (7 + 5 + 3 + 1)
    param_bytes = sum(int(np.prod(kp[n].shape)) * kp[n].dtype.itemsize
                      for n in PARAM_ORDER)
    cost = pl.CostEstimate(flops=flops, transcendentals=B * C,
                           bytes_accessed=2 * B * C * L * 4 + param_bytes)

    out2d = pl.pallas_call(
        functools.partial(block_kernel, L=L, Bt=Bt),
        out_shape=jax.ShapeDtypeStruct((C, B * L), jnp.float32),
        grid=(B // Bt,),
        in_specs=in_specs,
        out_specs=out_spec,
        compiler_params=pltpu.CompilerParams(dimension_semantics=("parallel",)),
        cost_estimate=cost,
    )(x2d, *[kp[name] for name in PARAM_ORDER])

    return out2d.reshape(C, B, L).transpose(1, 0, 2)


# --------------------------- parameter setup ----------------------------------
def init_params(key, C=64, reduction=8):
    ks = jax.random.split(key, 12)
    rnd = lambda k, shape, s=0.05: (s * jax.random.normal(k, shape)).astype(jnp.float32)
    Cr = C // reduction
    return {
        # conv weights stored as (K, Cout, Cin); biases as (Cout, 1)
        'w1': rnd(ks[0], (7, C, C)), 'b1': rnd(ks[1], (C, 1)),
        'w2': rnd(ks[2], (5, C, C)), 'b2': rnd(ks[3], (C, 1)),
        'w3': rnd(ks[4], (3, C, C)), 'b3': rnd(ks[5], (C, 1)),
        'ca_w1': rnd(ks[6], (Cr, C)), 'ca_b1': rnd(ks[7], (Cr, 1)),
        'ca_w2': rnd(ks[8], (C, Cr)), 'ca_b2': rnd(ks[9], (C, 1)),
        'w4': rnd(ks[10], (C, C)), 'b4': rnd(ks[11], (C, 1)),
    }


def fold_kernel_params(p):
    """Kernel-side layout: conv taps folded into (Cout, K*Cin) bf16 matrices."""
    def fold(w_koc):
        K, Co, Ci = w_koc.shape
        # folded[o, k*Cin + c] = w[k, o, c]  (matches sublane-stacked shifted input)
        return jnp.transpose(w_koc, (1, 0, 2)).reshape(Co, K * Ci).astype(jnp.bfloat16)
    return {
        'w1f': fold(p['w1']), 'b1': p['b1'],
        'w2f': fold(p['w2']), 'b2': p['b2'],
        'w3f': fold(p['w3']), 'b3': p['b3'],
        'ca_w1': p['ca_w1'], 'ca_b1': p['ca_b1'],
        'ca_w2': p['ca_w2'], 'ca_b2': p['ca_b2'],
        'w4': p['w4'].astype(jnp.bfloat16), 'b4': p['b4'],
    }


# --------------------------- pure-JAX reference --------------------------------
def block_reference(x, p):
    def conv1d(inp, w_kio, b, pad):
        w = jnp.transpose(w_kio, (1, 2, 0))     # (K,Cout,Cin) -> (Cout,Cin,K)
        y = jax.lax.conv_general_dilated(
            inp, w, window_strides=(1,), padding=[(pad, pad)],
            dimension_numbers=('NCH', 'OIH', 'NCH'))
        return y + b[None, :, :]

    res = jnp.einsum('oc,bcl->bol', p['w4'], x) + p['b4'][None]
    h = jax.nn.relu(conv1d(x, p['w1'], p['b1'], 3))
    h = jax.nn.relu(conv1d(h, p['w2'], p['b2'], 2))
    h = jax.nn.relu(conv1d(h, p['w3'], p['b3'], 1))
    pooled = jnp.mean(h, axis=2, keepdims=True)
    z = jax.nn.relu(jnp.einsum('oc,bcl->bol', p['ca_w1'], pooled) + p['ca_b1'][None])
    att = jax.nn.sigmoid(jnp.einsum('oc,bcl->bol', p['ca_w2'], z) + p['ca_b2'][None])
    return jax.nn.relu(h * att + res)


if __name__ == "__main__":
    B, C, L = 4, 64, 128          # channel count (64) is fixed by the module
    key = jax.random.PRNGKey(0)
    k_x, k_p = jax.random.split(key)
    x = jax.random.normal(k_x, (B, C, L), dtype=jnp.float32)
    params = init_params(k_p, C=C)
    kparams = fold_kernel_params(params)

    out = jax.block_until_ready(block_forward(x, kparams))
    ref = jax.block_until_ready(block_reference(x, params))

    # Conv/residual matmul operands are bf16 -> looser tolerance vs f32 reference.
    np.testing.assert_allclose(np.asarray(out), np.asarray(ref), atol=2e-2, rtol=2e-2)

    print("KERNEL_OK")
</pallas_src>

<mosaic_0001>
module attributes {stable_mosaic.version = 11 : i64} {
  func.func @block_kernel(%arg0: i32, %arg1: memref<64x512xf32, #tpu.memory_space<vmem>>, %arg2: memref<64x448xbf16, #tpu.memory_space<vmem>>, %arg3: memref<64x1xf32, #tpu.memory_space<vmem>>, %arg4: memref<64x320xbf16, #tpu.memory_space<vmem>>, %arg5: memref<64x1xf32, #tpu.memory_space<vmem>>, %arg6: memref<64x192xbf16, #tpu.memory_space<vmem>>, %arg7: memref<64x1xf32, #tpu.memory_space<vmem>>, %arg8: memref<8x64xf32, #tpu.memory_space<vmem>>, %arg9: memref<8x1xf32, #tpu.memory_space<vmem>>, %arg10: memref<64x8xf32, #tpu.memory_space<vmem>>, %arg11: memref<64x1xf32, #tpu.memory_space<vmem>>, %arg12: memref<64x64xbf16, #tpu.memory_space<vmem>>, %arg13: memref<64x1xf32, #tpu.memory_space<vmem>>, %arg14: memref<64x512xf32, #tpu.memory_space<vmem>>) attributes {dimension_semantics = [#tpu.dimension_semantics<parallel>], iteration_bounds = array<i64: 1>, scalar_prefetch = 0 : i64, scratch_operands = 0 : i64, tpu.core_type = #tpu.core_type<tc>, window_params = [{transform_indices = @transform_0, window_bounds = array<i64: 64, 512>}, {pipeline_mode = #tpu.pipeline_mode<synchronous>, transform_indices = @transform_1, window_bounds = array<i64: 64, 448>}, {pipeline_mode = #tpu.pipeline_mode<synchronous>, transform_indices = @transform_2, window_bounds = array<i64: 64, 1>}, {pipeline_mode = #tpu.pipeline_mode<synchronous>, transform_indices = @transform_3, window_bounds = array<i64: 64, 320>}, {pipeline_mode = #tpu.pipeline_mode<synchronous>, transform_indices = @transform_4, window_bounds = array<i64: 64, 1>}, {pipeline_mode = #tpu.pipeline_mode<synchronous>, transform_indices = @transform_5, window_bounds = array<i64: 64, 192>}, {pipeline_mode = #tpu.pipeline_mode<synchronous>, transform_indices = @transform_6, window_bounds = array<i64: 64, 1>}, {pipeline_mode = #tpu.pipeline_mode<synchronous>, transform_indices = @transform_7, window_bounds = array<i64: 8, 64>}, {pipeline_mode = #tpu.pipeline_mode<synchronous>, transform_indices = @transform_8, window_bounds = array<i64: 8, 1>}, {pipeline_mode = #tpu.pipeline_mode<synchronous>, transform_indices = @transform_9, window_bounds = array<i64: 64, 8>}, {pipeline_mode = #tpu.pipeline_mode<synchronous>, transform_indices = @transform_10, window_bounds = array<i64: 64, 1>}, {pipeline_mode = #tpu.pipeline_mode<synchronous>, transform_indices = @transform_11, window_bounds = array<i64: 64, 64>}, {pipeline_mode = #tpu.pipeline_mode<synchronous>, transform_indices = @transform_12, window_bounds = array<i64: 64, 1>}, {transform_indices = @transform_13, window_bounds = array<i64: 64, 512>}]} {
    %c0 = arith.constant 0 : index
    %c0_0 = arith.constant 0 : index
    %0 = vector.load %arg1[%c0, %c0_0] : memref<64x512xf32, #tpu.memory_space<vmem>>, vector<64x512xf32>
    %1 = tpu.iota {dimensions = array<i32: 1>} : vector<1x512xi32>
    %c128_i32 = arith.constant 128 : i32
    %c0_i32 = arith.constant 0 : i32
    %2 = arith.cmpi eq, %c128_i32, %c0_i32 : i32
    %c1_i32 = arith.constant 1 : i32
    %3 = arith.select %2, %c1_i32, %c128_i32 : i32
    %4 = vector.broadcast %3 : i32 to vector<1x512xi32>
    %5 = arith.remsi %1, %4 : vector<1x512xi32>
    %c0_i32_1 = arith.constant 0 : i32
    %6 = vector.broadcast %c0_i32_1 : i32 to vector<1x512xi32>
    %7 = arith.cmpi ne, %5, %6 : vector<1x512xi32>
    %c0_i32_2 = arith.constant 0 : i32
    %8 = vector.broadcast %c0_i32_2 : i32 to vector<1x512xi32>
    %9 = arith.cmpi slt, %5, %8 : vector<1x512xi32>
    %c0_i32_3 = arith.constant 0 : i32
    %10 = arith.cmpi slt, %3, %c0_i32_3 : i32
    %11 = vector.broadcast %10 : i1 to vector<1x512xi1>
    %12 = vector.broadcast %11 : vector<1x512xi1> to vector<1x512xi1>
    %13 = arith.xori %9, %12 : vector<1x512xi1>
    %14 = arith.andi %13, %7 : vector<1x512xi1>
    %15 = vector.broadcast %3 : i32 to vector<1x512xi32>
    %16 = arith.addi %5, %15 : vector<1x512xi32>
    %17 = arith.select %14, %16, %5 : vector<1x512xi1>, vector<1x512xi32>
    %c3_i32 = arith.constant 3 : i32
    %18 = tpu.dynamic_rotate %0 by %c3_i32 dim 1 : vector<64x512xf32>, i32 -> vector<64x512xf32>
    %c3_i32_4 = arith.constant 3 : i32
    %19 = vector.broadcast %c3_i32_4 : i32 to vector<1x512xi32>
    %20 = arith.cmpi sge, %17, %19 : vector<1x512xi32>
    %cst = arith.constant 0.000000e+00 : f32
    %21 = vector.shape_cast %20 : vector<1x512xi1> to vector<1x512xi1>
    %22 = vector.broadcast %21 : vector<1x512xi1> to vector<64x512xi1>
    %23 = vector.broadcast %cst : f32 to vector<64x512xf32>
    %24 = arith.select %22, %18, %23 : vector<64x512xi1>, vector<64x512xf32>
    %25 = arith.truncf %24 : vector<64x512xf32> to vector<64x512xbf16>
    %c2_i32 = arith.constant 2 : i32
    %26 = tpu.dynamic_rotate %0 by %c2_i32 dim 1 : vector<64x512xf32>, i32 -> vector<64x512xf32>
    %c2_i32_5 = arith.constant 2 : i32
    %27 = vector.broadcast %c2_i32_5 : i32 to vector<1x512xi32>
    %28 = arith.cmpi sge, %17, %27 : vector<1x512xi32>
    %cst_6 = arith.constant 0.000000e+00 : f32
    %29 = vector.shape_cast %28 : vector<1x512xi1> to vector<1x512xi1>
    %30 = vector.broadcast %29 : vector<1x512xi1> to vector<64x512xi1>
    %31 = vector.broadcast %cst_6 : f32 to vector<64x512xf32>
    %32 = arith.select %30, %26, %31 : vector<64x512xi1>, vector<64x512xf32>
    %33 = arith.truncf %32 : vector<64x512xf32> to vector<64x512xbf16>
    %c1_i32_7 = arith.constant 1 : i32
    %34 = tpu.dynamic_rotate %0 by %c1_i32_7 dim 1 : vector<64x512xf32>, i32 -> vector<64x512xf32>
    %c1_i32_8 = arith.constant 1 : i32
    %35 = vector.broadcast %c1_i32_8 : i32 to vector<1x512xi32>
    %36 = arith.cmpi sge, %17, %35 : vector<1x512xi32>
    %cst_9 = arith.constant 0.000000e+00 : f32
    %37 = vector.shape_cast %36 : vector<1x512xi1> to vector<1x512xi1>
    %38 = vector.broadcast %37 : vector<1x512xi1> to vector<64x512xi1>
    %39 = vector.broadcast %cst_9 : f32 to vector<64x512xf32>
    %40 = arith.select %38, %34, %39 : vector<64x512xi1>, vector<64x512xf32>
    %41 = arith.truncf %40 : vector<64x512xf32> to vector<64x512xbf16>
    %42 = arith.truncf %0 : vector<64x512xf32> to vector<64x512xbf16>
    %c511_i32 = arith.constant 511 : i32
    %43 = tpu.dynamic_rotate %0 by %c511_i32 dim 1 : vector<64x512xf32>, i32 -> vector<64x512xf32>
    %c127_i32 = arith.constant 127 : i32
    %44 = vector.broadcast %c127_i32 : i32 to vector<1x512xi32>
    %45 = arith.cmpi slt, %17, %44 : vector<1x512xi32>
    %cst_10 = arith.constant 0.000000e+00 : f32
    %46 = vector.shape_cast %45 : vector<1x512xi1> to vector<1x512xi1>
    %47 = vector.broadcast %46 : vector<1x512xi1> to vector<64x512xi1>
    %48 = vector.broadcast %cst_10 : f32 to vector<64x512xf32>
    %49 = arith.select %47, %43, %48 : vector<64x512xi1>, vector<64x512xf32>
    %50 = arith.truncf %49 : vector<64x512xf32> to vector<64x512xbf16>
    %c510_i32 = arith.constant 510 : i32
    %51 = tpu.dynamic_rotate %0 by %c510_i32 dim 1 : vector<64x512xf32>, i32 -> vector<64x512xf32>
    %c126_i32 = arith.constant 126 : i32
    %52 = vector.broadcast %c126_i32 : i32 to vector<1x512xi32>
    %53 = arith.cmpi slt, %17, %52 : vector<1x512xi32>
    %cst_11 = arith.constant 0.000000e+00 : f32
    %54 = vector.shape_cast %53 : vector<1x512xi1> to vector<1x512xi1>
    %55 = vector.broadcast %54 : vector<1x512xi1> to vector<64x512xi1>
    %56 = vector.broadcast %cst_11 : f32 to vector<64x512xf32>
    %57 = arith.select %55, %51, %56 : vector<64x512xi1>, vector<64x512xf32>
    %58 = arith.truncf %57 : vector<64x512xf32> to vector<64x512xbf16>
    %c509_i32 = arith.constant 509 : i32
    %59 = tpu.dynamic_rotate %0 by %c509_i32 dim 1 : vector<64x512xf32>, i32 -> vector<64x512xf32>
    %c125_i32 = arith.constant 125 : i32
    %60 = vector.broadcast %c125_i32 : i32 to vector<1x512xi32>
    %61 = arith.cmpi slt, %17, %60 : vector<1x512xi32>
    %cst_12 = arith.constant 0.000000e+00 : f32
    %62 = vector.shape_cast %61 : vector<1x512xi1> to vector<1x512xi1>
    %63 = vector.broadcast %62 : vector<1x512xi1> to vector<64x512xi1>
    %64 = vector.broadcast %cst_12 : f32 to vector<64x512xf32>
    %65 = arith.select %63, %59, %64 : vector<64x512xi1>, vector<64x512xf32>
    %66 = arith.truncf %65 : vector<64x512xf32> to vector<64x512xbf16>
    %67 = tpu.concatenate %25, %33, %41, %42, %50, %58, %66 in 0 : vector<64x512xbf16>, vector<64x512xbf16>, vector<64x512xbf16>, vector<64x512xbf16>, vector<64x512xbf16>, vector<64x512xbf16>, vector<64x512xbf16> -> vector<448x512xbf16>
    %c0_13 = arith.constant 0 : index
    %c0_14 = arith.constant 0 : index
    %68 = vector.load %arg2[%c0_13, %c0_14] : memref<64x448xbf16, #tpu.memory_space<vmem>>, vector<64x448xbf16>
    %cst_15 = arith.constant dense<0.000000e+00> : vector<64x512xf32>
    %69 = tpu.matmul %68, %67, %cst_15 {dimension_numbers = #tpu.dot_dimension_numbers<[1], [0], [0], [1], [0, 0, 1, 1], [], []>} : vector<64x448xbf16>, vector<448x512xbf16>, vector<64x512xf32> -> vector<64x512xf32>
    %c0_16 = arith.constant 0 : index
    %c0_17 = arith.constant 0 : index
    %70 = vector.load %arg3[%c0_16, %c0_17] : memref<64x1xf32, #tpu.memory_space<vmem>>, vector<64x1xf32>
    %71 = vector.broadcast %70 : vector<64x1xf32> to vector<64x512xf32>
    %72 = arith.addf %69, %71 : vector<64x512xf32>
    %cst_18 = arith.constant 0.000000e+00 : f32
    %73 = vector.broadcast %cst_18 : f32 to vector<64x512xf32>
    %74 = arith.maximumf %72, %73 : vector<64x512xf32>
    %c2_i32_19 = arith.constant 2 : i32
    %75 = tpu.dynamic_rotate %74 by %c2_i32_19 dim 1 : vector<64x512xf32>, i32 -> vector<64x512xf32>
    %c2_i32_20 = arith.constant 2 : i32
    %76 = vector.broadcast %c2_i32_20 : i32 to vector<1x512xi32>
    %77 = arith.cmpi sge, %17, %76 : vector<1x512xi32>
    %cst_21 = arith.constant 0.000000e+00 : f32
    %78 = vector.shape_cast %77 : vector<1x512xi1> to vector<1x512xi1>
    %79 = vector.broadcast %78 : vector<1x512xi1> to vector<64x512xi1>
    %80 = vector.broadcast %cst_21 : f32 to vector<64x512xf32>
    %81 = arith.select %79, %75, %80 : vector<64x512xi1>, vector<64x512xf32>
    %82 = arith.truncf %81 : vector<64x512xf32> to vector<64x512xbf16>
    %c1_i32_22 = arith.constant 1 : i32
    %83 = tpu.dynamic_rotate %74 by %c1_i32_22 dim 1 : vector<64x512xf32>, i32 -> vector<64x512xf32>
    %c1_i32_23 = arith.constant 1 : i32
    %84 = vector.broadcast %c1_i32_23 : i32 to vector<1x512xi32>
    %85 = arith.cmpi sge, %17, %84 : vector<1x512xi32>
    %cst_24 = arith.constant 0.000000e+00 : f32
    %86 = vector.shape_cast %85 : vector<1x512xi1> to vector<1x512xi1>
    %87 = vector.broadcast %86 : vector<1x512xi1> to vector<64x512xi1>
    %88 = vector.broadcast %cst_24 : f32 to vector<64x512xf32>
    %89 = arith.select %87, %83, %88 : vector<64x512xi1>, vector<64x512xf32>
    %90 = arith.truncf %89 : vector<64x512xf32> to vector<64x512xbf16>
    %91 = arith.truncf %74 : vector<64x512xf32> to vector<64x512xbf16>
    %c511_i32_25 = arith.constant 511 : i32
    %92 = tpu.dynamic_rotate %74 by %c511_i32_25 dim 1 : vector<64x512xf32>, i32 -> vector<64x512xf32>
    %c127_i32_26 = arith.constant 127 : i32
    %93 = vector.broadcast %c127_i32_26 : i32 to vector<1x512xi32>
    %94 = arith.cmpi slt, %17, %93 : vector<1x512xi32>
    %cst_27 = arith.constant 0.000000e+00 : f32
    %95 = vector.shape_cast %94 : vector<1x512xi1> to vector<1x512xi1>
    %96 = vector.broadcast %95 : vector<1x512xi1> to vector<64x512xi1>
    %97 = vector.broadcast %cst_27 : f32 to vector<64x512xf32>
    %98 = arith.select %96, %92, %97 : vector<64x512xi1>, vector<64x512xf32>
    %99 = arith.truncf %98 : vector<64x512xf32> to vector<64x512xbf16>
    %c510_i32_28 = arith.constant 510 : i32
    %100 = tpu.dynamic_rotate %74 by %c510_i32_28 dim 1 : vector<64x512xf32>, i32 -> vector<64x512xf32>
    %c126_i32_29 = arith.constant 126 : i32
    %101 = vector.broadcast %c126_i32_29 : i32 to vector<1x512xi32>
    %102 = arith.cmpi slt, %17, %101 : vector<1x512xi32>
    %cst_30 = arith.constant 0.000000e+00 : f32
    %103 = vector.shape_cast %102 : vector<1x512xi1> to vector<1x512xi1>
    %104 = vector.broadcast %103 : vector<1x512xi1> to vector<64x512xi1>
    %105 = vector.broadcast %cst_30 : f32 to vector<64x512xf32>
    %106 = arith.select %104, %100, %105 : vector<64x512xi1>, vector<64x512xf32>
    %107 = arith.truncf %106 : vector<64x512xf32> to vector<64x512xbf16>
    %108 = tpu.concatenate %82, %90, %91, %99, %107 in 0 : vector<64x512xbf16>, vector<64x512xbf16>, vector<64x512xbf16>, vector<64x512xbf16>, vector<64x512xbf16> -> vector<320x512xbf16>
    %c0_31 = arith.constant 0 : index
    %c0_32 = arith.constant 0 : index
    %109 = vector.load %arg4[%c0_31, %c0_32] : memref<64x320xbf16, #tpu.memory_space<vmem>>, vector<64x320xbf16>
    %cst_33 = arith.constant dense<0.000000e+00> : vector<64x512xf32>
    %110 = tpu.matmul %109, %108, %cst_33 {dimension_numbers = #tpu.dot_dimension_numbers<[1], [0], [0], [1], [0, 0, 1, 1], [], []>} : vector<64x320xbf16>, vector<320x512xbf16>, vector<64x512xf32> -> vector<64x512xf32>
    %c0_34 = arith.constant 0 : index
    %c0_35 = arith.constant 0 : index
    %111 = vector.load %arg5[%c0_34, %c0_35] : memref<64x1xf32, #tpu.memory_space<vmem>>, vector<64x1xf32>
    %112 = vector.broadcast %111 : vector<64x1xf32> to vector<64x512xf32>
    %113 = arith.addf %110, %112 : vector<64x512xf32>
    %cst_36 = arith.constant 0.000000e+00 : f32
    %114 = vector.broadcast %cst_36 : f32 to vector<64x512xf32>
    %115 = arith.maximumf %113, %114 : vector<64x512xf32>
    %c1_i32_37 = arith.constant 1 : i32
    %116 = tpu.dynamic_rotate %115 by %c1_i32_37 dim 1 : vector<64x512xf32>, i32 -> vector<64x512xf32>
    %c1_i32_38 = arith.constant 1 : i32
    %117 = vector.broadcast %c1_i32_38 : i32 to vector<1x512xi32>
    %118 = arith.cmpi sge, %17, %117 : vector<1x512xi32>
    %cst_39 = arith.constant 0.000000e+00 : f32
    %119 = vector.shape_cast %118 : vector<1x512xi1> to vector<1x512xi1>
    %120 = vector.broadcast %119 : vector<1x512xi1> to vector<64x512xi1>
    %121 = vector.broadcast %cst_39 : f32 to vector<64x512xf32>
    %122 = arith.select %120, %116, %121 : vector<64x512xi1>, vector<64x512xf32>
    %123 = arith.truncf %122 : vector<64x512xf32> to vector<64x512xbf16>
    %124 = arith.truncf %115 : vector<64x512xf32> to vector<64x512xbf16>
    %c511_i32_40 = arith.constant 511 : i32
    %125 = tpu.dynamic_rotate %115 by %c511_i32_40 dim 1 : vector<64x512xf32>, i32 -> vector<64x512xf32>
    %c127_i32_41 = arith.constant 127 : i32
    %126 = vector.broadcast %c127_i32_41 : i32 to vector<1x512xi32>
    %127 = arith.cmpi slt, %17, %126 : vector<1x512xi32>
    %cst_42 = arith.constant 0.000000e+00 : f32
    %128 = vector.shape_cast %127 : vector<1x512xi1> to vector<1x512xi1>
    %129 = vector.broadcast %128 : vector<1x512xi1> to vector<64x512xi1>
    %130 = vector.broadcast %cst_42 : f32 to vector<64x512xf32>
    %131 = arith.select %129, %125, %130 : vector<64x512xi1>, vector<64x512xf32>
    %132 = arith.truncf %131 : vector<64x512xf32> to vector<64x512xbf16>
    %133 = tpu.concatenate %123, %124, %132 in 0 : vector<64x512xbf16>, vector<64x512xbf16>, vector<64x512xbf16> -> vector<192x512xbf16>
    %c0_43 = arith.constant 0 : index
    %c0_44 = arith.constant 0 : index
    %134 = vector.load %arg6[%c0_43, %c0_44] : memref<64x192xbf16, #tpu.memory_space<vmem>>, vector<64x192xbf16>
    %cst_45 = arith.constant dense<0.000000e+00> : vector<64x512xf32>
    %135 = tpu.matmul %134, %133, %cst_45 {dimension_numbers = #tpu.dot_dimension_numbers<[1], [0], [0], [1], [0, 0, 1, 1], [], []>} : vector<64x192xbf16>, vector<192x512xbf16>, vector<64x512xf32> -> vector<64x512xf32>
    %c0_46 = arith.constant 0 : index
    %c0_47 = arith.constant 0 : index
    %136 = vector.load %arg7[%c0_46, %c0_47] : memref<64x1xf32, #tpu.memory_space<vmem>>, vector<64x1xf32>
    %137 = vector.broadcast %136 : vector<64x1xf32> to vector<64x512xf32>
    %138 = arith.addf %135, %137 : vector<64x512xf32>
    %cst_48 = arith.constant 0.000000e+00 : f32
    %139 = vector.broadcast %cst_48 : f32 to vector<64x512xf32>
    %140 = arith.maximumf %138, %139 : vector<64x512xf32>
    %c0_49 = arith.constant 0 : index
    %c0_50 = arith.constant 0 : index
    %141 = vector.load %arg12[%c0_49, %c0_50] : memref<64x64xbf16, #tpu.memory_space<vmem>>, vector<64x64xbf16>
    %142 = arith.truncf %0 : vector<64x512xf32> to vector<64x512xbf16>
    %cst_51 = arith.constant dense<0.000000e+00> : vector<64x512xf32>
    %143 = tpu.matmul %141, %142, %cst_51 {dimension_numbers = #tpu.dot_dimension_numbers<[1], [0], [0], [1], [0, 0, 1, 1], [], []>} : vector<64x64xbf16>, vector<64x512xbf16>, vector<64x512xf32> -> vector<64x512xf32>
    %c0_52 = arith.constant 0 : index
    %c0_53 = arith.constant 0 : index
    %144 = vector.load %arg13[%c0_52, %c0_53] : memref<64x1xf32, #tpu.memory_space<vmem>>, vector<64x1xf32>
    %145 = vector.broadcast %144 : vector<64x1xf32> to vector<64x512xf32>
    %146 = arith.addf %143, %145 : vector<64x512xf32>
    %c0_54 = arith.constant 0 : index
    %c0_55 = arith.constant 0 : index
    %147 = vector.load %arg8[%c0_54, %c0_55] : memref<8x64xf32, #tpu.memory_space<vmem>>, vector<8x64xf32>
    %c0_56 = arith.constant 0 : index
    %c0_57 = arith.constant 0 : index
    %148 = vector.load %arg9[%c0_56, %c0_57] : memref<8x1xf32, #tpu.memory_space<vmem>>, vector<8x1xf32>
    %c0_58 = arith.constant 0 : index
    %c0_59 = arith.constant 0 : index
    %149 = vector.load %arg10[%c0_58, %c0_59] : memref<64x8xf32, #tpu.memory_space<vmem>>, vector<64x8xf32>
    %c0_60 = arith.constant 0 : index
    %c0_61 = arith.constant 0 : index
    %150 = vector.load %arg11[%c0_60, %c0_61] : memref<64x1xf32, #tpu.memory_space<vmem>>, vector<64x1xf32>
    %151 = vector.extract_strided_slice %140 {offsets = [0, 0], sizes = [64, 128], strides = [1, 1]} : vector<64x512xf32> to vector<64x128xf32>
    %cst_62 = arith.constant dense<0.000000e+00> : vector<64xf32>
    %152 = vector.multi_reduction <add>, %151, %cst_62 [1] : vector<64x128xf32> to vector<64xf32>
    %153 = vector.shape_cast %152 : vector<64xf32> to vector<64x1xf32>
    %cst_63 = arith.constant 1.280000e+02 : f32
    %154 = vector.broadcast %cst_63 : f32 to vector<64x1xf32>
    %155 = arith.divf %153, %154 : vector<64x1xf32>
    %cst_64 = arith.constant dense<0.000000e+00> : vector<8x1xf32>
    %156 = tpu.matmul %147, %155, %cst_64 {dimension_numbers = #tpu.dot_dimension_numbers<[1], [0], [0], [1], [0, 0, 1, 1], [], []>} : vector<8x64xf32>, vector<64x1xf32>, vector<8x1xf32> -> vector<8x1xf32>
    %157 = arith.addf %156, %148 : vector<8x1xf32>
    %cst_65 = arith.constant 0.000000e+00 : f32
    %158 = vector.broadcast %cst_65 : f32 to vector<8x1xf32>
    %159 = arith.maximumf %157, %158 : vector<8x1xf32>
    %cst_66 = arith.constant dense<0.000000e+00> : vector<64x1xf32>
    %160 = tpu.matmul %149, %159, %cst_66 {dimension_numbers = #tpu.dot_dimension_numbers<[1], [0], [0], [1], [0, 0, 1, 1], [], []>} : vector<64x8xf32>, vector<8x1xf32>, vector<64x1xf32> -> vector<64x1xf32>
    %161 = arith.addf %160, %150 : vector<64x1xf32>
    %162 = arith.negf %161 : vector<64x1xf32>
    %163 = math.exp %162 : vector<64x1xf32>
    %cst_67 = arith.constant 1.000000e+00 : f32
    %164 = vector.broadcast %cst_67 : f32 to vector<64x1xf32>
    %165 = arith.addf %164, %163 : vector<64x1xf32>
    %166 = arith.divf %164, %165 : vector<64x1xf32>
    %167 = vector.broadcast %166 : vector<64x1xf32> to vector<64x128xf32>
    %168 = arith.mulf %151, %167 : vector<64x128xf32>
    %169 = vector.extract_strided_slice %146 {offsets = [0, 0], sizes = [64, 128], strides = [1, 1]} : vector<64x512xf32> to vector<64x128xf32>
    %170 = arith.addf %168, %169 : vector<64x128xf32>
    %cst_68 = arith.constant 0.000000e+00 : f32
    %171 = vector.broadcast %cst_68 : f32 to vector<64x128xf32>
    %172 = arith.maximumf %170, %171 : vector<64x128xf32>
    %c0_69 = arith.constant 0 : index
    %c0_70 = arith.constant 0 : index
    %173 = vector.load %arg14[%c0_69, %c0_70] : memref<64x512xf32, #tpu.memory_space<vmem>>, vector<64x128xf32>
    tpu.vector_store %arg14[%c0_69, %c0_70], %172 {strides = array<i32>} : memref<64x512xf32, #tpu.memory_space<vmem>>, vector<64x128xf32>,
    %174 = vector.extract_strided_slice %140 {offsets = [0, 128], sizes = [64, 128], strides = [1, 1]} : vector<64x512xf32> to vector<64x128xf32>
    %cst_71 = arith.constant dense<0.000000e+00> : vector<64xf32>
    %175 = vector.multi_reduction <add>, %174, %cst_71 [1] : vector<64x128xf32> to vector<64xf32>
    %176 = vector.shape_cast %175 : vector<64xf32> to vector<64x1xf32>
    %cst_72 = arith.constant 1.280000e+02 : f32
    %177 = vector.broadcast %cst_72 : f32 to vector<64x1xf32>
    %178 = arith.divf %176, %177 : vector<64x1xf32>
    %cst_73 = arith.constant dense<0.000000e+00> : vector<8x1xf32>
    %179 = tpu.matmul %147, %178, %cst_73 {dimension_numbers = #tpu.dot_dimension_numbers<[1], [0], [0], [1], [0, 0, 1, 1], [], []>} : vector<8x64xf32>, vector<64x1xf32>, vector<8x1xf32> -> vector<8x1xf32>
    %180 = arith.addf %179, %148 : vector<8x1xf32>
    %cst_74 = arith.constant 0.000000e+00 : f32
    %181 = vector.broadcast %cst_74 : f32 to vector<8x1xf32>
    %182 = arith.maximumf %180, %181 : vector<8x1xf32>
    %cst_75 = arith.constant dense<0.000000e+00> : vector<64x1xf32>
    %183 = tpu.matmul %149, %182, %cst_75 {dimension_numbers = #tpu.dot_dimension_numbers<[1], [0], [0], [1], [0, 0, 1, 1], [], []>} : vector<64x8xf32>, vector<8x1xf32>, vector<64x1xf32> -> vector<64x1xf32>
    %184 = arith.addf %183, %150 : vector<64x1xf32>
    %185 = arith.negf %184 : vector<64x1xf32>
    %186 = math.exp %185 : vector<64x1xf32>
    %cst_76 = arith.constant 1.000000e+00 : f32
    %187 = vector.broadcast %cst_76 : f32 to vector<64x1xf32>
    %188 = arith.addf %187, %186 : vector<64x1xf32>
    %189 = arith.divf %187, %188 : vector<64x1xf32>
    %190 = vector.broadcast %189 : vector<64x1xf32> to vector<64x128xf32>
    %191 = arith.mulf %174, %190 : vector<64x128xf32>
    %192 = vector.extract_strided_slice %146 {offsets = [0, 128], sizes = [64, 128], strides = [1, 1]} : vector<64x512xf32> to vector<64x128xf32>
    %193 = arith.addf %191, %192 : vector<64x128xf32>
    %cst_77 = arith.constant 0.000000e+00 : f32
    %194 = vector.broadcast %cst_77 : f32 to vector<64x128xf32>
    %195 = arith.maximumf %193, %194 : vector<64x128xf32>
    %c0_78 = arith.constant 0 : index
    %c128 = arith.constant 128 : index
    %196 = vector.load %arg14[%c0_78, %c128] : memref<64x512xf32, #tpu.memory_space<vmem>>, vector<64x128xf32>
    tpu.vector_store %arg14[%c0_78, %c128], %195 {strides = array<i32>} : memref<64x512xf32, #tpu.memory_space<vmem>>, vector<64x128xf32>,
    %197 = vector.extract_strided_slice %140 {offsets = [0, 256], sizes = [64, 128], strides = [1, 1]} : vector<64x512xf32> to vector<64x128xf32>
    %cst_79 = arith.constant dense<0.000000e+00> : vector<64xf32>
    %198 = vector.multi_reduction <add>, %197, %cst_79 [1] : vector<64x128xf32> to vector<64xf32>
    %199 = vector.shape_cast %198 : vector<64xf32> to vector<64x1xf32>
    %cst_80 = arith.constant 1.280000e+02 : f32
    %200 = vector.broadcast %cst_80 : f32 to vector<64x1xf32>
    %201 = arith.divf %199, %200 : vector<64x1xf32>
    %cst_81 = arith.constant dense<0.000000e+00> : vector<8x1xf32>
    %202 = tpu.matmul %147, %201, %cst_81 {dimension_numbers = #tpu.dot_dimension_numbers<[1], [0], [0], [1], [0, 0, 1, 1], [], []>} : vector<8x64xf32>, vector<64x1xf32>, vector<8x1xf32> -> vector<8x1xf32>
    %203 = arith.addf %202, %148 : vector<8x1xf32>
    %cst_82 = arith.constant 0.000000e+00 : f32
    %204 = vector.broadcast %cst_82 : f32 to vector<8x1xf32>
    %205 = arith.maximumf %203, %204 : vector<8x1xf32>
    %cst_83 = arith.constant dense<0.000000e+00> : vector<64x1xf32>
    %206 = tpu.matmul %149, %205, %cst_83 {dimension_numbers = #tpu.dot_dimension_numbers<[1], [0], [0], [1], [0, 0, 1, 1], [], []>} : vector<64x8xf32>, vector<8x1xf32>, vector<64x1xf32> -> vector<64x1xf32>
    %207 = arith.addf %206, %150 : vector<64x1xf32>
    %208 = arith.negf %207 : vector<64x1xf32>
    %209 = math.exp %208 : vector<64x1xf32>
    %cst_84 = arith.constant 1.000000e+00 : f32
    %210 = vector.broadcast %cst_84 : f32 to vector<64x1xf32>
    %211 = arith.addf %210, %209 : vector<64x1xf32>
    %212 = arith.divf %210, %211 : vector<64x1xf32>
    %213 = vector.broadcast %212 : vector<64x1xf32> to vector<64x128xf32>
    %214 = arith.mulf %197, %213 : vector<64x128xf32>
    %215 = vector.extract_strided_slice %146 {offsets = [0, 256], sizes = [64, 128], strides = [1, 1]} : vector<64x512xf32> to vector<64x128xf32>
    %216 = arith.addf %214, %215 : vector<64x128xf32>
    %cst_85 = arith.constant 0.000000e+00 : f32
    %217 = vector.broadcast %cst_85 : f32 to vector<64x128xf32>
    %218 = arith.maximumf %216, %217 : vector<64x128xf32>
    %c0_86 = arith.constant 0 : index
    %c256 = arith.constant 256 : index
    %219 = vector.load %arg14[%c0_86, %c256] : memref<64x512xf32, #tpu.memory_space<vmem>>, vector<64x128xf32>
    tpu.vector_store %arg14[%c0_86, %c256], %218 {strides = array<i32>} : memref<64x512xf32, #tpu.memory_space<vmem>>, vector<64x128xf32>,
    %220 = vector.extract_strided_slice %140 {offsets = [0, 384], sizes = [64, 128], strides = [1, 1]} : vector<64x512xf32> to vector<64x128xf32>
    %cst_87 = arith.constant dense<0.000000e+00> : vector<64xf32>
    %221 = vector.multi_reduction <add>, %220, %cst_87 [1] : vector<64x128xf32> to vector<64xf32>
    %222 = vector.shape_cast %221 : vector<64xf32> to vector<64x1xf32>
    %cst_88 = arith.constant 1.280000e+02 : f32
    %223 = vector.broadcast %cst_88 : f32 to vector<64x1xf32>
    %224 = arith.divf %222, %223 : vector<64x1xf32>
    %cst_89 = arith.constant dense<0.000000e+00> : vector<8x1xf32>
    %225 = tpu.matmul %147, %224, %cst_89 {dimension_numbers = #tpu.dot_dimension_numbers<[1], [0], [0], [1], [0, 0, 1, 1], [], []>} : vector<8x64xf32>, vector<64x1xf32>, vector<8x1xf32> -> vector<8x1xf32>
    %226 = arith.addf %225, %148 : vector<8x1xf32>
    %cst_90 = arith.constant 0.000000e+00 : f32
    %227 = vector.broadcast %cst_90 : f32 to vector<8x1xf32>
    %228 = arith.maximumf %226, %227 : vector<8x1xf32>
    %cst_91 = arith.constant dense<0.000000e+00> : vector<64x1xf32>
    %229 = tpu.matmul %149, %228, %cst_91 {dimension_numbers = #tpu.dot_dimension_numbers<[1], [0], [0], [1], [0, 0, 1, 1], [], []>} : vector<64x8xf32>, vector<8x1xf32>, vector<64x1xf32> -> vector<64x1xf32>
    %230 = arith.addf %229, %150 : vector<64x1xf32>
    %231 = arith.negf %230 : vector<64x1xf32>
    %232 = math.exp %231 : vector<64x1xf32>
    %cst_92 = arith.constant 1.000000e+00 : f32
    %233 = vector.broadcast %cst_92 : f32 to vector<64x1xf32>
    %234 = arith.addf %233, %232 : vector<64x1xf32>
    %235 = arith.divf %233, %234 : vector<64x1xf32>
    %236 = vector.broadcast %235 : vector<64x1xf32> to vector<64x128xf32>
    %237 = arith.mulf %220, %236 : vector<64x128xf32>
    %238 = vector.extract_strided_slice %146 {offsets = [0, 384], sizes = [64, 128], strides = [1, 1]} : vector<64x512xf32> to vector<64x128xf32>
    %239 = arith.addf %237, %238 : vector<64x128xf32>
    %cst_93 = arith.constant 0.000000e+00 : f32
    %240 = vector.broadcast %cst_93 : f32 to vector<64x128xf32>
    %241 = arith.maximumf %239, %240 : vector<64x128xf32>
    %c0_94 = arith.constant 0 : index
    %c384 = arith.constant 384 : index
    %242 = vector.load %arg14[%c0_94, %c384] : memref<64x512xf32, #tpu.memory_space<vmem>>, vector<64x128xf32>
    tpu.vector_store %arg14[%c0_94, %c384], %241 {strides = array<i32>} : memref<64x512xf32, #tpu.memory_space<vmem>>, vector<64x128xf32>,
    return
  }
  func.func @transform_0(%arg0: i32) -> (i32, i32) {
    %c0_i32 = arith.constant 0 : i32
    %c0_i32_0 = arith.constant 0 : i32
    return %c0_i32, %arg0 : i32, i32
  }
  func.func @transform_1(%arg0: i32) -> (i32, i32) {
    %c0_i32 = arith.constant 0 : i32
    %c0_i32_0 = arith.constant 0 : i32
    %c0_i32_1 = arith.constant 0 : i32
    return %c0_i32, %c0_i32_0 : i32, i32
  }
  func.func @transform_2(%arg0: i32) -> (i32, i32) {
    %c0_i32 = arith.constant 0 : i32
    %c0_i32_0 = arith.constant 0 : i32
    %c0_i32_1 = arith.constant 0 : i32
    return %c0_i32, %c0_i32_0 : i32, i32
  }
  func.func @transform_3(%arg0: i32) -> (i32, i32) {
    %c0_i32 = arith.constant 0 : i32
    %c0_i32_0 = arith.constant 0 : i32
    %c0_i32_1 = arith.constant 0 : i32
    return %c0_i32, %c0_i32_0 : i32, i32
  }
  func.func @transform_4(%arg0: i32) -> (i32, i32) {
    %c0_i32 = arith.constant 0 : i32
    %c0_i32_0 = arith.constant 0 : i32
    %c0_i32_1 = arith.constant 0 : i32
    return %c0_i32, %c0_i32_0 : i32, i32
  }
  func.func @transform_5(%arg0: i32) -> (i32, i32) {
    %c0_i32 = arith.constant 0 : i32
    %c0_i32_0 = arith.constant 0 : i32
    %c0_i32_1 = arith.constant 0 : i32
    return %c0_i32, %c0_i32_0 : i32, i32
  }
  func.func @transform_6(%arg0: i32) -> (i32, i32) {
    %c0_i32 = arith.constant 0 : i32
    %c0_i32_0 = arith.constant 0 : i32
    %c0_i32_1 = arith.constant 0 : i32
    return %c0_i32, %c0_i32_0 : i32, i32
  }
  func.func @transform_7(%arg0: i32) -> (i32, i32) {
    %c0_i32 = arith.constant 0 : i32
    %c0_i32_0 = arith.constant 0 : i32
    %c0_i32_1 = arith.constant 0 : i32
    return %c0_i32, %c0_i32_0 : i32, i32
  }
  func.func @transform_8(%arg0: i32) -> (i32, i32) {
    %c0_i32 = arith.constant 0 : i32
    %c0_i32_0 = arith.constant 0 : i32
    %c0_i32_1 = arith.constant 0 : i32
    return %c0_i32, %c0_i32_0 : i32, i32
  }
  func.func @transform_9(%arg0: i32) -> (i32, i32) {
    %c0_i32 = arith.constant 0 : i32
    %c0_i32_0 = arith.constant 0 : i32
    %c0_i32_1 = arith.constant 0 : i32
    return %c0_i32, %c0_i32_0 : i32, i32
  }
  func.func @transform_10(%arg0: i32) -> (i32, i32) {
    %c0_i32 = arith.constant 0 : i32
    %c0_i32_0 = arith.constant 0 : i32
    %c0_i32_1 = arith.constant 0 : i32
    return %c0_i32, %c0_i32_0 : i32, i32
  }
  func.func @transform_11(%arg0: i32) -> (i32, i32) {
    %c0_i32 = arith.constant 0 : i32
    %c0_i32_0 = arith.constant 0 : i32
    %c0_i32_1 = arith.constant 0 : i32
    return %c0_i32, %c0_i32_0 : i32, i32
  }
  func.func @transform_12(%arg0: i32) -> (i32, i32) {
    %c0_i32 = arith.constant 0 : i32
    %c0_i32_0 = arith.constant 0 : i32
    %c0_i32_1 = arith.constant 0 : i32
    return %c0_i32, %c0_i32_0 : i32, i32
  }
  func.func @transform_13(%arg0: i32) -> (i32, i32) {
    %c0_i32 = arith.constant 0 : i32
    %c0_i32_0 = arith.constant 0 : i32
    return %c0_i32, %arg0 : i32, i32
  }
}

</mosaic_0001>

<llo_original>
// kernel: block_forward.1
$region0: #{block_forward.1}
  #allocation0 [shape = 'u32[]', space=smem, size = 0x4, offset = 0x4, fixed_abs, tag = 'smem constant byte address 0x4 - core index']
  #allocation1 [shape = 'u32[144,128]{1,0:T(1,128)}', space=vmem, size = 0x12000, scoped, tag = 'internal scratch']
  %s0 = inlined_call_operand.vmem [shape: f32[64,512], index: 0, kind: input, shape index: {}]
  %s1 = inlined_call_operand.vmem [shape: bf16[64,448], index: 1, kind: input, shape index: {}]
  %s2 = inlined_call_operand.vmem [shape: f32[64,1], index: 2, kind: input, shape index: {}]
  %s3 = inlined_call_operand.vmem [shape: bf16[64,320], index: 3, kind: input, shape index: {}]
  %s4 = inlined_call_operand.vmem [shape: f32[64,1], index: 4, kind: input, shape index: {}]
  %s5 = inlined_call_operand.vmem [shape: bf16[64,192], index: 5, kind: input, shape index: {}]
  %s6 = inlined_call_operand.vmem [shape: f32[64,1], index: 6, kind: input, shape index: {}]
  %s7 = inlined_call_operand.vmem [shape: f32[8,64], index: 7, kind: input, shape index: {}]
  %s8 = inlined_call_operand.vmem [shape: f32[8,1], index: 8, kind: input, shape index: {}]
  %s9 = inlined_call_operand.vmem [shape: f32[64,8], index: 9, kind: input, shape index: {}]
  %s10 = inlined_call_operand.vmem [shape: f32[64,1], index: 10, kind: input, shape index: {}]
  %s11 = inlined_call_operand.vmem [shape: bf16[64,64], index: 11, kind: input, shape index: {}]
  %s12 = inlined_call_operand.vmem [shape: f32[64,1], index: 12, kind: input, shape index: {}]
  %s13 = inlined_call_operand.vmem [shape: f32[64,512], index: 13, kind: output, shape index: {}]
  %s14 = sld [smem:[#allocation0]]
  $region62: #{block_forward.1} parent=0
    _
  %s16 = ssub.s32 1, %s14
  %s17 = scalar_select 0, %s16, %s14
  // Predicated region
  $region2: #{block_forward.1} parent=0 // pred_check
    _
  $region3: #{block_forward.1} parent=0 // pred_check_branch
    %19 = sbr.rel (0) target = $region5
  $region4: #{block_forward.1} parent=0 // pred_region
    _
  $region5: #{block_forward.1} parent=0 // pred_fallthru
    _
  // Predicated region
  $region6: #{block_forward.1} parent=0 // pred_check
    _
  $region7: #{block_forward.1} parent=0 // pred_check_branch
    %21 = sbr.rel (0) target = $region9
  $region8: #{block_forward.1} parent=0 // pred_region
    _
  $region9: #{block_forward.1} parent=0 // pred_fallthru
    _
  // Predicated region
  $region10: #{block_forward.1} parent=0 // pred_check
    _
  $region11: #{block_forward.1} parent=0 // pred_check_branch
    %23 = sbr.rel (0) target = $region13
  $region12: #{block_forward.1} parent=0 // pred_region
    _
  $region13: #{block_forward.1} parent=0 // pred_fallthru
    _
  // Predicated region
  $region14: #{block_forward.1} parent=0 // pred_check
    _
  $region15: #{block_forward.1} parent=0 // pred_check_branch
    %25 = sbr.rel (0) target = $region17
  $region16: #{block_forward.1} parent=0 // pred_region
    _
  $region17: #{block_forward.1} parent=0 // pred_fallthru
    _
  // Predicated region
  $region18: #{block_forward.1} parent=0 // pred_check
    _
  $region19: #{block_forward.1} parent=0 // pred_check_branch
    %27 = sbr.rel (0) target = $region21
  $region20: #{block_forward.1} parent=0 // pred_region
    _
  $region21: #{block_forward.1} parent=0 // pred_fallthru
    _
  // Predicated region
  $region22: #{block_forward.1} parent=0 // pred_check
    _
  $region23: #{block_forward.1} parent=0 // pred_check_branch
    %29 = sbr.rel (0) target = $region25
  $region24: #{block_forward.1} parent=0 // pred_region
    _
  $region25: #{block_forward.1} parent=0 // pred_fallthru
    _
  // Predicated region
  $region26: #{block_forward.1} parent=0 // pred_check
    _
  $region27: #{block_forward.1} parent=0 // pred_check_branch
    %31 = sbr.rel (0) target = $region29
  $region28: #{block_forward.1} parent=0 // pred_region
    _
  $region29: #{block_forward.1} parent=0 // pred_fallthru
    _
  // Predicated region
  $region30: #{block_forward.1} parent=0 // pred_check
    _
  $region31: #{block_forward.1} parent=0 // pred_check_branch
    %33 = sbr.rel (0) target = $region33
  $region32: #{block_forward.1} parent=0 // pred_region
    _
  $region33: #{block_forward.1} parent=0 // pred_fallthru
    _
  // Predicated region
  $region34: #{block_forward.1} parent=0 // pred_check
    _
  $region35: #{block_forward.1} parent=0 // pred_check_branch
    %35 = sbr.rel (0) target = $region37
  $region36: #{block_forward.1} parent=0 // pred_region
    _
  $region37: #{block_forward.1} parent=0 // pred_fallthru
    _
  // Predicated region
  $region38: #{block_forward.1} parent=0 // pred_check
    _
  $region39: #{block_forward.1} parent=0 // pred_check_branch
    %37 = sbr.rel (0) target = $region41
  $region40: #{block_forward.1} parent=0 // pred_region
    _
  $region41: #{block_forward.1} parent=0 // pred_fallthru
    _
  // Predicated region
  $region42: #{block_forward.1} parent=0 // pred_check
    _
  $region43: #{block_forward.1} parent=0 // pred_check_branch
    %39 = sbr.rel (0) target = $region45
  $region44: #{block_forward.1} parent=0 // pred_region
    _
  $region45: #{block_forward.1} parent=0 // pred_fallthru
    _
  // Predicated region
  $region46: #{block_forward.1} parent=0 // pred_check
    _
  $region47: #{block_forward.1} parent=0 // pred_check_branch
    %41 = sbr.rel (0) target = $region49
  $region48: #{block_forward.1} parent=0 // pred_region
    _
  $region49: #{block_forward.1} parent=0 // pred_fallthru
    _
  // Predicated region
  $region50: #{block_forward.1} parent=0 // pred_check
    _
  $region51: #{block_forward.1} parent=0 // pred_check_branch
    %43 = sbr.rel (0) target = $region53
  $region52: #{block_forward.1} parent=0 // pred_region
    _
  $region53: #{block_forward.1} parent=0 // pred_fallthru
    _
  %v45 = vld [vmem:[%s0] sm:$0xff]
  %v46 = vld [vmem:[%s0 + $0x8] sm:$0xff]
  %v47 = vld [vmem:[%s0 + $0x10] sm:$0xff]
  %v48 = vld [vmem:[%s0 + $0x18] sm:$0xff]
  %v49 = vld [vmem:[%s0 + $0x20] sm:$0xff]
  %v50 = vld [vmem:[%s0 + $0x28] sm:$0xff]
  %v51 = vld [vmem:[%s0 + $0x30] sm:$0xff]
  %v52 = vld [vmem:[%s0 + $0x38] sm:$0xff]
  %v53 = vld [vmem:[%s0 + $0x40] sm:$0xff]
  %v54 = vld [vmem:[%s0 + $0x48] sm:$0xff]
  %v55 = vld [vmem:[%s0 + $0x50] sm:$0xff]
  %v56 = vld [vmem:[%s0 + $0x58] sm:$0xff]
  %v57 = vld [vmem:[%s0 + $0x60] sm:$0xff]
  %v58 = vld [vmem:[%s0 + $0x68] sm:$0xff]
  %v59 = vld [vmem:[%s0 + $0x70] sm:$0xff]
  %v60 = vld [vmem:[%s0 + $0x78] sm:$0xff]
  %v61 = vld [vmem:[%s0 + $0x80] sm:$0xff]
  %v62 = vld [vmem:[%s0 + $0x88] sm:$0xff]
  %v63 = vld [vmem:[%s0 + $0x90] sm:$0xff]
  %v64 = vld [vmem:[%s0 + $0x98] sm:$0xff]
  %v65 = vld [vmem:[%s0 + $0xa0] sm:$0xff]
  %v66 = vld [vmem:[%s0 + $0xa8] sm:$0xff]
  %v67 = vld [vmem:[%s0 + $0xb0] sm:$0xff]
  %v68 = vld [vmem:[%s0 + $0xb8] sm:$0xff]
  %v69 = vld [vmem:[%s0 + $0xc0] sm:$0xff]
  %v70 = vld [vmem:[%s0 + $0xc8] sm:$0xff]
  %v71 = vld [vmem:[%s0 + $0xd0] sm:$0xff]
  %v72 = vld [vmem:[%s0 + $0xd8] sm:$0xff]
  %v73 = vld [vmem:[%s0 + $0xe0] sm:$0xff]
  %v74 = vld [vmem:[%s0 + $0xe8] sm:$0xff]
  %v75 = vld [vmem:[%s0 + $0xf0] sm:$0xff]
  %v76 = vld [vmem:[%s0 + $0xf8] sm:$0xff]
  %v77 = vlaneseq
  %v78 = vand.u32 %v77, 127
  %v79 = vadd.s32 %v78, 128
  %v80 = vadd.s32 %v78, 256
  %v81 = vadd.s32 %v78, 384
  %vm82 = vcmp.lt.s32.totalorder %v78, 0
  %v83 = vsub.s32 0, %v78
  %v84 = vsel %vm82, %v83, %v78
  %v85 = vshrl.u32 %v84, 7
  %v86 = vand.u32 %v84, 127
  %v87 = vsub.s32 0, %v86
  %v88 = vsel %vm82, %v87, %v86
  %vm89 = vcmp.lt.s32.totalorder %v79, 0
  %v90 = vsub.s32 0, %v79
  %v91 = vsel %vm89, %v90, %v79
  %v92 = vshrl.u32 %v91, 7
  %v93 = vand.u32 %v91, 127
  %v94 = vsub.s32 0, %v93
  %v95 = vsel %vm89, %v94, %v93
  %vm96 = vcmp.lt.s32.totalorder %v80, 0
  %v97 = vsub.s32 0, %v80
  %v98 = vsel %vm96, %v97, %v80
  %v99 = vshrl.u32 %v98, 7
  %v100 = vand.u32 %v98, 127
  %v101 = vsub.s32 0, %v100
  %v102 = vsel %vm96, %v101, %v100
  %vm103 = vcmp.lt.s32.totalorder %v81, 0
  %v104 = vsub.s32 0, %v81
  %v105 = vsel %vm103, %v104, %v81
  %v106 = vshrl.u32 %v105, 7
  %v107 = vand.u32 %v105, 127
  %v108 = vsub.s32 0, %v107
  %v109 = vsel %vm103, %v108, %v107
  %vm110 = vcmp.ne.s32.totalorder %v88, 0
  %vm111 = vcmp.ne.s32.totalorder %v95, 0
  %vm112 = vcmp.ne.s32.totalorder %v102, 0
  %vm113 = vcmp.ne.s32.totalorder %v109, 0
  %vm114 = vcmp.lt.s32.totalorder %v88, 0
  %vm115 = vcmp.lt.s32.totalorder %v95, 0
  %vm116 = vcmp.lt.s32.totalorder %v102, 0
  %vm117 = vcmp.lt.s32.totalorder %v109, 0
  %vm118 = vmand %vm114, %vm110
  %vm119 = vmand %vm115, %vm111
  %vm120 = vmand %vm116, %vm112
  %vm121 = vmand %vm117, %vm113
  %v122 = vadd.s32 %v88, 128
  %v123 = vadd.s32 %v95, 128
  %v124 = vadd.s32 %v102, 128
  %v125 = vadd.s32 %v109, 128
  %v126 = vsel %vm118, %v122, %v88
  %v127 = vsel %vm119, %v123, %v95
  %v128 = vsel %vm120, %v124, %v102
  %v129 = vsel %vm121, %v125, %v109
  %130 = vrot.lane.b32.xlu0 %v45, 3
  %v131 = vpop.permute.xlu0 %130
  %132 = vrot.lane.b32.xlu0 %v49, 3
  %v133 = vpop.permute.xlu0 %132
  %134 = vrot.lane.b32.xlu0 %v53, 3
  %v135 = vpop.permute.xlu0 %134
  %136 = vrot.lane.b32.xlu0 %v57, 3
  %v137 = vpop.permute.xlu0 %136
  %138 = vrot.lane.b32.xlu0 %v61, 3
  %v139 = vpop.permute.xlu0 %138
  %140 = vrot.lane.b32.xlu0 %v65, 3
  %v141 = vpop.permute.xlu0 %140
  %142 = vrot.lane.b32.xlu0 %v69, 3
  %v143 = vpop.permute.xlu0 %142
  %144 = vrot.lane.b32.xlu0 %v73, 3
  %v145 = vpop.permute.xlu0 %144
  %146 = vrot.lane.b32.xlu0 %v46, 3
  %v147 = vpop.permute.xlu0 %146
  %148 = vrot.lane.b32.xlu0 %v50, 3
  %v149 = vpop.permute.xlu0 %148
  %150 = vrot.lane.b32.xlu0 %v54, 3
  %v151 = vpop.permute.xlu0 %150
  %152 = vrot.lane.b32.xlu0 %v58, 3
  %v153 = vpop.permute.xlu0 %152
  %154 = vrot.lane.b32.xlu0 %v62, 3
  %v155 = vpop.permute.xlu0 %154
  %156 = vrot.lane.b32.xlu0 %v66, 3
  %v157 = vpop.permute.xlu0 %156
  %158 = vrot.lane.b32.xlu0 %v70, 3
  %v159 = vpop.permute.xlu0 %158
  %160 = vrot.lane.b32.xlu0 %v74, 3
  %v161 = vpop.permute.xlu0 %160
  %162 = vrot.lane.b32.xlu0 %v47, 3
  %v163 = vpop.permute.xlu0 %162
  %164 = vrot.lane.b32.xlu0 %v51, 3
  %v165 = vpop.permute.xlu0 %164
  %166 = vrot.lane.b32.xlu0 %v55, 3
  %v167 = vpop.permute.xlu0 %166
  %168 = vrot.lane.b32.xlu0 %v59, 3
  %v169 = vpop.permute.xlu0 %168
  %170 = vrot.lane.b32.xlu0 %v63, 3
  %v171 = vpop.permute.xlu0 %170
  %172 = vrot.lane.b32.xlu0 %v67, 3
  %v173 = vpop.permute.xlu0 %172
  %174 = vrot.lane.b32.xlu0 %v71, 3
  %v175 = vpop.permute.xlu0 %174
  %176 = vrot.lane.b32.xlu0 %v75, 3
  %v177 = vpop.permute.xlu0 %176
  %178 = vrot.lane.b32.xlu0 %v48, 3
  %v179 = vpop.permute.xlu0 %178
  %180 = vrot.lane.b32.xlu0 %v52, 3
  %v181 = vpop.permute.xlu0 %180
  %182 = vrot.lane.b32.xlu0 %v56, 3
  %v183 = vpop.permute.xlu0 %182
  %184 = vrot.lane.b32.xlu0 %v60, 3
  %v185 = vpop.permute.xlu0 %184
  %186 = vrot.lane.b32.xlu0 %v64, 3
  %v187 = vpop.permute.xlu0 %186
  %188 = vrot.lane.b32.xlu0 %v68, 3
  %v189 = vpop.permute.xlu0 %188
  %190 = vrot.lane.b32.xlu0 %v72, 3
  %v191 = vpop.permute.xlu0 %190
  %192 = vrot.lane.b32.xlu0 %v76, 3
  %v193 = vpop.permute.xlu0 %192
  %vm194 = vcmp.lt.s32.totalorder %v78, 3
  %v195 = vsel %vm194, %v163, %v179
  %v196 = vsel %vm194, %v165, %v181
  %v197 = vsel %vm194, %v167, %v183
  %v198 = vsel %vm194, %v169, %v185
  %v199 = vsel %vm194, %v171, %v187
  %v200 = vsel %vm194, %v173, %v189
  %v201 = vsel %vm194, %v175, %v191
  %v202 = vsel %vm194, %v177, %v193
  %v203 = vsel %vm194, %v147, %v163
  %v204 = vsel %vm194, %v149, %v165
  %v205 = vsel %vm194, %v151, %v167
  %v206 = vsel %vm194, %v153, %v169
  %v207 = vsel %vm194, %v155, %v171
  %v208 = vsel %vm194, %v157, %v173
  %v209 = vsel %vm194, %v159, %v175
  %v210 = vsel %vm194, %v161, %v177
  %v211 = vsel %vm194, %v131, %v147
  %v212 = vsel %vm194, %v133, %v149
  %v213 = vsel %vm194, %v135, %v151
  %v214 = vsel %vm194, %v137, %v153
  %v215 = vsel %vm194, %v139, %v155
  %v216 = vsel %vm194, %v141, %v157
  %v217 = vsel %vm194, %v143, %v159
  %v218 = vsel %vm194, %v145, %v161
  %v219 = vsel %vm194, %v179, %v131
  %v220 = vsel %vm194, %v181, %v133
  %v221 = vsel %vm194, %v183, %v135
  %v222 = vsel %vm194, %v185, %v137
  %v223 = vsel %vm194, %v187, %v139
  %v224 = vsel %vm194, %v189, %v141
  %v225 = vsel %vm194, %v191, %v143
  %v226 = vsel %vm194, %v193, %v145
  %vm227 = vcmp.ge.s32.totalorder %v126, 3
  %vm228 = vcmp.ge.s32.totalorder %v127, 3
  %vm229 = vcmp.ge.s32.totalorder %v128, 3
  %vm230 = vcmp.ge.s32.totalorder %v129, 3
  %v231 = vsel %vm227, 1, 0
  %v232 = vsel %vm228, 1, 0
  %v233 = vsel %vm229, 1, 0
  %v234 = vsel %vm230, 1, 0
  %vm235 = vcmp.eq.s32.totalorder %v231, 1
  %vm236 = vcmp.eq.s32.totalorder %v232, 1
  %vm237 = vcmp.eq.s32.totalorder %v233, 1
  %vm238 = vcmp.eq.s32.totalorder %v234, 1
  %v239 = vsel %vm235, %v219, 0.0
  %v240 = vsel %vm236, %v211, 0.0
  %v241 = vsel %vm237, %v203, 0.0
  %v242 = vsel %vm238, %v195, 0.0
  %v243 = vsel %vm235, %v220, 0.0
  %v244 = vsel %vm236, %v212, 0.0
  %v245 = vsel %vm237, %v204, 0.0
  %v246 = vsel %vm238, %v196, 0.0
  %v247 = vsel %vm235, %v221, 0.0
  %v248 = vsel %vm236, %v213, 0.0
  %v249 = vsel %vm237, %v205, 0.0
  %v250 = vsel %vm238, %v197, 0.0
  %v251 = vsel %vm235, %v222, 0.0
  %v252 = vsel %vm236, %v214, 0.0
  %v253 = vsel %vm237, %v206, 0.0
  %v254 = vsel %vm238, %v198, 0.0
  %v255 = vsel %vm235, %v223, 0.0
  %v256 = vsel %vm236, %v215, 0.0
  %v257 = vsel %vm237, %v207, 0.0
  %v258 = vsel %vm238, %v199, 0.0
  %v259 = vsel %vm235, %v224, 0.0
  %v260 = vsel %vm236, %v216, 0.0
  %v261 = vsel %vm237, %v208, 0.0
  %v262 = vsel %vm238, %v200, 0.0
  %v263 = vsel %vm235, %v225, 0.0
  %v264 = vsel %vm236, %v217, 0.0
  %v265 = vsel %vm237, %v209, 0.0
  %v266 = vsel %vm238, %v201, 0.0
  %v267 = vsel %vm235, %v226, 0.0
  %v268 = vsel %vm236, %v218, 0.0
  %v269 = vsel %vm237, %v210, 0.0
  %v270 = vsel %vm238, %v202, 0.0
  %v271 = vpack.c.bf16 %v243, %v239
  %v272 = vpack.c.bf16 %v244, %v240
  %v273 = vpack.c.bf16 %v245, %v241
  %v274 = vpack.c.bf16 %v246, %v242
  %v275 = vpack.c.bf16 %v251, %v247
  %v276 = vpack.c.bf16 %v252, %v248
  %v277 = vpack.c.bf16 %v253, %v249
  %v278 = vpack.c.bf16 %v254, %v250
  %v279 = vpack.c.bf16 %v259, %v255
  %v280 = vpack.c.bf16 %v260, %v256
  %v281 = vpack.c.bf16 %v261, %v257
  %v282 = vpack.c.bf16 %v262, %v258
  %v283 = vpack.c.bf16 %v267, %v263
  %v284 = vpack.c.bf16 %v268, %v264
  %v285 = vpack.c.bf16 %v269, %v265
  %v286 = vpack.c.bf16 %v270, %v266
  %287 = vrot.lane.b32.xlu0 %v45, 2
  %v288 = vpop.permute.xlu0 %287
  %289 = vrot.lane.b32.xlu0 %v49, 2
  %v290 = vpop.permute.xlu0 %289
  %291 = vrot.lane.b32.xlu0 %v53, 2
  %v292 = vpop.permute.xlu0 %291
  %293 = vrot.lane.b32.xlu0 %v57, 2
  %v294 = vpop.permute.xlu0 %293
  %295 = vrot.lane.b32.xlu0 %v61, 2
  %v296 = vpop.permute.xlu0 %295
  %297 = vrot.lane.b32.xlu0 %v65, 2
  %v298 = vpop.permute.xlu0 %297
  %299 = vrot.lane.b32.xlu0 %v69, 2
  %v300 = vpop.permute.xlu0 %299
  %301 = vrot.lane.b32.xlu0 %v73, 2
  %v302 = vpop.permute.xlu0 %301
  %303 = vrot.lane.b32.xlu0 %v46, 2
  %v304 = vpop.permute.xlu0 %303
  %305 = vrot.lane.b32.xlu0 %v50, 2
  %v306 = vpop.permute.xlu0 %305
  %307 = vrot.lane.b32.xlu0 %v54, 2
  %v308 = vpop.permute.xlu0 %307
  %309 = vrot.lane.b32.xlu0 %v58, 2
  %v310 = vpop.permute.xlu0 %309
  %311 = vrot.lane.b32.xlu0 %v62, 2
  %v312 = vpop.permute.xlu0 %311
  %313 = vrot.lane.b32.xlu0 %v66, 2
  %v314 = vpop.permute.xlu0 %313
  %315 = vrot.lane.b32.xlu0 %v70, 2
  %v316 = vpop.permute.xlu0 %315
  %317 = vrot.lane.b32.xlu0 %v74, 2
  %v318 = vpop.permute.xlu0 %317
  %319 = vrot.lane.b32.xlu0 %v47, 2
  %v320 = vpop.permute.xlu0 %319
  %321 = vrot.lane.b32.xlu0 %v51, 2
  %v322 = vpop.permute.xlu0 %321
  %323 = vrot.lane.b32.xlu0 %v55, 2
  %v324 = vpop.permute.xlu0 %323
  %325 = vrot.lane.b32.xlu0 %v59, 2
  %v326 = vpop.permute.xlu0 %325
  %327 = vrot.lane.b32.xlu0 %v63, 2
  %v328 = vpop.permute.xlu0 %327
  %329 = vrot.lane.b32.xlu0 %v67, 2
  %v330 = vpop.permute.xlu0 %329
  %331 = vrot.lane.b32.xlu0 %v71, 2
  %v332 = vpop.permute.xlu0 %331
  %333 = vrot.lane.b32.xlu0 %v75, 2
  %v334 = vpop.permute.xlu0 %333
  %335 = vrot.lane.b32.xlu0 %v48, 2
  %v336 = vpop.permute.xlu0 %335
  %337 = vrot.lane.b32.xlu0 %v52, 2
  %v338 = vpop.permute.xlu0 %337
  %339 = vrot.lane.b32.xlu0 %v56, 2
  %v340 = vpop.permute.xlu0 %339
  %341 = vrot.lane.b32.xlu0 %v60, 2
  %v342 = vpop.permute.xlu0 %341
  %343 = vrot.lane.b32.xlu0 %v64, 2
  %v344 = vpop.permute.xlu0 %343
  %345 = vrot.lane.b32.xlu0 %v68, 2
  %v346 = vpop.permute.xlu0 %345
  %347 = vrot.lane.b32.xlu0 %v72, 2
  %v348 = vpop.permute.xlu0 %347
  %349 = vrot.lane.b32.xlu0 %v76, 2
  %v350 = vpop.permute.xlu0 %349
  %vm351 = vcmp.lt.s32.totalorder %v78, 2
  %v352 = vsel %vm351, %v320, %v336
  %v353 = vsel %vm351, %v322, %v338
  %v354 = vsel %vm351, %v324, %v340
  %v355 = vsel %vm351, %v326, %v342
  %v356 = vsel %vm351, %v328, %v344
  %v357 = vsel %vm351, %v330, %v346
  %v358 = vsel %vm351, %v332, %v348
  %v359 = vsel %vm351, %v334, %v350
  %v360 = vsel %vm351, %v304, %v320
  %v361 = vsel %vm351, %v306, %v322
  %v362 = vsel %vm351, %v308, %v324
  %v363 = vsel %vm351, %v310, %v326
  %v364 = vsel %vm351, %v312, %v328
  %v365 = vsel %vm351, %v314, %v330
  %v366 = vsel %vm351, %v316, %v332
  %v367 = vsel %vm351, %v318, %v334
  %v368 = vsel %vm351, %v288, %v304
  %v369 = vsel %vm351, %v290, %v306
  %v370 = vsel %vm351, %v292, %v308
  %v371 = vsel %vm351, %v294, %v310
  %v372 = vsel %vm351, %v296, %v312
  %v373 = vsel %vm351, %v298, %v314
  %v374 = vsel %vm351, %v300, %v316
  %v375 = vsel %vm351, %v302, %v318
  %v376 = vsel %vm351, %v336, %v288
  %v377 = vsel %vm351, %v338, %v290
  %v378 = vsel %vm351, %v340, %v292
  %v379 = vsel %vm351, %v342, %v294
  %v380 = vsel %vm351, %v344, %v296
  %v381 = vsel %vm351, %v346, %v298
  %v382 = vsel %vm351, %v348, %v300
  %v383 = vsel %vm351, %v350, %v302
  %vm384 = vcmp.ge.s32.totalorder %v126, 2
  %vm385 = vcmp.ge.s32.totalorder %v127, 2
  %vm386 = vcmp.ge.s32.totalorder %v128, 2
  %vm387 = vcmp.ge.s32.totalorder %v129, 2
  %v388 = vsel %vm384, 1, 0
  %v389 = vsel %vm385, 1, 0
  %v390 = vsel %vm386, 1, 0
  %v391 = vsel %vm387, 1, 0
  %vm392 = vcmp.eq.s32.totalorder %v388, 1
  %vm393 = vcmp.eq.s32.totalorder %v389, 1
  %vm394 = vcmp.eq.s32.totalorder %v390, 1
  %vm395 = vcmp.eq.s32.totalorder %v391, 1
  %v396 = vsel %vm392, %v376, 0.0
  %v397 = vsel %vm393, %v368, 0.0
  %v398 = vsel %vm394, %v360, 0.0
  %v399 = vsel %vm395, %v352, 0.0
  %v400 = vsel %vm392, %v377, 0.0
  %v401 = vsel %vm393, %v369, 0.0
  %v402 = vsel %vm394, %v361, 0.0
  %v403 = vsel %vm395, %v353, 0.0
  %v404 = vsel %vm392, %v378, 0.0
  %v405 = vsel %vm393, %v370, 0.0
  %v406 = vsel %vm394, %v362, 0.0
  %v407 = vsel %vm395, %v354, 0.0
  %v408 = vsel %vm392, %v379, 0.0
  %v409 = vsel %vm393, %v371, 0.0
  %v410 = vsel %vm394, %v363, 0.0
  %v411 = vsel %vm395, %v355, 0.0
  %v412 = vsel %vm392, %v380, 0.0
  %v413 = vsel %vm393, %v372, 0.0
  %v414 = vsel %vm394, %v364, 0.0
  %v415 = vsel %vm395, %v356, 0.0
  %v416 = vsel %vm392, %v381, 0.0
  %v417 = vsel %vm393, %v373, 0.0
  %v418 = vsel %vm394, %v365, 0.0
  %v419 = vsel %vm395, %v357, 0.0
  %v420 = vsel %vm392, %v382, 0.0
  %v421 = vsel %vm393, %v374, 0.0
  %v422 = vsel %vm394, %v366, 0.0
  %v423 = vsel %vm395, %v358, 0.0
  %v424 = vsel %vm392, %v383, 0.0
  %v425 = vsel %vm393, %v375, 0.0
  %v426 = vsel %vm394, %v367, 0.0
  %v427 = vsel %vm395, %v359, 0.0
  %v428 = vpack.c.bf16 %v400, %v396
  %v429 = vpack.c.bf16 %v401, %v397
  %v430 = vpack.c.bf16 %v402, %v398
  %v431 = vpack.c.bf16 %v403, %v399
  %v432 = vpack.c.bf16 %v408, %v404
  %v433 = vpack.c.bf16 %v409, %v405
  %v434 = vpack.c.bf16 %v410, %v406
  %v435 = vpack.c.bf16 %v411, %v407
  %v436 = vpack.c.bf16 %v416, %v412
  %v437 = vpack.c.bf16 %v417, %v413
  %v438 = vpack.c.bf16 %v418, %v414
  %v439 = vpack.c.bf16 %v419, %v415
  %v440 = vpack.c.bf16 %v424, %v420
  %v441 = vpack.c.bf16 %v425, %v421
  %v442 = vpack.c.bf16 %v426, %v422
  %v443 = vpack.c.bf16 %v427, %v423
  %444 = vrot.lane.b32.xlu0 %v45, 1
  %v445 = vpop.permute.xlu0 %444
  %446 = vrot.lane.b32.xlu0 %v49, 1
  %v447 = vpop.permute.xlu0 %446
  %448 = vrot.lane.b32.xlu0 %v53, 1
  %v449 = vpop.permute.xlu0 %448
  %450 = vrot.lane.b32.xlu0 %v57, 1
  %v451 = vpop.permute.xlu0 %450
  %452 = vrot.lane.b32.xlu0 %v61, 1
  %v453 = vpop.permute.xlu0 %452
  %454 = vrot.lane.b32.xlu0 %v65, 1
  %v455 = vpop.permute.xlu0 %454
  %456 = vrot.lane.b32.xlu0 %v69, 1
  %v457 = vpop.permute.xlu0 %456
  %458 = vrot.lane.b32.xlu0 %v73, 1
  %v459 = vpop.permute.xlu0 %458
  %460 = vrot.lane.b32.xlu0 %v46, 1
  %v461 = vpop.permute.xlu0 %460
  %462 = vrot.lane.b32.xlu0 %v50, 1
  %v463 = vpop.permute.xlu0 %462
  %464 = vrot.lane.b32.xlu0 %v54, 1
  %v465 = vpop.permute.xlu0 %464
  %466 = vrot.lane.b32.xlu0 %v58, 1
  %v467 = vpop.permute.xlu0 %466
  %468 = vrot.lane.b32.xlu0 %v62, 1
  %v469 = vpop.permute.xlu0 %468
  %470 = vrot.lane.b32.xlu0 %v66, 1
  %v471 = vpop.permute.xlu0 %470
  %472 = vrot.lane.b32.xlu0 %v70, 1
  %v473 = vpop.permute.xlu0 %472
  %474 = vrot.lane.b32.xlu0 %v74, 1
  %v475 = vpop.permute.xlu0 %474
  %476 = vrot.lane.b32.xlu0 %v47, 1
  %v477 = vpop.permute.xlu0 %476
  %478 = vrot.lane.b32.xlu0 %v51, 1
  %v479 = vpop.permute.xlu0 %478
  %480 = vrot.lane.b32.xlu0 %v55, 1
  %v481 = vpop.permute.xlu0 %480
  %482 = vrot.lane.b32.xlu0 %v59, 1
  %v483 = vpop.permute.xlu0 %482
  %484 = vrot.lane.b32.xlu0 %v63, 1
  %v485 = vpop.permute.xlu0 %484
  %486 = vrot.lane.b32.xlu0 %v67, 1
  %v487 = vpop.permute.xlu0 %486
  %488 = vrot.lane.b32.xlu0 %v71, 1
  %v489 = vpop.permute.xlu0 %488
  %490 = vrot.lane.b32.xlu0 %v75, 1
  %v491 = vpop.permute.xlu0 %490
  %492 = vrot.lane.b32.xlu0 %v48, 1
  %v493 = vpop.permute.xlu0 %492
  %494 = vrot.lane.b32.xlu0 %v52, 1
  %v495 = vpop.permute.xlu0 %494
  %496 = vrot.lane.b32.xlu0 %v56, 1
  %v497 = vpop.permute.xlu0 %496
  %498 = vrot.lane.b32.xlu0 %v60, 1
  %v499 = vpop.permute.xlu0 %498
  %500 = vrot.lane.b32.xlu0 %v64, 1
  %v501 = vpop.permute.xlu0 %500
  %502 = vrot.lane.b32.xlu0 %v68, 1
  %v503 = vpop.permute.xlu0 %502
  %504 = vrot.lane.b32.xlu0 %v72, 1
  %v505 = vpop.permute.xlu0 %504
  %506 = vrot.lane.b32.xlu0 %v76, 1
  %v507 = vpop.permute.xlu0 %506
  %vm508 = vcmp.lt.s32.totalorder %v78, 1
  %v509 = vsel %vm508, %v477, %v493
  %v510 = vsel %vm508, %v479, %v495
  %v511 = vsel %vm508, %v481, %v497
  %v512 = vsel %vm508, %v483, %v499
  %v513 = vsel %vm508, %v485, %v501
  %v514 = vsel %vm508, %v487, %v503
  %v515 = vsel %vm508, %v489, %v505
  %v516 = vsel %vm508, %v491, %v507
  %v517 = vsel %vm508, %v461, %v477
  %v518 = vsel %vm508, %v463, %v479
  %v519 = vsel %vm508, %v465, %v481
  %v520 = vsel %vm508, %v467, %v483
  %v521 = vsel %vm508, %v469, %v485
  %v522 = vsel %vm508, %v471, %v487
  %v523 = vsel %vm508, %v473, %v489
  %v524 = vsel %vm508, %v475, %v491
  %v525 = vsel %vm508, %v445, %v461
  %v526 = vsel %vm508, %v447, %v463
  %v527 = vsel %vm508, %v449, %v465
  %v528 = vsel %vm508, %v451, %v467
  %v529 = vsel %vm508, %v453, %v469
  %v530 = vsel %vm508, %v455, %v471
  %v531 = vsel %vm508, %v457, %v473
  %v532 = vsel %vm508, %v459, %v475
  %v533 = vsel %vm508, %v493, %v445
  %v534 = vsel %vm508, %v495, %v447
  %v535 = vsel %vm508, %v497, %v449
  %v536 = vsel %vm508, %v499, %v451
  %v537 = vsel %vm508, %v501, %v453
  %v538 = vsel %vm508, %v503, %v455
  %v539 = vsel %vm508, %v505, %v457
  %v540 = vsel %vm508, %v507, %v459
  %vm541 = vcmp.ge.s32.totalorder %v126, 1
  %vm542 = vcmp.ge.s32.totalorder %v127, 1
  %vm543 = vcmp.ge.s32.totalorder %v128, 1
  %vm544 = vcmp.ge.s32.totalorder %v129, 1
  %v545 = vsel %vm541, 1, 0
  %v546 = vsel %vm542, 1, 0
  %v547 = vsel %vm543, 1, 0
  %v548 = vsel %vm544, 1, 0
  %vm549 = vcmp.eq.s32.totalorder %v545, 1
  %vm550 = vcmp.eq.s32.totalorder %v546, 1
  %vm551 = vcmp.eq.s32.totalorder %v547, 1
  %vm552 = vcmp.eq.s32.totalorder %v548, 1
  %v553 = vsel %vm549, %v533, 0.0
  %v554 = vsel %vm550, %v525, 0.0
  %v555 = vsel %vm551, %v517, 0.0
  %v556 = vsel %vm552, %v509, 0.0
  %v557 = vsel %vm549, %v534, 0.0
  %v558 = vsel %vm550, %v526, 0.0
  %v559 = vsel %vm551, %v518, 0.0
  %v560 = vsel %vm552, %v510, 0.0
  %v561 = vsel %vm549, %v535, 0.0
  %v562 = vsel %vm550, %v527, 0.0
  %v563 = vsel %vm551, %v519, 0.0
  %v564 = vsel %vm552, %v511, 0.0
  %v565 = vsel %vm549, %v536, 0.0
  %v566 = vsel %vm550, %v528, 0.0
  %v567 = vsel %vm551, %v520, 0.0
  %v568 = vsel %vm552, %v512, 0.0
  %v569 = vsel %vm549, %v537, 0.0
  %v570 = vsel %vm550, %v529, 0.0
  %v571 = vsel %vm551, %v521, 0.0
  %v572 = vsel %vm552, %v513, 0.0
  %v573 = vsel %vm549, %v538, 0.0
  %v574 = vsel %vm550, %v530, 0.0
  %v575 = vsel %vm551, %v522, 0.0
  %v576 = vsel %vm552, %v514, 0.0
  %v577 = vsel %vm549, %v539, 0.0
  %v578 = vsel %vm550, %v531, 0.0
  %v579 = vsel %vm551, %v523, 0.0
  %v580 = vsel %vm552, %v515, 0.0
  %v581 = vsel %vm549, %v540, 0.0
  %v582 = vsel %vm550, %v532, 0.0
  %v583 = vsel %vm551, %v524, 0.0
  %v584 = vsel %vm552, %v516, 0.0
  %v585 = vpack.c.bf16 %v557, %v553
  %v586 = vpack.c.bf16 %v558, %v554
  %v587 = vpack.c.bf16 %v559, %v555
  %v588 = vpack.c.bf16 %v560, %v556
  %v589 = vpack.c.bf16 %v565, %v561
  %v590 = vpack.c.bf16 %v566, %v562
  %v591 = vpack.c.bf16 %v567, %v563
  %v592 = vpack.c.bf16 %v568, %v564
  %v593 = vpack.c.bf16 %v573, %v569
  %v594 = vpack.c.bf16 %v574, %v570
  %v595 = vpack.c.bf16 %v575, %v571
  %v596 = vpack.c.bf16 %v576, %v572
  %v597 = vpack.c.bf16 %v581, %v577
  %v598 = vpack.c.bf16 %v582, %v578
  %v599 = vpack.c.bf16 %v583, %v579
  %v600 = vpack.c.bf16 %v584, %v580
  %v601 = vpack.c.bf16 %v49, %v45
  %v602 = vpack.c.bf16 %v50, %v46
  %v603 = vpack.c.bf16 %v51, %v47
  %v604 = vpack.c.bf16 %v52, %v48
  %v605 = vpack.c.bf16 %v57, %v53
  %v606 = vpack.c.bf16 %v58, %v54
  %v607 = vpack.c.bf16 %v59, %v55
  %v608 = vpack.c.bf16 %v60, %v56
  %v609 = vpack.c.bf16 %v65, %v61
  %v610 = vpack.c.bf16 %v66, %v62
  %v611 = vpack.c.bf16 %v67, %v63
  %v612 = vpack.c.bf16 %v68, %v64
  %v613 = vpack.c.bf16 %v73, %v69
  %v614 = vpack.c.bf16 %v74, %v70
  %v615 = vpack.c.bf16 %v75, %v71
  %v616 = vpack.c.bf16 %v76, %v72
  %617 = vrot.lane.b32.xlu0 %v45, 127
  %v618 = vpop.permute.xlu0 %617
  %619 = vrot.lane.b32.xlu0 %v49, 127
  %v620 = vpop.permute.xlu0 %619
  %621 = vrot.lane.b32.xlu0 %v53, 127
  %v622 = vpop.permute.xlu0 %621
  %623 = vrot.lane.b32.xlu0 %v57, 127
  %v624 = vpop.permute.xlu0 %623
  %625 = vrot.lane.b32.xlu0 %v61, 127
  %v626 = vpop.permute.xlu0 %625
  %627 = vrot.lane.b32.xlu0 %v65, 127
  %v628 = vpop.permute.xlu0 %627
  %629 = vrot.lane.b32.xlu0 %v69, 127
  %v630 = vpop.permute.xlu0 %629
  %631 = vrot.lane.b32.xlu0 %v73, 127
  %v632 = vpop.permute.xlu0 %631
  %633 = vrot.lane.b32.xlu0 %v46, 127
  %v634 = vpop.permute.xlu0 %633
  %635 = vrot.lane.b32.xlu0 %v50, 127
  %v636 = vpop.permute.xlu0 %635
  %637 = vrot.lane.b32.xlu0 %v54, 127
  %v638 = vpop.permute.xlu0 %637
  %639 = vrot.lane.b32.xlu0 %v58, 127
  %v640 = vpop.permute.xlu0 %639
  %641 = vrot.lane.b32.xlu0 %v62, 127
  %v642 = vpop.permute.xlu0 %641
  %643 = vrot.lane.b32.xlu0 %v66, 127
  %v644 = vpop.permute.xlu0 %643
  %645 = vrot.lane.b32.xlu0 %v70, 127
  %v646 = vpop.permute.xlu0 %645
  %647 = vrot.lane.b32.xlu0 %v74, 127
  %v648 = vpop.permute.xlu0 %647
  %649 = vrot.lane.b32.xlu0 %v47, 127
  %v650 = vpop.permute.xlu0 %649
  %651 = vrot.lane.b32.xlu0 %v51, 127
  %v652 = vpop.permute.xlu0 %651
  %653 = vrot.lane.b32.xlu0 %v55, 127
  %v654 = vpop.permute.xlu0 %653
  %655 = vrot.lane.b32.xlu0 %v59, 127
  %v656 = vpop.permute.xlu0 %655
  %657 = vrot.lane.b32.xlu0 %v63, 127
  %v658 = vpop.permute.xlu0 %657
  %659 = vrot.lane.b32.xlu0 %v67, 127
  %v660 = vpop.permute.xlu0 %659
  %661 = vrot.lane.b32.xlu0 %v71, 127
  %v662 = vpop.permute.xlu0 %661
  %663 = vrot.lane.b32.xlu0 %v75, 127
  %v664 = vpop.permute.xlu0 %663
  %665 = vrot.lane.b32.xlu0 %v48, 127
  %v666 = vpop.permute.xlu0 %665
  %667 = vrot.lane.b32.xlu0 %v52, 127
  %v668 = vpop.permute.xlu0 %667
  %669 = vrot.lane.b32.xlu0 %v56, 127
  %v670 = vpop.permute.xlu0 %669
  %671 = vrot.lane.b32.xlu0 %v60, 127
  %v672 = vpop.permute.xlu0 %671
  %673 = vrot.lane.b32.xlu0 %v64, 127
  %v674 = vpop.permute.xlu0 %673
  %675 = vrot.lane.b32.xlu0 %v68, 127
  %v676 = vpop.permute.xlu0 %675
  %677 = vrot.lane.b32.xlu0 %v72, 127
  %v678 = vpop.permute.xlu0 %677
  %679 = vrot.lane.b32.xlu0 %v76, 127
  %v680 = vpop.permute.xlu0 %679
  %vm681 = vcmp.lt.s32.totalorder %v78, 127
  %v682 = vsel %vm681, %v650, %v666
  %v683 = vsel %vm681, %v652, %v668
  %v684 = vsel %vm681, %v654, %v670
  %v685 = vsel %vm681, %v656, %v672
  %v686 = vsel %vm681, %v658, %v674
  %v687 = vsel %vm681, %v660, %v676
  %v688 = vsel %vm681, %v662, %v678
  %v689 = vsel %vm681, %v664, %v680
  %v690 = vsel %vm681, %v634, %v650
  %v691 = vsel %vm681, %v636, %v652
  %v692 = vsel %vm681, %v638, %v654
  %v693 = vsel %vm681, %v640, %v656
  %v694 = vsel %vm681, %v642, %v658
  %v695 = vsel %vm681, %v644, %v660
  %v696 = vsel %vm681, %v646, %v662
  %v697 = vsel %vm681, %v648, %v664
  %v698 = vsel %vm681, %v618, %v634
  %v699 = vsel %vm681, %v620, %v636
  %v700 = vsel %vm681, %v622, %v638
  %v701 = vsel %vm681, %v624, %v640
  %v702 = vsel %vm681, %v626, %v642
  %v703 = vsel %vm681, %v628, %v644
  %v704 = vsel %vm681, %v630, %v646
  %v705 = vsel %vm681, %v632, %v648
  %v706 = vsel %vm681, %v666, %v618
  %v707 = vsel %vm681, %v668, %v620
  %v708 = vsel %vm681, %v670, %v622
  %v709 = vsel %vm681, %v672, %v624
  %v710 = vsel %vm681, %v674, %v626
  %v711 = vsel %vm681, %v676, %v628
  %v712 = vsel %vm681, %v678, %v630
  %v713 = vsel %vm681, %v680, %v632
  %vm714 = vcmp.lt.s32.totalorder %v126, 127
  %vm715 = vcmp.lt.s32.totalorder %v127, 127
  %vm716 = vcmp.lt.s32.totalorder %v128, 127
  %vm717 = vcmp.lt.s32.totalorder %v129, 127
  %v718 = vsel %vm714, 1, 0
  %v719 = vsel %vm715, 1, 0
  %v720 = vsel %vm716, 1, 0
  %v721 = vsel %vm717, 1, 0
  %vm722 = vcmp.eq.s32.totalorder %v718, 1
  %vm723 = vcmp.eq.s32.totalorder %v719, 1
  %vm724 = vcmp.eq.s32.totalorder %v720, 1
  %vm725 = vcmp.eq.s32.totalorder %v721, 1
  %v726 = vsel %vm722, %v698, 0.0
  %v727 = vsel %vm723, %v690, 0.0
  %v728 = vsel %vm724, %v682, 0.0
  %v729 = vsel %vm725, %v706, 0.0
  %v730 = vsel %vm722, %v699, 0.0
  %v731 = vsel %vm723, %v691, 0.0
  %v732 = vsel %vm724, %v683, 0.0
  %v733 = vsel %vm725, %v707, 0.0
  %v734 = vsel %vm722, %v700, 0.0
  %v735 = vsel %vm723, %v692, 0.0
  %v736 = vsel %vm724, %v684, 0.0
  %v737 = vsel %vm725, %v708, 0.0
  %v738 = vsel %vm722, %v701, 0.0
  %v739 = vsel %vm723, %v693, 0.0
  %v740 = vsel %vm724, %v685, 0.0
  %v741 = vsel %vm725, %v709, 0.0
  %v742 = vsel %vm722, %v702, 0.0
  %v743 = vsel %vm723, %v694, 0.0
  %v744 = vsel %vm724, %v686, 0.0
  %v745 = vsel %vm725, %v710, 0.0
  %v746 = vsel %vm722, %v703, 0.0
  %v747 = vsel %vm723, %v695, 0.0
  %v748 = vsel %vm724, %v687, 0.0
  %v749 = vsel %vm725, %v711, 0.0
  %v750 = vsel %vm722, %v704, 0.0
  %v751 = vsel %vm723, %v696, 0.0
  %v752 = vsel %vm724, %v688, 0.0
  %v753 = vsel %vm725, %v712, 0.0
  %v754 = vsel %vm722, %v705, 0.0
  %v755 = vsel %vm723, %v697, 0.0
  %v756 = vsel %vm724, %v689, 0.0
  %v757 = vsel %vm725, %v713, 0.0
  %v758 = vpack.c.bf16 %v730, %v726
  %v759 = vpack.c.bf16 %v731, %v727
  %v760 = vpack.c.bf16 %v732, %v728
  %v761 = vpack.c.bf16 %v733, %v729
  %v762 = vpack.c.bf16 %v738, %v734
  %v763 = vpack.c.bf16 %v739, %v735
  %v764 = vpack.c.bf16 %v740, %v736
  %v765 = vpack.c.bf16 %v741, %v737
  %v766 = vpack.c.bf16 %v746, %v742
  %v767 = vpack.c.bf16 %v747, %v743
  %v768 = vpack.c.bf16 %v748, %v744
  %v769 = vpack.c.bf16 %v749, %v745
  %v770 = vpack.c.bf16 %v754, %v750
  %v771 = vpack.c.bf16 %v755, %v751
  %v772 = vpack.c.bf16 %v756, %v752
  %v773 = vpack.c.bf16 %v757, %v753
  %774 = vrot.lane.b32.xlu0 %v45, 126
  %v775 = vpop.permute.xlu0 %774
  %776 = vrot.lane.b32.xlu0 %v49, 126
  %v777 = vpop.permute.xlu0 %776
  %778 = vrot.lane.b32.xlu0 %v53, 126
  %v779 = vpop.permute.xlu0 %778
  %780 = vrot.lane.b32.xlu0 %v57, 126
  %v781 = vpop.permute.xlu0 %780
  %782 = vrot.lane.b32.xlu0 %v61, 126
  %v783 = vpop.permute.xlu0 %782
  %784 = vrot.lane.b32.xlu0 %v65, 126
  %v785 = vpop.permute.xlu0 %784
  %786 = vrot.lane.b32.xlu0 %v69, 126
  %v787 = vpop.permute.xlu0 %786
  %788 = vrot.lane.b32.xlu0 %v73, 126
  %v789 = vpop.permute.xlu0 %788
  %790 = vrot.lane.b32.xlu0 %v46, 126
  %v791 = vpop.permute.xlu0 %790
  %792 = vrot.lane.b32.xlu0 %v50, 126
  %v793 = vpop.permute.xlu0 %792
  %794 = vrot.lane.b32.xlu0 %v54, 126
  %v795 = vpop.permute.xlu0 %794
  %796 = vrot.lane.b32.xlu0 %v58, 126
  %v797 = vpop.permute.xlu0 %796
  %798 = vrot.lane.b32.xlu0 %v62, 126
  %v799 = vpop.permute.xlu0 %798
  %800 = vrot.lane.b32.xlu0 %v66, 126
  %v801 = vpop.permute.xlu0 %800
  %802 = vrot.lane.b32.xlu0 %v70, 126
  %v803 = vpop.permute.xlu0 %802
  %804 = vrot.lane.b32.xlu0 %v74, 126
  %v805 = vpop.permute.xlu0 %804
  %806 = vrot.lane.b32.xlu0 %v47, 126
  %v807 = vpop.permute.xlu0 %806
  %808 = vrot.lane.b32.xlu0 %v51, 126
  %v809 = vpop.permute.xlu0 %808
  %810 = vrot.lane.b32.xlu0 %v55, 126
  %v811 = vpop.permute.xlu0 %810
  %812 = vrot.lane.b32.xlu0 %v59, 126
  %v813 = vpop.permute.xlu0 %812
  %814 = vrot.lane.b32.xlu0 %v63, 126
  %v815 = vpop.permute.xlu0 %814
  %816 = vrot.lane.b32.xlu0 %v67, 126
  %v817 = vpop.permute.xlu0 %816
  %818 = vrot.lane.b32.xlu0 %v71, 126
  %v819 = vpop.permute.xlu0 %818
  %820 = vrot.lane.b32.xlu0 %v75, 126
  %v821 = vpop.permute.xlu0 %820
  %822 = vrot.lane.b32.xlu0 %v48, 126
  %v823 = vpop.permute.xlu0 %822
  %824 = vrot.lane.b32.xlu0 %v52, 126
  %v825 = vpop.permute.xlu0 %824
  %826 = vrot.lane.b32.xlu0 %v56, 126
  %v827 = vpop.permute.xlu0 %826
  %828 = vrot.lane.b32.xlu0 %v60, 126
  %v829 = vpop.permute.xlu0 %828
  %830 = vrot.lane.b32.xlu0 %v64, 126
  %v831 = vpop.permute.xlu0 %830
  %832 = vrot.lane.b32.xlu0 %v68, 126
  %v833 = vpop.permute.xlu0 %832
  %834 = vrot.lane.b32.xlu0 %v72, 126
  %v835 = vpop.permute.xlu0 %834
  %836 = vrot.lane.b32.xlu0 %v76, 126
  %v837 = vpop.permute.xlu0 %836
  %vm838 = vcmp.lt.s32.totalorder %v78, 126
  %v839 = vsel %vm838, %v807, %v823
  %v840 = vsel %vm838, %v809, %v825
  %v841 = vsel %vm838, %v811, %v827
  %v842 = vsel %vm838, %v813, %v829
  %v843 = vsel %vm838, %v815, %v831
  %v844 = vsel %vm838, %v817, %v833
  %v845 = vsel %vm838, %v819, %v835
  %v846 = vsel %vm838, %v821, %v837
  %v847 = vsel %vm838, %v791, %v807
  %v848 = vsel %vm838, %v793, %v809
  %v849 = vsel %vm838, %v795, %v811
  %v850 = vsel %vm838, %v797, %v813
  %v851 = vsel %vm838, %v799, %v815
  %v852 = vsel %vm838, %v801, %v817
  %v853 = vsel %vm838, %v803, %v819
  %v854 = vsel %vm838, %v805, %v821
  %v855 = vsel %vm838, %v775, %v791
  %v856 = vsel %vm838, %v777, %v793
  %v857 = vsel %vm838, %v779, %v795
  %v858 = vsel %vm838, %v781, %v797
  %v859 = vsel %vm838, %v783, %v799
  %v860 = vsel %vm838, %v785, %v801
  %v861 = vsel %vm838, %v787, %v803
  %v862 = vsel %vm838, %v789, %v805
  %v863 = vsel %vm838, %v823, %v775
  %v864 = vsel %vm838, %v825, %v777
  %v865 = vsel %vm838, %v827, %v779
  %v866 = vsel %vm838, %v829, %v781
  %v867 = vsel %vm838, %v831, %v783
  %v868 = vsel %vm838, %v833, %v785
  %v869 = vsel %vm838, %v835, %v787
  %v870 = vsel %vm838, %v837, %v789
  %vm871 = vcmp.lt.s32.totalorder %v126, 126
  %vm872 = vcmp.lt.s32.totalorder %v127, 126
  %vm873 = vcmp.lt.s32.totalorder %v128, 126
  %vm874 = vcmp.lt.s32.totalorder %v129, 126
  %v875 = vsel %vm871, 1, 0
  %v876 = vsel %vm872, 1, 0
  %v877 = vsel %vm873, 1, 0
  %v878 = vsel %vm874, 1, 0
  %vm879 = vcmp.eq.s32.totalorder %v875, 1
  %vm880 = vcmp.eq.s32.totalorder %v876, 1
  %vm881 = vcmp.eq.s32.totalorder %v877, 1
  %vm882 = vcmp.eq.s32.totalorder %v878, 1
  %v883 = vsel %vm879, %v855, 0.0
  %v884 = vsel %vm880, %v847, 0.0
  %v885 = vsel %vm881, %v839, 0.0
  %v886 = vsel %vm882, %v863, 0.0
  %v887 = vsel %vm879, %v856, 0.0
  %v888 = vsel %vm880, %v848, 0.0
  %v889 = vsel %vm881, %v840, 0.0
  %v890 = vsel %vm882, %v864, 0.0
  %v891 = vsel %vm879, %v857, 0.0
  %v892 = vsel %vm880, %v849, 0.0
  %v893 = vsel %vm881, %v841, 0.0
  %v894 = vsel %vm882, %v865, 0.0
  %v895 = vsel %vm879, %v858, 0.0
  %v896 = vsel %vm880, %v850, 0.0
  %v897 = vsel %vm881, %v842, 0.0
  %v898 = vsel %vm882, %v866, 0.0
  %v899 = vsel %vm879, %v859, 0.0
  %v900 = vsel %vm880, %v851, 0.0
  %v901 = vsel %vm881, %v843, 0.0
  %v902 = vsel %vm882, %v867, 0.0
  %v903 = vsel %vm879, %v860, 0.0
  %v904 = vsel %vm880, %v852, 0.0
  %v905 = vsel %vm881, %v844, 0.0
  %v906 = vsel %vm882, %v868, 0.0
  %v907 = vsel %vm879, %v861, 0.0
  %v908 = vsel %vm880, %v853, 0.0
  %v909 = vsel %vm881, %v845, 0.0
  %v910 = vsel %vm882, %v869, 0.0
  %v911 = vsel %vm879, %v862, 0.0
  %v912 = vsel %vm880, %v854, 0.0
  %v913 = vsel %vm881, %v846, 0.0
  %v914 = vsel %vm882, %v870, 0.0
  %v915 = vpack.c.bf16 %v887, %v883
  %v916 = vpack.c.bf16 %v888, %v884
  %v917 = vpack.c.bf16 %v889, %v885
  %v918 = vpack.c.bf16 %v890, %v886
  %v919 = vpack.c.bf16 %v895, %v891
  %v920 = vpack.c.bf16 %v896, %v892
  %v921 = vpack.c.bf16 %v897, %v893
  %v922 = vpack.c.bf16 %v898, %v894
  %v923 = vpack.c.bf16 %v903, %v899
  %v924 = vpack.c.bf16 %v904, %v900
  %v925 = vpack.c.bf16 %v905, %v901
  %v926 = vpack.c.bf16 %v906, %v902
  %v927 = vpack.c.bf16 %v911, %v907
  %v928 = vpack.c.bf16 %v912, %v908
  %v929 = vpack.c.bf16 %v913, %v909
  %v930 = vpack.c.bf16 %v914, %v910
  %931 = vrot.lane.b32.xlu0 %v45, 125
  %v932 = vpop.permute.xlu0 %931
  %933 = vrot.lane.b32.xlu0 %v49, 125
  %v934 = vpop.permute.xlu0 %933
  %935 = vrot.lane.b32.xlu0 %v53, 125
  %v936 = vpop.permute.xlu0 %935
  %937 = vrot.lane.b32.xlu0 %v57, 125
  %v938 = vpop.permute.xlu0 %937
  %939 = vrot.lane.b32.xlu0 %v61, 125
  %v940 = vpop.permute.xlu0 %939
  %941 = vrot.lane.b32.xlu0 %v65, 125
  %v942 = vpop.permute.xlu0 %941
  %943 = vrot.lane.b32.xlu0 %v69, 125
  %v944 = vpop.permute.xlu0 %943
  %945 = vrot.lane.b32.xlu0 %v73, 125
  %v946 = vpop.permute.xlu0 %945
  %947 = vrot.lane.b32.xlu0 %v46, 125
  %v948 = vpop.permute.xlu0 %947
  %949 = vrot.lane.b32.xlu0 %v50, 125
  %v950 = vpop.permute.xlu0 %949
  %951 = vrot.lane.b32.xlu0 %v54, 125
  %v952 = vpop.permute.xlu0 %951
  %953 = vrot.lane.b32.xlu0 %v58, 125
  %v954 = vpop.permute.xlu0 %953
  %955 = vrot.lane.b32.xlu0 %v62, 125
  %v956 = vpop.permute.xlu0 %955
  %957 = vrot.lane.b32.xlu0 %v66, 125
  %v958 = vpop.permute.xlu0 %957
  %959 = vrot.lane.b32.xlu0 %v70, 125
  %v960 = vpop.permute.xlu0 %959
  %961 = vrot.lane.b32.xlu0 %v74, 125
  %v962 = vpop.permute.xlu0 %961
  %963 = vrot.lane.b32.xlu0 %v47, 125
  %v964 = vpop.permute.xlu0 %963
  %965 = vrot.lane.b32.xlu0 %v51, 125
  %v966 = vpop.permute.xlu0 %965
  %967 = vrot.lane.b32.xlu0 %v55, 125
  %v968 = vpop.permute.xlu0 %967
  %969 = vrot.lane.b32.xlu0 %v59, 125
  %v970 = vpop.permute.xlu0 %969
  %971 = vrot.lane.b32.xlu0 %v63, 125
  %v972 = vpop.permute.xlu0 %971
  %973 = vrot.lane.b32.xlu0 %v67, 125
  %v974 = vpop.permute.xlu0 %973
  %975 = vrot.lane.b32.xlu0 %v71, 125
  %v976 = vpop.permute.xlu0 %975
  %977 = vrot.lane.b32.xlu0 %v75, 125
  %v978 = vpop.permute.xlu0 %977
  %979 = vrot.lane.b32.xlu0 %v48, 125
  %v980 = vpop.permute.xlu0 %979
  %981 = vrot.lane.b32.xlu0 %v52, 125
  %v982 = vpop.permute.xlu0 %981
  %983 = vrot.lane.b32.xlu0 %v56, 125
  %v984 = vpop.permute.xlu0 %983
  %985 = vrot.lane.b32.xlu0 %v60, 125
  %v986 = vpop.permute.xlu0 %985
  %987 = vrot.lane.b32.xlu0 %v64, 125
  %v988 = vpop.permute.xlu0 %987
  %989 = vrot.lane.b32.xlu0 %v68, 125
  %v990 = vpop.permute.xlu0 %989
  %991 = vrot.lane.b32.xlu0 %v72, 125
  %v992 = vpop.permute.xlu0 %991
  %993 = vrot.lane.b32.xlu0 %v76, 125
  %v994 = vpop.permute.xlu0 %993
  %vm995 = vcmp.lt.s32.totalorder %v78, 125
  %v996 = vsel %vm995, %v964, %v980
  %v997 = vsel %vm995, %v966, %v982
  %v998 = vsel %vm995, %v968, %v984
  %v999 = vsel %vm995, %v970, %v986
  %v1000 = vsel %vm995, %v972, %v988
  %v1001 = vsel %vm995, %v974, %v990
  %v1002 = vsel %vm995, %v976, %v992
  %v1003 = vsel %vm995, %v978, %v994
  %v1004 = vsel %vm995, %v948, %v964
  %v1005 = vsel %vm995, %v950, %v966
  %v1006 = vsel %vm995, %v952, %v968
  %v1007 = vsel %vm995, %v954, %v970
  %v1008 = vsel %vm995, %v956, %v972
  %v1009 = vsel %vm995, %v958, %v974
  %v1010 = vsel %vm995, %v960, %v976
  %v1011 = vsel %vm995, %v962, %v978
  %v1012 = vsel %vm995, %v932, %v948
  %v1013 = vsel %vm995, %v934, %v950
  %v1014 = vsel %vm995, %v936, %v952
  %v1015 = vsel %vm995, %v938, %v954
  %v1016 = vsel %vm995, %v940, %v956
  %v1017 = vsel %vm995, %v942, %v958
  %v1018 = vsel %vm995, %v944, %v960
  %v1019 = vsel %vm995, %v946, %v962
  %v1020 = vsel %vm995, %v980, %v932
  %v1021 = vsel %vm995, %v982, %v934
  %v1022 = vsel %vm995, %v984, %v936
  %v1023 = vsel %vm995, %v986, %v938
  %v1024 = vsel %vm995, %v988, %v940
  %v1025 = vsel %vm995, %v990, %v942
  %v1026 = vsel %vm995, %v992, %v944
  %v1027 = vsel %vm995, %v994, %v946
  %vm1028 = vcmp.lt.s32.totalorder %v126, 125
  %vm1029 = vcmp.lt.s32.totalorder %v127, 125
  %vm1030 = vcmp.lt.s32.totalorder %v128, 125
  %vm1031 = vcmp.lt.s32.totalorder %v129, 125
  %v1032 = vsel %vm1028, 1, 0
  %v1033 = vsel %vm1029, 1, 0
  %v1034 = vsel %vm1030, 1, 0
  %v1035 = vsel %vm1031, 1, 0
  %vm1036 = vcmp.eq.s32.totalorder %v1032, 1
  %vm1037 = vcmp.eq.s32.totalorder %v1033, 1
  %vm1038 = vcmp.eq.s32.totalorder %v1034, 1
  %vm1039 = vcmp.eq.s32.totalorder %v1035, 1
  %v1040 = vsel %vm1036, %v1012, 0.0
  %v1041 = vsel %vm1037, %v1004, 0.0
  %v1042 = vsel %vm1038, %v996, 0.0
  %v1043 = vsel %vm1039, %v1020, 0.0
  %v1044 = vsel %vm1036, %v1013, 0.0
  %v1045 = vsel %vm1037, %v1005, 0.0
  %v1046 = vsel %vm1038, %v997, 0.0
  %v1047 = vsel %vm1039, %v1021, 0.0
  %v1048 = vsel %vm1036, %v1014, 0.0
  %v1049 = vsel %vm1037, %v1006, 0.0
  %v1050 = vsel %vm1038, %v998, 0.0
  %v1051 = vsel %vm1039, %v1022, 0.0
  %v1052 = vsel %vm1036, %v1015, 0.0
  %v1053 = vsel %vm1037, %v1007, 0.0
  %v1054 = vsel %vm1038, %v999, 0.0
  %v1055 = vsel %vm1039, %v1023, 0.0
  %v1056 = vsel %vm1036, %v1016, 0.0
  %v1057 = vsel %vm1037, %v1008, 0.0
  %v1058 = vsel %vm1038, %v1000, 0.0
  %v1059 = vsel %vm1039, %v1024, 0.0
  %v1060 = vsel %vm1036, %v1017, 0.0
  %v1061 = vsel %vm1037, %v1009, 0.0
  %v1062 = vsel %vm1038, %v1001, 0.0
  %v1063 = vsel %vm1039, %v1025, 0.0
  %v1064 = vsel %vm1036, %v1018, 0.0
  %v1065 = vsel %vm1037, %v1010, 0.0
  %v1066 = vsel %vm1038, %v1002, 0.0
  %v1067 = vsel %vm1039, %v1026, 0.0
  %v1068 = vsel %vm1036, %v1019, 0.0
  %v1069 = vsel %vm1037, %v1011, 0.0
  %v1070 = vsel %vm1038, %v1003, 0.0
  %v1071 = vsel %vm1039, %v1027, 0.0
  %v1072 = vpack.c.bf16 %v1044, %v1040
  %v1073 = vpack.c.bf16 %v1045, %v1041
  %v1074 = vpack.c.bf16 %v1046, %v1042
  %v1075 = vpack.c.bf16 %v1047, %v1043
  %v1076 = vpack.c.bf16 %v1052, %v1048
  %v1077 = vpack.c.bf16 %v1053, %v1049
  %v1078 = vpack.c.bf16 %v1054, %v1050
  %v1079 = vpack.c.bf16 %v1055, %v1051
  %v1080 = vpack.c.bf16 %v1060, %v1056
  %v1081 = vpack.c.bf16 %v1061, %v1057
  %v1082 = vpack.c.bf16 %v1062, %v1058
  %v1083 = vpack.c.bf16 %v1063, %v1059
  %v1084 = vpack.c.bf16 %v1068, %v1064
  %v1085 = vpack.c.bf16 %v1069, %v1065
  %v1086 = vpack.c.bf16 %v1070, %v1066
  %v1087 = vpack.c.bf16 %v1071, %v1067
  %v1088 = vld [vmem:[%s1] sm:$0xff]
  %v1089 = vld [vmem:[%s1 + $0x8] sm:$0xff]
  %v1090 = vld [vmem:[%s1 + $0x10] sm:$0xff]
  %v1091 = vld [vmem:[%s1 + $0x18] sm:$0xff]
  %v1092 = vld [vmem:[%s1 + $0x20] sm:$0xff]
  %v1093 = vld [vmem:[%s1 + $0x28] sm:$0xff]
  %v1094 = vld [vmem:[%s1 + $0x30] sm:$0xff]
  %v1095 = vld [vmem:[%s1 + $0x38] sm:$0xff]
  %v1096 = vld [vmem:[%s1 + $0x40] sm:$0xff]
  %v1097 = vld [vmem:[%s1 + $0x48] sm:$0xff]
  %v1098 = vld [vmem:[%s1 + $0x50] sm:$0xff]
  %v1099 = vld [vmem:[%s1 + $0x58] sm:$0xff]
  %v1100 = vld [vmem:[%s1 + $0x60] sm:$0xff]
  %v1101 = vld [vmem:[%s1 + $0x68] sm:$0xff]
  %v1102 = vld [vmem:[%s1 + $0x70] sm:$0xff]
  %v1103 = vld [vmem:[%s1 + $0x78] sm:$0xff]
  %v1104 = vld [vmem:[%s2] sm:$0xff]
  %v1105 = vld [vmem:[%s2 + $0x8] sm:$0xff]
  %v1106 = vld [vmem:[%s2 + $0x10] sm:$0xff]
  %v1107 = vld [vmem:[%s2 + $0x18] sm:$0xff]
  %v1108 = vld [vmem:[%s2 + $0x20] sm:$0xff]
  %v1109 = vld [vmem:[%s2 + $0x28] sm:$0xff]
  %v1110 = vld [vmem:[%s2 + $0x30] sm:$0xff]
  %v1111 = vld [vmem:[%s2 + $0x38] sm:$0xff]
  %1113 = vset.pattern.permute.xlu0 0
  %1114 = vperm.xlu0 %1113, %v1104
  %v1115 = vpop.permute.xlu0 %1114
  %1118 = vset.pattern.permute.xlu0 0
  %1119 = vperm.xlu0 %1118, %v1105
  %v1120 = vpop.permute.xlu0 %1119
  %1123 = vset.pattern.permute.xlu0 0
  %1124 = vperm.xlu0 %1123, %v1106
  %v1125 = vpop.permute.xlu0 %1124
  %1128 = vset.pattern.permute.xlu0 0
  %1129 = vperm.xlu0 %1128, %v1107
  %v1130 = vpop.permute.xlu0 %1129
  %1133 = vset.pattern.permute.xlu0 0
  %1134 = vperm.xlu0 %1133, %v1108
  %v1135 = vpop.permute.xlu0 %1134
  %1138 = vset.pattern.permute.xlu0 0
  %1139 = vperm.xlu0 %1138, %v1109
  %v1140 = vpop.permute.xlu0 %1139
  %1143 = vset.pattern.permute.xlu0 0
  %1144 = vperm.xlu0 %1143, %v1110
  %v1145 = vpop.permute.xlu0 %1144
  %1148 = vset.pattern.permute.xlu0 0
  %1149 = vperm.xlu0 %1148, %v1111
  %v1150 = vpop.permute.xlu0 %1149
  %v1168 = vunpack.c.l.b16 %v1088
  %v1169 = vunpack.c.h.b16 %v1088
  %v1170 = vunpack.c.l.b16 %v1089
  %v1171 = vunpack.c.h.b16 %v1089
  %v1172 = vunpack.c.l.b16 %v1090
  %v1173 = vunpack.c.h.b16 %v1090
  %v1174 = vunpack.c.l.b16 %v1091
  %v1175 = vunpack.c.h.b16 %v1091
  %v1176 = vunpack.c.l.b16 %v1092
  %v1177 = vunpack.c.h.b16 %v1092
  %v1178 = vunpack.c.l.b16 %v1093
  %v1179 = vunpack.c.h.b16 %v1093
  %v1180 = vunpack.c.l.b16 %v1094
  %v1181 = vunpack.c.h.b16 %v1094
  %v1182 = vunpack.c.l.b16 %v1095
  %v1183 = vunpack.c.h.b16 %v1095
  %v1184 = vunpack.c.l.b16 %v1096
  %v1185 = vunpack.c.h.b16 %v1096
  %v1186 = vunpack.c.l.b16 %v1097
  %v1187 = vunpack.c.h.b16 %v1097
  %v1188 = vunpack.c.l.b16 %v1098
  %v1189 = vunpack.c.h.b16 %v1098
  %v1190 = vunpack.c.l.b16 %v1099
  %v1191 = vunpack.c.h.b16 %v1099
  %v1192 = vunpack.c.l.b16 %v1100
  %v1193 = vunpack.c.h.b16 %v1100
  %v1194 = vunpack.c.l.b16 %v1101
  %v1195 = vunpack.c.h.b16 %v1101
  %v1196 = vunpack.c.l.b16 %v1102
  %v1197 = vunpack.c.h.b16 %v1102
  %v1198 = vunpack.c.l.b16 %v1103
  %v1199 = vunpack.c.h.b16 %v1103
  %v1200 = vpack.c.b16 %v1172, %v1168
  %v1201 = vpack.c.b16 %v1173, %v1169
  %v1202 = vpack.c.b16 %v1174, %v1170
  %v1203 = vpack.c.b16 %v1175, %v1171
  %v1204 = vpack.c.b16 %v1180, %v1176
  %v1205 = vpack.c.b16 %v1181, %v1177
  %v1206 = vpack.c.b16 %v1182, %v1178
  %v1207 = vpack.c.b16 %v1183, %v1179
  %v1208 = vpack.c.b16 %v1188, %v1184
  %v1209 = vpack.c.b16 %v1189, %v1185
  %v1210 = vpack.c.b16 %v1190, %v1186
  %v1211 = vpack.c.b16 %v1191, %v1187
  %v1212 = vpack.c.b16 %v1196, %v1192
  %v1213 = vpack.c.b16 %v1197, %v1193
  %v1214 = vpack.c.b16 %v1198, %v1194
  %v1215 = vpack.c.b16 %v1199, %v1195
  %vm1228 = vcmask 523264
  %v1230 = vsel %vm1228, %v1203, 0
  %v1233 = vsel %vm1228, %v1207, 0
  %v1236 = vsel %vm1228, %v1211, 0
  %v1239 = vsel %vm1228, %v1215, 0
  %1241 = vmatprep.subr.bf16.mxu0 %v272
  %1242 = vmatpush1.bf16.msra.mxu0 %v271
  %1243 = vmatprep.subr.bf16.mxu0 %v276
  %1244 = vmatpush1.bf16.msra.mxu0 %v275
  %1245 = vmatprep.subr.bf16.mxu0 %v280
  %1246 = vmatpush1.bf16.msra.mxu0 %v279
  %1247 = vmatprep.subr.bf16.mxu0 %v284
  %1248 = vmatpush1.bf16.msra.mxu0 %v283
  %1249 = vmatprep.subr.bf16.mxu0 %v429
  %1250 = vmatpush1.bf16.msra.mxu0 %v428
  %1251 = vmatprep.subr.bf16.mxu0 %v433
  %1252 = vmatpush1.bf16.msra.mxu0 %v432
  %1253 = vmatprep.subr.bf16.mxu0 %v437
  %1254 = vmatpush1.bf16.msra.mxu0 %v436
  %1255 = vmatprep.subr.bf16.mxu0 %v441
  %1256 = vmatpush1.bf16.msra.mxu0 %v440
  %1257 = vmatprep.subr.bf16.mxu0 %v586
  %1258 = vmatpush1.bf16.msra.mxu0 %v585
  %1259 = vmatprep.subr.bf16.mxu0 %v590
  %1260 = vmatpush1.bf16.msra.mxu0 %v589
  %1261 = vmatprep.subr.bf16.mxu0 %v594
  %1262 = vmatpush1.bf16.msra.mxu0 %v593
  %1263 = vmatprep.subr.bf16.mxu0 %v598
  %1264 = vmatpush1.bf16.msra.mxu0 %v597
  %1265 = vmatprep.subr.bf16.mxu0 %v602
  %1266 = vmatpush1.bf16.msra.mxu0 %v601
  %1267 = vmatprep.subr.bf16.mxu0 %v606
  %1268 = vmatpush1.bf16.msra.mxu0 %v605
  %1269 = vmatprep.subr.bf16.mxu0 %v610
  %1270 = vmatpush1.bf16.msra.mxu0 %v609
  %1271 = vmatprep.subr.bf16.mxu0 %v614
  %1272 = vmatpush1.bf16.msra.mxu0 %v613
  %1273 = vmatprep.mubr.bf16.mxu0 %v1201
  %1274 = vmatmul.mubr.bf16.gmra.mrb[0].mxu0 %v1200
  %v1275 = vpop.f32.mrb[0].mxu0
  %v1276 = vadd.f32 %v1115, %v1275
  %v1277 = vpop.f32.mrb[0].mxu0
  %v1278 = vadd.f32 %v1115, %v1277
  %v1279 = vpop.f32.mrb[0].mxu0
  %v1280 = vadd.f32 %v1120, %v1279
  %v1281 = vpop.f32.mrb[0].mxu0
  %v1282 = vadd.f32 %v1120, %v1281
  %1283 = vmatprep.mubr.bf16.mxu0 %v1205
  %1284 = vmatmul.mubr.bf16.gmra.mrb[0].mxu0 %v1204
  %v1285 = vpop.f32.mrb[0].mxu0
  %v1286 = vadd.f32 %v1125, %v1285
  %v1287 = vpop.f32.mrb[0].mxu0
  %v1288 = vadd.f32 %v1125, %v1287
  %v1289 = vpop.f32.mrb[0].mxu0
  %v1290 = vadd.f32 %v1130, %v1289
  %v1291 = vpop.f32.mrb[0].mxu0
  %v1292 = vadd.f32 %v1130, %v1291
  %1293 = vmatprep.mubr.bf16.mxu0 %v1209
  %1294 = vmatmul.mubr.bf16.gmra.mrb[0].mxu0 %v1208
  %v1295 = vpop.f32.mrb[0].mxu0
  %v1296 = vadd.f32 %v1135, %v1295
  %v1297 = vpop.f32.mrb[0].mxu0
  %v1298 = vadd.f32 %v1135, %v1297
  %v1299 = vpop.f32.mrb[0].mxu0
  %v1300 = vadd.f32 %v1140, %v1299
  %v1301 = vpop.f32.mrb[0].mxu0
  %v1302 = vadd.f32 %v1140, %v1301
  %1303 = vmatprep.mubr.bf16.mxu0 %v1213
  %1304 = vmatmul.mubr.bf16.gmra.mrb[0].mxu0 %v1212
  %v1305 = vpop.f32.mrb[0].mxu0
  %v1306 = vadd.f32 %v1145, %v1305
  %v1307 = vpop.f32.mrb[0].mxu0
  %v1308 = vadd.f32 %v1145, %v1307
  %v1309 = vpop.f32.mrb[0].mxu0
  %v1310 = vadd.f32 %v1150, %v1309
  %v1311 = vpop.f32.mrb[0].mxu0
  %v1312 = vadd.f32 %v1150, %v1311
  %1313 = vdwg.mxu0
  %1314 = vmatprep.subr.bf16.mxu0 %v759
  %1315 = vmatpush1.bf16.msra.mxu0 %v758
  %1316 = vmatprep.subr.bf16.mxu0 %v763
  %1317 = vmatpush1.bf16.msra.mxu0 %v762
  %1318 = vmatprep.subr.bf16.mxu0 %v767
  %1319 = vmatpush1.bf16.msra.mxu0 %v766
  %1320 = vmatprep.subr.bf16.mxu0 %v771
  %1321 = vmatpush1.bf16.msra.mxu0 %v770
  %1322 = vmatprep.subr.bf16.mxu0 %v916
  %1323 = vmatpush1.bf16.msra.mxu0 %v915
  %1324 = vmatprep.subr.bf16.mxu0 %v920
  %1325 = vmatpush1.bf16.msra.mxu0 %v919
  %1326 = vmatprep.subr.bf16.mxu0 %v924
  %1327 = vmatpush1.bf16.msra.mxu0 %v923
  %1328 = vmatprep.subr.bf16.mxu0 %v928
  %1329 = vmatpush1.bf16.msra.mxu0 %v927
  %1330 = vmatprep.subr.bf16.mxu0 %v1073
  %1331 = vmatpush1.bf16.msra.mxu0 %v1072
  %1332 = vmatprep.subr.bf16.mxu0 %v1077
  %1333 = vmatpush1.bf16.msra.mxu0 %v1076
  %1334 = vmatprep.subr.bf16.mxu0 %v1081
  %1335 = vmatpush1.bf16.msra.mxu0 %v1080
  %1336 = vmatprep.subr.bf16.mxu0 %v1085
  %1337 = vmatpush1.bf16.msra.mxu0 %v1084
  %1338 = vmatprep.subr.bf16.mxu0 0
  %1339 = vmatpush1.bf16.msra.mxu0 0
  %1340 = vmatprep.subr.bf16.mxu0 0
  %1341 = vmatpush1.bf16.msra.mxu0 0
  %1342 = vmatprep.subr.bf16.mxu0 0
  %1343 = vmatpush1.bf16.msra.mxu0 0
  %1344 = vmatprep.subr.bf16.mxu0 0
  %1345 = vmatpush1.bf16.msra.mxu0 0
  %1346 = vmatprep.mubr.bf16.mxu0 %v1230
  %1347 = vmatmul.mubr.bf16.gmra.mrb[0].mxu0 %v1202
  %v1348 = vpop.f32.mrb[0].mxu0
  %v1349 = vadd.f32 %v1276, %v1348
  %v1350 = vpop.f32.mrb[0].mxu0
  %v1351 = vadd.f32 %v1278, %v1350
  %v1352 = vpop.f32.mrb[0].mxu0
  %v1353 = vadd.f32 %v1280, %v1352
  %v1354 = vpop.f32.mrb[0].mxu0
  %v1355 = vadd.f32 %v1282, %v1354
  %1356 = vmatprep.mubr.bf16.mxu0 %v1233
  %1357 = vmatmul.mubr.bf16.gmra.mrb[0].mxu0 %v1206
  %v1358 = vpop.f32.mrb[0].mxu0
  %v1359 = vadd.f32 %v1286, %v1358
  %v1360 = vpop.f32.mrb[0].mxu0
  %v1361 = vadd.f32 %v1288, %v1360
  %v1362 = vpop.f32.mrb[0].mxu0
  %v1363 = vadd.f32 %v1290, %v1362
  %v1364 = vpop.f32.mrb[0].mxu0
  %v1365 = vadd.f32 %v1292, %v1364
  %1366 = vmatprep.mubr.bf16.mxu0 %v1236
  %1367 = vmatmul.mubr.bf16.gmra.mrb[0].mxu0 %v1210
  %v1368 = vpop.f32.mrb[0].mxu0
  %v1369 = vadd.f32 %v1296, %v1368
  %v1370 = vpop.f32.mrb[0].mxu0
  %v1371 = vadd.f32 %v1298, %v1370
  %v1372 = vpop.f32.mrb[0].mxu0
  %v1373 = vadd.f32 %v1300, %v1372
  %v1374 = vpop.f32.mrb[0].mxu0
  %v1375 = vadd.f32 %v1302, %v1374
  %1376 = vmatprep.mubr.bf16.mxu0 %v1239
  %1377 = vmatmul.mubr.bf16.gmra.mrb[0].mxu0 %v1214
  %v1378 = vpop.f32.mrb[0].mxu0
  %v1379 = vadd.f32 %v1306, %v1378
  %v1380 = vpop.f32.mrb[0].mxu0
  %v1381 = vadd.f32 %v1308, %v1380
  %v1382 = vpop.f32.mrb[0].mxu0
  %v1383 = vadd.f32 %v1310, %v1382
  %v1384 = vpop.f32.mrb[0].mxu0
  %v1385 = vadd.f32 %v1312, %v1384
  %1386 = vdwg.mxu0
  %1387 = vmatprep.subr.bf16.mxu0 %v274
  %1388 = vmatpush1.bf16.msra.mxu0 %v273
  %1389 = vmatprep.subr.bf16.mxu0 %v278
  %1390 = vmatpush1.bf16.msra.mxu0 %v277
  %1391 = vmatprep.subr.bf16.mxu0 %v282
  %1392 = vmatpush1.bf16.msra.mxu0 %v281
  %1393 = vmatprep.subr.bf16.mxu0 %v286
  %1394 = vmatpush1.bf16.msra.mxu0 %v285
  %1395 = vmatprep.subr.bf16.mxu0 %v431
  %1396 = vmatpush1.bf16.msra.mxu0 %v430
  %1397 = vmatprep.subr.bf16.mxu0 %v435
  %1398 = vmatpush1.bf16.msra.mxu0 %v434
  %1399 = vmatprep.subr.bf16.mxu0 %v439
  %1400 = vmatpush1.bf16.msra.mxu0 %v438
  %1401 = vmatprep.subr.bf16.mxu0 %v443
  %1402 = vmatpush1.bf16.msra.mxu0 %v442
  %1403 = vmatprep.subr.bf16.mxu0 %v588
  %1404 = vmatpush1.bf16.msra.mxu0 %v587
  %1405 = vmatprep.subr.bf16.mxu0 %v592
  %1406 = vmatpush1.bf16.msra.mxu0 %v591
  %1407 = vmatprep.subr.bf16.mxu0 %v596
  %1408 = vmatpush1.bf16.msra.mxu0 %v595
  %1409 = vmatprep.subr.bf16.mxu0 %v600
  %1410 = vmatpush1.bf16.msra.mxu0 %v599
  %1411 = vmatprep.subr.bf16.mxu0 %v604
  %1412 = vmatpush1.bf16.msra.mxu0 %v603
  %1413 = vmatprep.subr.bf16.mxu0 %v608
  %1414 = vmatpush1.bf16.msra.mxu0 %v607
  %1415 = vmatprep.subr.bf16.mxu0 %v612
  %1416 = vmatpush1.bf16.msra.mxu0 %v611
  %1417 = vmatprep.subr.bf16.mxu0 %v616
  %1418 = vmatpush1.bf16.msra.mxu0 %v615
  %1419 = vmatprep.mubr.bf16.mxu0 %v1201
  %1420 = vmatmul.mubr.bf16.gmra.mrb[0].mxu0 %v1200
  %v1421 = vpop.f32.mrb[0].mxu0
  %v1422 = vadd.f32 %v1115, %v1421
  %v1423 = vpop.f32.mrb[0].mxu0
  %v1424 = vadd.f32 %v1115, %v1423
  %v1425 = vpop.f32.mrb[0].mxu0
  %v1426 = vadd.f32 %v1120, %v1425
  %v1427 = vpop.f32.mrb[0].mxu0
  %v1428 = vadd.f32 %v1120, %v1427
  %1429 = vmatprep.mubr.bf16.mxu0 %v1205
  %1430 = vmatmul.mubr.bf16.gmra.mrb[0].mxu0 %v1204
  %v1431 = vpop.f32.mrb[0].mxu0
  %v1432 = vadd.f32 %v1125, %v1431
  %v1433 = vpop.f32.mrb[0].mxu0
  %v1434 = vadd.f32 %v1125, %v1433
  %v1435 = vpop.f32.mrb[0].mxu0
  %v1436 = vadd.f32 %v1130, %v1435
  %v1437 = vpop.f32.mrb[0].mxu0
  %v1438 = vadd.f32 %v1130, %v1437
  %1439 = vmatprep.mubr.bf16.mxu0 %v1209
  %1440 = vmatmul.mubr.bf16.gmra.mrb[0].mxu0 %v1208
  %v1441 = vpop.f32.mrb[0].mxu0
  %v1442 = vadd.f32 %v1135, %v1441
  %v1443 = vpop.f32.mrb[0].mxu0
  %v1444 = vadd.f32 %v1135, %v1443
  %v1445 = vpop.f32.mrb[0].mxu0
  %v1446 = vadd.f32 %v1140, %v1445
  %v1447 = vpop.f32.mrb[0].mxu0
  %v1448 = vadd.f32 %v1140, %v1447
  %1449 = vmatprep.mubr.bf16.mxu0 %v1213
  %1450 = vmatmul.mubr.bf16.gmra.mrb[0].mxu0 %v1212
  %v1451 = vpop.f32.mrb[0].mxu0
  %v1452 = vadd.f32 %v1145, %v1451
  %v1453 = vpop.f32.mrb[0].mxu0
  %v1454 = vadd.f32 %v1145, %v1453
  %v1455 = vpop.f32.mrb[0].mxu0
  %v1456 = vadd.f32 %v1150, %v1455
  %v1457 = vpop.f32.mrb[0].mxu0
  %v1458 = vadd.f32 %v1150, %v1457
  %1459 = vdwg.mxu0
  %1460 = vmatprep.subr.bf16.mxu0 %v761
  %1461 = vmatpush1.bf16.msra.mxu0 %v760
  %1462 = vmatprep.subr.bf16.mxu0 %v765
  %1463 = vmatpush1.bf16.msra.mxu0 %v764
  %1464 = vmatprep.subr.bf16.mxu0 %v769
  %1465 = vmatpush1.bf16.msra.mxu0 %v768
  %1466 = vmatprep.subr.bf16.mxu0 %v773
  %1467 = vmatpush1.bf16.msra.mxu0 %v772
  %1468 = vmatprep.subr.bf16.mxu0 %v918
  %1469 = vmatpush1.bf16.msra.mxu0 %v917
  %1470 = vmatprep.subr.bf16.mxu0 %v922
  %1471 = vmatpush1.bf16.msra.mxu0 %v921
  %1472 = vmatprep.subr.bf16.mxu0 %v926
  %1473 = vmatpush1.bf16.msra.mxu0 %v925
  %1474 = vmatprep.subr.bf16.mxu0 %v930
  %1475 = vmatpush1.bf16.msra.mxu0 %v929
  %1476 = vmatprep.subr.bf16.mxu0 %v1075
  %1477 = vmatpush1.bf16.msra.mxu0 %v1074
  %1478 = vmatprep.subr.bf16.mxu0 %v1079
  %1479 = vmatpush1.bf16.msra.mxu0 %v1078
  %1480 = vmatprep.subr.bf16.mxu0 %v1083
  %1481 = vmatpush1.bf16.msra.mxu0 %v1082
  %1482 = vmatprep.subr.bf16.mxu0 %v1087
  %1483 = vmatpush1.bf16.msra.mxu0 %v1086
  %1484 = vmatprep.subr.bf16.mxu0 0
  %1485 = vmatpush1.bf16.msra.mxu0 0
  %1486 = vmatprep.subr.bf16.mxu0 0
  %1487 = vmatpush1.bf16.msra.mxu0 0
  %1488 = vmatprep.subr.bf16.mxu0 0
  %1489 = vmatpush1.bf16.msra.mxu0 0
  %1490 = vmatprep.subr.bf16.mxu0 0
  %1491 = vmatpush1.bf16.msra.mxu0 0
  %1492 = vmatprep.mubr.bf16.mxu0 %v1230
  %1493 = vmatmul.mubr.bf16.gmra.mrb[0].mxu0 %v1202
  %v1494 = vpop.f32.mrb[0].mxu0
  %v1495 = vadd.f32 %v1422, %v1494
  %v1496 = vpop.f32.mrb[0].mxu0
  %v1497 = vadd.f32 %v1424, %v1496
  %v1498 = vpop.f32.mrb[0].mxu0
  %v1499 = vadd.f32 %v1426, %v1498
  %v1500 = vpop.f32.mrb[0].mxu0
  %v1501 = vadd.f32 %v1428, %v1500
  %1502 = vmatprep.mubr.bf16.mxu0 %v1233
  %1503 = vmatmul.mubr.bf16.gmra.mrb[0].mxu0 %v1206
  %v1504 = vpop.f32.mrb[0].mxu0
  %v1505 = vadd.f32 %v1432, %v1504
  %v1506 = vpop.f32.mrb[0].mxu0
  %v1507 = vadd.f32 %v1434, %v1506
  %v1508 = vpop.f32.mrb[0].mxu0
  %v1509 = vadd.f32 %v1436, %v1508
  %v1510 = vpop.f32.mrb[0].mxu0
  %v1511 = vadd.f32 %v1438, %v1510
  %1512 = vmatprep.mubr.bf16.mxu0 %v1236
  %1513 = vmatmul.mubr.bf16.gmra.mrb[0].mxu0 %v1210
  %v1514 = vpop.f32.mrb[0].mxu0
  %v1515 = vadd.f32 %v1442, %v1514
  %v1516 = vpop.f32.mrb[0].mxu0
  %v1517 = vadd.f32 %v1444, %v1516
  %v1518 = vpop.f32.mrb[0].mxu0
  %v1519 = vadd.f32 %v1446, %v1518
  %v1520 = vpop.f32.mrb[0].mxu0
  %v1521 = vadd.f32 %v1448, %v1520
  %1522 = vmatprep.mubr.bf16.mxu0 %v1239
  %1523 = vmatmul.mubr.bf16.gmra.mrb[0].mxu0 %v1214
  %v1524 = vpop.f32.mrb[0].mxu0
  %v1525 = vadd.f32 %v1452, %v1524
  %v1526 = vpop.f32.mrb[0].mxu0
  %v1527 = vadd.f32 %v1454, %v1526
  %v1528 = vpop.f32.mrb[0].mxu0
  %v1529 = vadd.f32 %v1456, %v1528
  %v1530 = vpop.f32.mrb[0].mxu0
  %v1531 = vadd.f32 %v1458, %v1530
  %1532 = vdwg.mxu0
  %v1533 = vmax.f32 %v1349, 0.0
  %v1534 = vmax.f32 %v1351, 0.0
  %v1535 = vmax.f32 %v1495, 0.0
  %v1536 = vmax.f32 %v1497, 0.0
  %v1537 = vmax.f32 %v1353, 0.0
  %v1538 = vmax.f32 %v1355, 0.0
  %v1539 = vmax.f32 %v1499, 0.0
  %v1540 = vmax.f32 %v1501, 0.0
  %v1541 = vmax.f32 %v1359, 0.0
  %v1542 = vmax.f32 %v1361, 0.0
  %v1543 = vmax.f32 %v1505, 0.0
  %v1544 = vmax.f32 %v1507, 0.0
  %v1545 = vmax.f32 %v1363, 0.0
  %v1546 = vmax.f32 %v1365, 0.0
  %v1547 = vmax.f32 %v1509, 0.0
  %v1548 = vmax.f32 %v1511, 0.0
  %v1549 = vmax.f32 %v1369, 0.0
  %v1550 = vmax.f32 %v1371, 0.0
  %v1551 = vmax.f32 %v1515, 0.0
  %v1552 = vmax.f32 %v1517, 0.0
  %v1553 = vmax.f32 %v1373, 0.0
  %v1554 = vmax.f32 %v1375, 0.0
  %v1555 = vmax.f32 %v1519, 0.0
  %v1556 = vmax.f32 %v1521, 0.0
  %v1557 = vmax.f32 %v1379, 0.0
  %v1558 = vmax.f32 %v1381, 0.0
  %v1559 = vmax.f32 %v1525, 0.0
  %v1560 = vmax.f32 %v1527, 0.0
  %v1561 = vmax.f32 %v1383, 0.0
  %v1562 = vmax.f32 %v1385, 0.0
  %v1563 = vmax.f32 %v1529, 0.0
  %v1564 = vmax.f32 %v1531, 0.0
  %1565 = vrot.lane.b32.xlu0 %v1533, 2
  %v1566 = vpop.permute.xlu0 %1565
  %1567 = vrot.lane.b32.xlu0 %v1537, 2
  %v1568 = vpop.permute.xlu0 %1567
  %1569 = vrot.lane.b32.xlu0 %v1541, 2
  %v1570 = vpop.permute.xlu0 %1569
  %1571 = vrot.lane.b32.xlu0 %v1545, 2
  %v1572 = vpop.permute.xlu0 %1571
  %1573 = vrot.lane.b32.xlu0 %v1549, 2
  %v1574 = vpop.permute.xlu0 %1573
  %1575 = vrot.lane.b32.xlu0 %v1553, 2
  %v1576 = vpop.permute.xlu0 %1575
  %1577 = vrot.lane.b32.xlu0 %v1557, 2
  %v1578 = vpop.permute.xlu0 %1577
  %1579 = vrot.lane.b32.xlu0 %v1561, 2
  %v1580 = vpop.permute.xlu0 %1579
  %1581 = vrot.lane.b32.xlu0 %v1534, 2
  %v1582 = vpop.permute.xlu0 %1581
  %1583 = vrot.lane.b32.xlu0 %v1538, 2
  %v1584 = vpop.permute.xlu0 %1583
  %1585 = vrot.lane.b32.xlu0 %v1542, 2
  %v1586 = vpop.permute.xlu0 %1585
  %1587 = vrot.lane.b32.xlu0 %v1546, 2
  %v1588 = vpop.permute.xlu0 %1587
  %1589 = vrot.lane.b32.xlu0 %v1550, 2
  %v1590 = vpop.permute.xlu0 %1589
  %1591 = vrot.lane.b32.xlu0 %v1554, 2
  %v1592 = vpop.permute.xlu0 %1591
  %1593 = vrot.lane.b32.xlu0 %v1558, 2
  %v1594 = vpop.permute.xlu0 %1593
  %1595 = vrot.lane.b32.xlu0 %v1562, 2
  %v1596 = vpop.permute.xlu0 %1595
  %1597 = vrot.lane.b32.xlu0 %v1535, 2
  %v1598 = vpop.permute.xlu0 %1597
  %1599 = vrot.lane.b32.xlu0 %v1539, 2
  %v1600 = vpop.permute.xlu0 %1599
  %1601 = vrot.lane.b32.xlu0 %v1543, 2
  %v1602 = vpop.permute.xlu0 %1601
  %1603 = vrot.lane.b32.xlu0 %v1547, 2
  %v1604 = vpop.permute.xlu0 %1603
  %1605 = vrot.lane.b32.xlu0 %v1551, 2
  %v1606 = vpop.permute.xlu0 %1605
  %1607 = vrot.lane.b32.xlu0 %v1555, 2
  %v1608 = vpop.permute.xlu0 %1607
  %1609 = vrot.lane.b32.xlu0 %v1559, 2
  %v1610 = vpop.permute.xlu0 %1609
  %1611 = vrot.lane.b32.xlu0 %v1563, 2
  %v1612 = vpop.permute.xlu0 %1611
  %1613 = vrot.lane.b32.xlu0 %v1536, 2
  %v1614 = vpop.permute.xlu0 %1613
  %1615 = vrot.lane.b32.xlu0 %v1540, 2
  %v1616 = vpop.permute.xlu0 %1615
  %1617 = vrot.lane.b32.xlu0 %v1544, 2
  %v1618 = vpop.permute.xlu0 %1617
  %1619 = vrot.lane.b32.xlu0 %v1548, 2
  %v1620 = vpop.permute.xlu0 %1619
  %1621 = vrot.lane.b32.xlu0 %v1552, 2
  %v1622 = vpop.permute.xlu0 %1621
  %1623 = vrot.lane.b32.xlu0 %v1556, 2
  %v1624 = vpop.permute.xlu0 %1623
  %1625 = vrot.lane.b32.xlu0 %v1560, 2
  %v1626 = vpop.permute.xlu0 %1625
  %1627 = vrot.lane.b32.xlu0 %v1564, 2
  %v1628 = vpop.permute.xlu0 %1627
  %v1629 = vsel %vm351, %v1598, %v1614
  %v1630 = vsel %vm351, %v1600, %v1616
  %v1631 = vsel %vm351, %v1602, %v1618
  %v1632 = vsel %vm351, %v1604, %v1620
  %v1633 = vsel %vm351, %v1606, %v1622
  %v1634 = vsel %vm351, %v1608, %v1624
  %v1635 = vsel %vm351, %v1610, %v1626
  %v1636 = vsel %vm351, %v1612, %v1628
  %v1637 = vsel %vm351, %v1582, %v1598
  %v1638 = vsel %vm351, %v1584, %v1600
  %v1639 = vsel %vm351, %v1586, %v1602
  %v1640 = vsel %vm351, %v1588, %v1604
  %v1641 = vsel %vm351, %v1590, %v1606
  %v1642 = vsel %vm351, %v1592, %v1608
  %v1643 = vsel %vm351, %v1594, %v1610
  %v1644 = vsel %vm351, %v1596, %v1612
  %v1645 = vsel %vm351, %v1566, %v1582
  %v1646 = vsel %vm351, %v1568, %v1584
  %v1647 = vsel %vm351, %v1570, %v1586
  %v1648 = vsel %vm351, %v1572, %v1588
  %v1649 = vsel %vm351, %v1574, %v1590
  %v1650 = vsel %vm351, %v1576, %v1592
  %v1651 = vsel %vm351, %v1578, %v1594
  %v1652 = vsel %vm351, %v1580, %v1596
  %v1653 = vsel %vm351, %v1614, %v1566
  %v1654 = vsel %vm351, %v1616, %v1568
  %v1655 = vsel %vm351, %v1618, %v1570
  %v1656 = vsel %vm351, %v1620, %v1572
  %v1657 = vsel %vm351, %v1622, %v1574
  %v1658 = vsel %vm351, %v1624, %v1576
  %v1659 = vsel %vm351, %v1626, %v1578
  %v1660 = vsel %vm351, %v1628, %v1580
  %v1661 = vsel %vm392, %v1653, 0.0
  %v1662 = vsel %vm393, %v1645, 0.0
  %v1663 = vsel %vm394, %v1637, 0.0
  %v1664 = vsel %vm395, %v1629, 0.0
  %v1665 = vsel %vm392, %v1654, 0.0
  %v1666 = vsel %vm393, %v1646, 0.0
  %v1667 = vsel %vm394, %v1638, 0.0
  %v1668 = vsel %vm395, %v1630, 0.0
  %v1669 = vsel %vm392, %v1655, 0.0
  %v1670 = vsel %vm393, %v1647, 0.0
  %v1671 = vsel %vm394, %v1639, 0.0
  %v1672 = vsel %vm395, %v1631, 0.0
  %v1673 = vsel %vm392, %v1656, 0.0
  %v1674 = vsel %vm393, %v1648, 0.0
  %v1675 = vsel %vm394, %v1640, 0.0
  %v1676 = vsel %vm395, %v1632, 0.0
  %v1677 = vsel %vm392, %v1657, 0.0
  %v1678 = vsel %vm393, %v1649, 0.0
  %v1679 = vsel %vm394, %v1641, 0.0
  %v1680 = vsel %vm395, %v1633, 0.0
  %v1681 = vsel %vm392, %v1658, 0.0
  %v1682 = vsel %vm393, %v1650, 0.0
  %v1683 = vsel %vm394, %v1642, 0.0
  %v1684 = vsel %vm395, %v1634, 0.0
  %v1685 = vsel %vm392, %v1659, 0.0
  %v1686 = vsel %vm393, %v1651, 0.0
  %v1687 = vsel %vm394, %v1643, 0.0
  %v1688 = vsel %vm395, %v1635, 0.0
  %v1689 = vsel %vm392, %v1660, 0.0
  %v1690 = vsel %vm393, %v1652, 0.0
  %v1691 = vsel %vm394, %v1644, 0.0
  %v1692 = vsel %vm395, %v1636, 0.0
  %v1693 = vpack.c.bf16 %v1665, %v1661
  %v1694 = vpack.c.bf16 %v1666, %v1662
  %v1695 = vpack.c.bf16 %v1667, %v1663
  %v1696 = vpack.c.bf16 %v1668, %v1664
  %v1697 = vpack.c.bf16 %v1673, %v1669
  %v1698 = vpack.c.bf16 %v1674, %v1670
  %v1699 = vpack.c.bf16 %v1675, %v1671
  %v1700 = vpack.c.bf16 %v1676, %v1672
  %v1701 = vpack.c.bf16 %v1681, %v1677
  %v1702 = vpack.c.bf16 %v1682, %v1678
  %v1703 = vpack.c.bf16 %v1683, %v1679
  %v1704 = vpack.c.bf16 %v1684, %v1680
  %v1705 = vpack.c.bf16 %v1689, %v1685
  %v1706 = vpack.c.bf16 %v1690, %v1686
  %v1707 = vpack.c.bf16 %v1691, %v1687
  %v1708 = vpack.c.bf16 %v1692, %v1688
  %1709 = vrot.lane.b32.xlu0 %v1533, 1
  %v1710 = vpop.permute.xlu0 %1709
  %1711 = vrot.lane.b32.xlu0 %v1537, 1
  %v1712 = vpop.permute.xlu0 %1711
  %1713 = vrot.lane.b32.xlu0 %v1541, 1
  %v1714 = vpop.permute.xlu0 %1713
  %1715 = vrot.lane.b32.xlu0 %v1545, 1
  %v1716 = vpop.permute.xlu0 %1715
  %1717 = vrot.lane.b32.xlu0 %v1549, 1
  %v1718 = vpop.permute.xlu0 %1717
  %1719 = vrot.lane.b32.xlu0 %v1553, 1
  %v1720 = vpop.permute.xlu0 %1719
  %1721 = vrot.lane.b32.xlu0 %v1557, 1
  %v1722 = vpop.permute.xlu0 %1721
  %1723 = vrot.lane.b32.xlu0 %v1561, 1
  %v1724 = vpop.permute.xlu0 %1723
  %1725 = vrot.lane.b32.xlu0 %v1534, 1
  %v1726 = vpop.permute.xlu0 %1725
  %1727 = vrot.lane.b32.xlu0 %v1538, 1
  %v1728 = vpop.permute.xlu0 %1727
  %1729 = vrot.lane.b32.xlu0 %v1542, 1
  %v1730 = vpop.permute.xlu0 %1729
  %1731 = vrot.lane.b32.xlu0 %v1546, 1
  %v1732 = vpop.permute.xlu0 %1731
  %1733 = vrot.lane.b32.xlu0 %v1550, 1
  %v1734 = vpop.permute.xlu0 %1733
  %1735 = vrot.lane.b32.xlu0 %v1554, 1
  %v1736 = vpop.permute.xlu0 %1735
  %1737 = vrot.lane.b32.xlu0 %v1558, 1
  %v1738 = vpop.permute.xlu0 %1737
  %1739 = vrot.lane.b32.xlu0 %v1562, 1
  %v1740 = vpop.permute.xlu0 %1739
  %1741 = vrot.lane.b32.xlu0 %v1535, 1
  %v1742 = vpop.permute.xlu0 %1741
  %1743 = vrot.lane.b32.xlu0 %v1539, 1
  %v1744 = vpop.permute.xlu0 %1743
  %1745 = vrot.lane.b32.xlu0 %v1543, 1
  %v1746 = vpop.permute.xlu0 %1745
  %1747 = vrot.lane.b32.xlu0 %v1547, 1
  %v1748 = vpop.permute.xlu0 %1747
  %1749 = vrot.lane.b32.xlu0 %v1551, 1
  %v1750 = vpop.permute.xlu0 %1749
  %1751 = vrot.lane.b32.xlu0 %v1555, 1
  %v1752 = vpop.permute.xlu0 %1751
  %1753 = vrot.lane.b32.xlu0 %v1559, 1
  %v1754 = vpop.permute.xlu0 %1753
  %1755 = vrot.lane.b32.xlu0 %v1563, 1
  %v1756 = vpop.permute.xlu0 %1755
  %1757 = vrot.lane.b32.xlu0 %v1536, 1
  %v1758 = vpop.permute.xlu0 %1757
  %1759 = vrot.lane.b32.xlu0 %v1540, 1
  %v1760 = vpop.permute.xlu0 %1759
  %1761 = vrot.lane.b32.xlu0 %v1544, 1
  %v1762 = vpop.permute.xlu0 %1761
  %1763 = vrot.lane.b32.xlu0 %v1548, 1
  %v1764 = vpop.permute.xlu0 %1763
  %1765 = vrot.lane.b32.xlu0 %v1552, 1
  %v1766 = vpop.permute.xlu0 %1765
  %1767 = vrot.lane.b32.xlu0 %v1556, 1
  %v1768 = vpop.permute.xlu0 %1767
  %1769 = vrot.lane.b32.xlu0 %v1560, 1
  %v1770 = vpop.permute.xlu0 %1769
  %1771 = vrot.lane.b32.xlu0 %v1564, 1
  %v1772 = vpop.permute.xlu0 %1771
  %v1773 = vsel %vm508, %v1742, %v1758
  %v1774 = vsel %vm508, %v1744, %v1760
  %v1775 = vsel %vm508, %v1746, %v1762
  %v1776 = vsel %vm508, %v1748, %v1764
  %v1777 = vsel %vm508, %v1750, %v1766
  %v1778 = vsel %vm508, %v1752, %v1768
  %v1779 = vsel %vm508, %v1754, %v1770
  %v1780 = vsel %vm508, %v1756, %v1772
  %v1781 = vsel %vm508, %v1726, %v1742
  %v1782 = vsel %vm508, %v1728, %v1744
  %v1783 = vsel %vm508, %v1730, %v1746
  %v1784 = vsel %vm508, %v1732, %v1748
  %v1785 = vsel %vm508, %v1734, %v1750
  %v1786 = vsel %vm508, %v1736, %v1752
  %v1787 = vsel %vm508, %v1738, %v1754
  %v1788 = vsel %vm508, %v1740, %v1756
  %v1789 = vsel %vm508, %v1710, %v1726
  %v1790 = vsel %vm508, %v1712, %v1728
  %v1791 = vsel %vm508, %v1714, %v1730
  %v1792 = vsel %vm508, %v1716, %v1732
  %v1793 = vsel %vm508, %v1718, %v1734
  %v1794 = vsel %vm508, %v1720, %v1736
  %v1795 = vsel %vm508, %v1722, %v1738
  %v1796 = vsel %vm508, %v1724, %v1740
  %v1797 = vsel %vm508, %v1758, %v1710
  %v1798 = vsel %vm508, %v1760, %v1712
  %v1799 = vsel %vm508, %v1762, %v1714
  %v1800 = vsel %vm508, %v1764, %v1716
  %v1801 = vsel %vm508, %v1766, %v1718
  %v1802 = vsel %vm508, %v1768, %v1720
  %v1803 = vsel %vm508, %v1770, %v1722
  %v1804 = vsel %vm508, %v1772, %v1724
  %v1805 = vsel %vm549, %v1797, 0.0
  %v1806 = vsel %vm550, %v1789, 0.0
  %v1807 = vsel %vm551, %v1781, 0.0
  %v1808 = vsel %vm552, %v1773, 0.0
  %v1809 = vsel %vm549, %v1798, 0.0
  %v1810 = vsel %vm550, %v1790, 0.0
  %v1811 = vsel %vm551, %v1782, 0.0
  %v1812 = vsel %vm552, %v1774, 0.0
  %v1813 = vsel %vm549, %v1799, 0.0
  %v1814 = vsel %vm550, %v1791, 0.0
  %v1815 = vsel %vm551, %v1783, 0.0
  %v1816 = vsel %vm552, %v1775, 0.0
  %v1817 = vsel %vm549, %v1800, 0.0
  %v1818 = vsel %vm550, %v1792, 0.0
  %v1819 = vsel %vm551, %v1784, 0.0
  %v1820 = vsel %vm552, %v1776, 0.0
  %v1821 = vsel %vm549, %v1801, 0.0
  %v1822 = vsel %vm550, %v1793, 0.0
  %v1823 = vsel %vm551, %v1785, 0.0
  %v1824 = vsel %vm552, %v1777, 0.0
  %v1825 = vsel %vm549, %v1802, 0.0
  %v1826 = vsel %vm550, %v1794, 0.0
  %v1827 = vsel %vm551, %v1786, 0.0
  %v1828 = vsel %vm552, %v1778, 0.0
  %v1829 = vsel %vm549, %v1803, 0.0
  %v1830 = vsel %vm550, %v1795, 0.0
  %v1831 = vsel %vm551, %v1787, 0.0
  %v1832 = vsel %vm552, %v1779, 0.0
  %v1833 = vsel %vm549, %v1804, 0.0
  %v1834 = vsel %vm550, %v1796, 0.0
  %v1835 = vsel %vm551, %v1788, 0.0
  %v1836 = vsel %vm552, %v1780, 0.0
  %v1837 = vpack.c.bf16 %v1809, %v1805
  %v1838 = vpack.c.bf16 %v1810, %v1806
  %v1839 = vpack.c.bf16 %v1811, %v1807
  %v1840 = vpack.c.bf16 %v1812, %v1808
  %v1841 = vpack.c.bf16 %v1817, %v1813
  %v1842 = vpack.c.bf16 %v1818, %v1814
  %v1843 = vpack.c.bf16 %v1819, %v1815
  %v1844 = vpack.c.bf16 %v1820, %v1816
  %v1845 = vpack.c.bf16 %v1825, %v1821
  %v1846 = vpack.c.bf16 %v1826, %v1822
  %v1847 = vpack.c.bf16 %v1827, %v1823
  %v1848 = vpack.c.bf16 %v1828, %v1824
  %v1849 = vpack.c.bf16 %v1833, %v1829
  %v1850 = vpack.c.bf16 %v1834, %v1830
  %v1851 = vpack.c.bf16 %v1835, %v1831
  %v1852 = vpack.c.bf16 %v1836, %v1832
  %v1853 = vpack.c.bf16 %v1537, %v1533
  %v1854 = vpack.c.bf16 %v1538, %v1534
  %v1855 = vpack.c.bf16 %v1539, %v1535
  %v1856 = vpack.c.bf16 %v1540, %v1536
  %v1857 = vpack.c.bf16 %v1545, %v1541
  %v1858 = vpack.c.bf16 %v1546, %v1542
  %v1859 = vpack.c.bf16 %v1547, %v1543
  %v1860 = vpack.c.bf16 %v1548, %v1544
  %v1861 = vpack.c.bf16 %v1553, %v1549
  %v1862 = vpack.c.bf16 %v1554, %v1550
  %v1863 = vpack.c.bf16 %v1555, %v1551
  %v1864 = vpack.c.bf16 %v1556, %v1552
  %v1865 = vpack.c.bf16 %v1561, %v1557
  %v1866 = vpack.c.bf16 %v1562, %v1558
  %v1867 = vpack.c.bf16 %v1563, %v1559
  %v1868 = vpack.c.bf16 %v1564, %v1560
  %1869 = vrot.lane.b32.xlu0 %v1533, 127
  %v1870 = vpop.permute.xlu0 %1869
  %1871 = vrot.lane.b32.xlu0 %v1537, 127
  %v1872 = vpop.permute.xlu0 %1871
  %1873 = vrot.lane.b32.xlu0 %v1541, 127
  %v1874 = vpop.permute.xlu0 %1873
  %1875 = vrot.lane.b32.xlu0 %v1545, 127
  %v1876 = vpop.permute.xlu0 %1875
  %1877 = vrot.lane.b32.xlu0 %v1549, 127
  %v1878 = vpop.permute.xlu0 %1877
  %1879 = vrot.lane.b32.xlu0 %v1553, 127
  %v1880 = vpop.permute.xlu0 %1879
  %1881 = vrot.lane.b32.xlu0 %v1557, 127
  %v1882 = vpop.permute.xlu0 %1881
  %1883 = vrot.lane.b32.xlu0 %v1561, 127
  %v1884 = vpop.permute.xlu0 %1883
  %1885 = vrot.lane.b32.xlu0 %v1534, 127
  %v1886 = vpop.permute.xlu0 %1885
  %1887 = vrot.lane.b32.xlu0 %v1538, 127
  %v1888 = vpop.permute.xlu0 %1887
  %1889 = vrot.lane.b32.xlu0 %v1542, 127
  %v1890 = vpop.permute.xlu0 %1889
  %1891 = vrot.lane.b32.xlu0 %v1546, 127
  %v1892 = vpop.permute.xlu0 %1891
  %1893 = vrot.lane.b32.xlu0 %v1550, 127
  %v1894 = vpop.permute.xlu0 %1893
  %1895 = vrot.lane.b32.xlu0 %v1554, 127
  %v1896 = vpop.permute.xlu0 %1895
  %1897 = vrot.lane.b32.xlu0 %v1558, 127
  %v1898 = vpop.permute.xlu0 %1897
  %1899 = vrot.lane.b32.xlu0 %v1562, 127
  %v1900 = vpop.permute.xlu0 %1899
  %1901 = vrot.lane.b32.xlu0 %v1535, 127
  %v1902 = vpop.permute.xlu0 %1901
  %1903 = vrot.lane.b32.xlu0 %v1539, 127
  %v1904 = vpop.permute.xlu0 %1903
  %1905 = vrot.lane.b32.xlu0 %v1543, 127
  %v1906 = vpop.permute.xlu0 %1905
  %1907 = vrot.lane.b32.xlu0 %v1547, 127
  %v1908 = vpop.permute.xlu0 %1907
  %1909 = vrot.lane.b32.xlu0 %v1551, 127
  %v1910 = vpop.permute.xlu0 %1909
  %1911 = vrot.lane.b32.xlu0 %v1555, 127
  %v1912 = vpop.permute.xlu0 %1911
  %1913 = vrot.lane.b32.xlu0 %v1559, 127
  %v1914 = vpop.permute.xlu0 %1913
  %1915 = vrot.lane.b32.xlu0 %v1563, 127
  %v1916 = vpop.permute.xlu0 %1915
  %1917 = vrot.lane.b32.xlu0 %v1536, 127
  %v1918 = vpop.permute.xlu0 %1917
  %1919 = vrot.lane.b32.xlu0 %v1540, 127
  %v1920 = vpop.permute.xlu0 %1919
  %1921 = vrot.lane.b32.xlu0 %v1544, 127
  %v1922 = vpop.permute.xlu0 %1921
  %1923 = vrot.lane.b32.xlu0 %v1548, 127
  %v1924 = vpop.permute.xlu0 %1923
  %1925 = vrot.lane.b32.xlu0 %v1552, 127
  %v1926 = vpop.permute.xlu0 %1925
  %1927 = vrot.lane.b32.xlu0 %v1556, 127
  %v1928 = vpop.permute.xlu0 %1927
  %1929 = vrot.lane.b32.xlu0 %v1560, 127
  %v1930 = vpop.permute.xlu0 %1929
  %1931 = vrot.lane.b32.xlu0 %v1564, 127
  %v1932 = vpop.permute.xlu0 %1931
  %v1933 = vsel %vm681, %v1902, %v1918
  %v1934 = vsel %vm681, %v1904, %v1920
  %v1935 = vsel %vm681, %v1906, %v1922
  %v1936 = vsel %vm681, %v1908, %v1924
  %v1937 = vsel %vm681, %v1910, %v1926
  %v1938 = vsel %vm681, %v1912, %v1928
  %v1939 = vsel %vm681, %v1914, %v1930
  %v1940 = vsel %vm681, %v1916, %v1932
  %v1941 = vsel %vm681, %v1886, %v1902
  %v1942 = vsel %vm681, %v1888, %v1904
  %v1943 = vsel %vm681, %v1890, %v1906
  %v1944 = vsel %vm681, %v1892, %v1908
  %v1945 = vsel %vm681, %v1894, %v1910
  %v1946 = vsel %vm681, %v1896, %v1912
  %v1947 = vsel %vm681, %v1898, %v1914
  %v1948 = vsel %vm681, %v1900, %v1916
  %v1949 = vsel %vm681, %v1870, %v1886
  %v1950 = vsel %vm681, %v1872, %v1888
  %v1951 = vsel %vm681, %v1874, %v1890
  %v1952 = vsel %vm681, %v1876, %v1892
  %v1953 = vsel %vm681, %v1878, %v1894
  %v1954 = vsel %vm681, %v1880, %v1896
  %v1955 = vsel %vm681, %v1882, %v1898
  %v1956 = vsel %vm681, %v1884, %v1900
  %v1957 = vsel %vm681, %v1918, %v1870
  %v1958 = vsel %vm681, %v1920, %v1872
  %v1959 = vsel %vm681, %v1922, %v1874
  %v1960 = vsel %vm681, %v1924, %v1876
  %v1961 = vsel %vm681, %v1926, %v1878
  %v1962 = vsel %vm681, %v1928, %v1880
  %v1963 = vsel %vm681, %v1930, %v1882
  %v1964 = vsel %vm681, %v1932, %v1884
  %v1965 = vsel %vm722, %v1949, 0.0
  %v1966 = vsel %vm723, %v1941, 0.0
  %v1967 = vsel %vm724, %v1933, 0.0
  %v1968 = vsel %vm725, %v1957, 0.0
  %v1969 = vsel %vm722, %v1950, 0.0
  %v1970 = vsel %vm723, %v1942, 0.0
  %v1971 = vsel %vm724, %v1934, 0.0
  %v1972 = vsel %vm725, %v1958, 0.0
  %v1973 = vsel %vm722, %v1951, 0.0
  %v1974 = vsel %vm723, %v1943, 0.0
  %v1975 = vsel %vm724, %v1935, 0.0
  %v1976 = vsel %vm725, %v1959, 0.0
  %v1977 = vsel %vm722, %v1952, 0.0
  %v1978 = vsel %vm723, %v1944, 0.0
  %v1979 = vsel %vm724, %v1936, 0.0
  %v1980 = vsel %vm725, %v1960, 0.0
  %v1981 = vsel %vm722, %v1953, 0.0
  %v1982 = vsel %vm723, %v1945, 0.0
  %v1983 = vsel %vm724, %v1937, 0.0
  %v1984 = vsel %vm725, %v1961, 0.0
  %v1985 = vsel %vm722, %v1954, 0.0
  %v1986 = vsel %vm723, %v1946, 0.0
  %v1987 = vsel %vm724, %v1938, 0.0
  %v1988 = vsel %vm725, %v1962, 0.0
  %v1989 = vsel %vm722, %v1955, 0.0
  %v1990 = vsel %vm723, %v1947, 0.0
  %v1991 = vsel %vm724, %v1939, 0.0
  %v1992 = vsel %vm725, %v1963, 0.0
  %v1993 = vsel %vm722, %v1956, 0.0
  %v1994 = vsel %vm723, %v1948, 0.0
  %v1995 = vsel %vm724, %v1940, 0.0
  %v1996 = vsel %vm725, %v1964, 0.0
  %v1997 = vpack.c.bf16 %v1969, %v1965
  %v1998 = vpack.c.bf16 %v1970, %v1966
  %v1999 = vpack.c.bf16 %v1971, %v1967
  %v2000 = vpack.c.bf16 %v1972, %v1968
  %v2001 = vpack.c.bf16 %v1977, %v1973
  %v2002 = vpack.c.bf16 %v1978, %v1974
  %v2003 = vpack.c.bf16 %v1979, %v1975
  %v2004 = vpack.c.bf16 %v1980, %v1976
  %v2005 = vpack.c.bf16 %v1985, %v1981
  %v2006 = vpack.c.bf16 %v1986, %v1982
  %v2007 = vpack.c.bf16 %v1987, %v1983
  %v2008 = vpack.c.bf16 %v1988, %v1984
  %v2009 = vpack.c.bf16 %v1993, %v1989
  %v2010 = vpack.c.bf16 %v1994, %v1990
  %v2011 = vpack.c.bf16 %v1995, %v1991
  %v2012 = vpack.c.bf16 %v1996, %v1992
  %2013 = vrot.lane.b32.xlu0 %v1533, 126
  %v2014 = vpop.permute.xlu0 %2013
  %2015 = vrot.lane.b32.xlu0 %v1537, 126
  %v2016 = vpop.permute.xlu0 %2015
  %2017 = vrot.lane.b32.xlu0 %v1541, 126
  %v2018 = vpop.permute.xlu0 %2017
  %2019 = vrot.lane.b32.xlu0 %v1545, 126
  %v2020 = vpop.permute.xlu0 %2019
  %2021 = vrot.lane.b32.xlu0 %v1549, 126
  %v2022 = vpop.permute.xlu0 %2021
  %2023 = vrot.lane.b32.xlu0 %v1553, 126
  %v2024 = vpop.permute.xlu0 %2023
  %2025 = vrot.lane.b32.xlu0 %v1557, 126
  %v2026 = vpop.permute.xlu0 %2025
  %2027 = vrot.lane.b32.xlu0 %v1561, 126
  %v2028 = vpop.permute.xlu0 %2027
  %2029 = vrot.lane.b32.xlu0 %v1534, 126
  %v2030 = vpop.permute.xlu0 %2029
  %2031 = vrot.lane.b32.xlu0 %v1538, 126
  %v2032 = vpop.permute.xlu0 %2031
  %2033 = vrot.lane.b32.xlu0 %v1542, 126
  %v2034 = vpop.permute.xlu0 %2033
  %2035 = vrot.lane.b32.xlu0 %v1546, 126
  %v2036 = vpop.permute.xlu0 %2035
  %2037 = vrot.lane.b32.xlu0 %v1550, 126
  %v2038 = vpop.permute.xlu0 %2037
  %2039 = vrot.lane.b32.xlu0 %v1554, 126
  %v2040 = vpop.permute.xlu0 %2039
  %2041 = vrot.lane.b32.xlu0 %v1558, 126
  %v2042 = vpop.permute.xlu0 %2041
  %2043 = vrot.lane.b32.xlu0 %v1562, 126
  %v2044 = vpop.permute.xlu0 %2043
  %2045 = vrot.lane.b32.xlu0 %v1535, 126
  %v2046 = vpop.permute.xlu0 %2045
  %2047 = vrot.lane.b32.xlu0 %v1539, 126
  %v2048 = vpop.permute.xlu0 %2047
  %2049 = vrot.lane.b32.xlu0 %v1543, 126
  %v2050 = vpop.permute.xlu0 %2049
  %2051 = vrot.lane.b32.xlu0 %v1547, 126
  %v2052 = vpop.permute.xlu0 %2051
  %2053 = vrot.lane.b32.xlu0 %v1551, 126
  %v2054 = vpop.permute.xlu0 %2053
  %2055 = vrot.lane.b32.xlu0 %v1555, 126
  %v2056 = vpop.permute.xlu0 %2055
  %2057 = vrot.lane.b32.xlu0 %v1559, 126
  %v2058 = vpop.permute.xlu0 %2057
  %2059 = vrot.lane.b32.xlu0 %v1563, 126
  %v2060 = vpop.permute.xlu0 %2059
  %2061 = vrot.lane.b32.xlu0 %v1536, 126
  %v2062 = vpop.permute.xlu0 %2061
  %2063 = vrot.lane.b32.xlu0 %v1540, 126
  %v2064 = vpop.permute.xlu0 %2063
  %2065 = vrot.lane.b32.xlu0 %v1544, 126
  %v2066 = vpop.permute.xlu0 %2065
  %2067 = vrot.lane.b32.xlu0 %v1548, 126
  %v2068 = vpop.permute.xlu0 %2067
  %2069 = vrot.lane.b32.xlu0 %v1552, 126
  %v2070 = vpop.permute.xlu0 %2069
  %2071 = vrot.lane.b32.xlu0 %v1556, 126
  %v2072 = vpop.permute.xlu0 %2071
  %2073 = vrot.lane.b32.xlu0 %v1560, 126
  %v2074 = vpop.permute.xlu0 %2073
  %2075 = vrot.lane.b32.xlu0 %v1564, 126
  %v2076 = vpop.permute.xlu0 %2075
  %v2077 = vsel %vm838, %v2046, %v2062
  %v2078 = vsel %vm838, %v2048, %v2064
  %v2079 = vsel %vm838, %v2050, %v2066
  %v2080 = vsel %vm838, %v2052, %v2068
  %v2081 = vsel %vm838, %v2054, %v2070
  %v2082 = vsel %vm838, %v2056, %v2072
  %v2083 = vsel %vm838, %v2058, %v2074
  %v2084 = vsel %vm838, %v2060, %v2076
  %v2085 = vsel %vm838, %v2030, %v2046
  %v2086 = vsel %vm838, %v2032, %v2048
  %v2087 = vsel %vm838, %v2034, %v2050
  %v2088 = vsel %vm838, %v2036, %v2052
  %v2089 = vsel %vm838, %v2038, %v2054
  %v2090 = vsel %vm838, %v2040, %v2056
  %v2091 = vsel %vm838, %v2042, %v2058
  %v2092 = vsel %vm838, %v2044, %v2060
  %v2093 = vsel %vm838, %v2014, %v2030
  %v2094 = vsel %vm838, %v2016, %v2032
  %v2095 = vsel %vm838, %v2018, %v2034
  %v2096 = vsel %vm838, %v2020, %v2036
  %v2097 = vsel %vm838, %v2022, %v2038
  %v2098 = vsel %vm838, %v2024, %v2040
  %v2099 = vsel %vm838, %v2026, %v2042
  %v2100 = vsel %vm838, %v2028, %v2044
  %v2101 = vsel %vm838, %v2062, %v2014
  %v2102 = vsel %vm838, %v2064, %v2016
  %v2103 = vsel %vm838, %v2066, %v2018
  %v2104 = vsel %vm838, %v2068, %v2020
  %v2105 = vsel %vm838, %v2070, %v2022
  %v2106 = vsel %vm838, %v2072, %v2024
  %v2107 = vsel %vm838, %v2074, %v2026
  %v2108 = vsel %vm838, %v2076, %v2028
  %v2109 = vsel %vm879, %v2093, 0.0
  %v2110 = vsel %vm880, %v2085, 0.0
  %v2111 = vsel %vm881, %v2077, 0.0
  %v2112 = vsel %vm882, %v2101, 0.0
  %v2113 = vsel %vm879, %v2094, 0.0
  %v2114 = vsel %vm880, %v2086, 0.0
  %v2115 = vsel %vm881, %v2078, 0.0
  %v2116 = vsel %vm882, %v2102, 0.0
  %v2117 = vsel %vm879, %v2095, 0.0
  %v2118 = vsel %vm880, %v2087, 0.0
  %v2119 = vsel %vm881, %v2079, 0.0
  %v2120 = vsel %vm882, %v2103, 0.0
  %v2121 = vsel %vm879, %v2096, 0.0
  %v2122 = vsel %vm880, %v2088, 0.0
  %v2123 = vsel %vm881, %v2080, 0.0
  %v2124 = vsel %vm882, %v2104, 0.0
  %v2125 = vsel %vm879, %v2097, 0.0
  %v2126 = vsel %vm880, %v2089, 0.0
  %v2127 = vsel %vm881, %v2081, 0.0
  %v2128 = vsel %vm882, %v2105, 0.0
  %v2129 = vsel %vm879, %v2098, 0.0
  %v2130 = vsel %vm880, %v2090, 0.0
  %v2131 = vsel %vm881, %v2082, 0.0
  %v2132 = vsel %vm882, %v2106, 0.0
  %v2133 = vsel %vm879, %v2099, 0.0
  %v2134 = vsel %vm880, %v2091, 0.0
  %v2135 = vsel %vm881, %v2083, 0.0
  %v2136 = vsel %vm882, %v2107, 0.0
  %v2137 = vsel %vm879, %v2100, 0.0
  %v2138 = vsel %vm880, %v2092, 0.0
  %v2139 = vsel %vm881, %v2084, 0.0
  %v2140 = vsel %vm882, %v2108, 0.0
  %v2141 = vpack.c.bf16 %v2113, %v2109
  %v2142 = vpack.c.bf16 %v2114, %v2110
  %v2143 = vpack.c.bf16 %v2115, %v2111
  %v2144 = vpack.c.bf16 %v2116, %v2112
  %v2145 = vpack.c.bf16 %v2121, %v2117
  %v2146 = vpack.c.bf16 %v2122, %v2118
  %v2147 = vpack.c.bf16 %v2123, %v2119
  %v2148 = vpack.c.bf16 %v2124, %v2120
  %v2149 = vpack.c.bf16 %v2129, %v2125
  %v2150 = vpack.c.bf16 %v2130, %v2126
  %v2151 = vpack.c.bf16 %v2131, %v2127
  %v2152 = vpack.c.bf16 %v2132, %v2128
  %v2153 = vpack.c.bf16 %v2137, %v2133
  %v2154 = vpack.c.bf16 %v2138, %v2134
  %v2155 = vpack.c.bf16 %v2139, %v2135
  %v2156 = vpack.c.bf16 %v2140, %v2136
  %v2157 = vld [vmem:[%s3] sm:$0xff]
  %v2158 = vld [vmem:[%s3 + $0x8] sm:$0xf]
  %v2159 = vld [vmem:[%s3 + $0xc] sm:$0xff]
  %v2160 = vld [vmem:[%s3 + $0x14] sm:$0xf]
  %v2161 = vld [vmem:[%s3 + $0x18] sm:$0xff]
  %v2162 = vld [vmem:[%s3 + $0x20] sm:$0xf]
  %v2163 = vld [vmem:[%s3 + $0x24] sm:$0xff]
  %v2164 = vld [vmem:[%s3 + $0x2c] sm:$0xf]
  %v2165 = vld [vmem:[%s3 + $0x30] sm:$0xff]
  %v2166 = vld [vmem:[%s3 + $0x38] sm:$0xf]
  %v2167 = vld [vmem:[%s3 + $0x3c] sm:$0xff]
  %v2168 = vld [vmem:[%s3 + $0x44] sm:$0xf]
  %v2169 = vld [vmem:[%s3 + $0x48] sm:$0xff]
  %v2170 = vld [vmem:[%s3 + $0x50] sm:$0xf]
  %v2171 = vld [vmem:[%s3 + $0x54] sm:$0xff]
  %v2172 = vld [vmem:[%s3 + $0x5c] sm:$0xf]
  %v2173 = vld [vmem:[%s4] sm:$0xff]
  %v2174 = vld [vmem:[%s4 + $0x8] sm:$0xff]
  %v2175 = vld [vmem:[%s4 + $0x10] sm:$0xff]
  %v2176 = vld [vmem:[%s4 + $0x18] sm:$0xff]
  %v2177 = vld [vmem:[%s4 + $0x20] sm:$0xff]
  %v2178 = vld [vmem:[%s4 + $0x28] sm:$0xff]
  %v2179 = vld [vmem:[%s4 + $0x30] sm:$0xff]
  %v2180 = vld [vmem:[%s4 + $0x38] sm:$0xff]
  %2182 = vset.pattern.permute.xlu0 0
  %2183 = vperm.xlu0 %2182, %v2173
  %v2184 = vpop.permute.xlu0 %2183
  %2187 = vset.pattern.permute.xlu0 0
  %2188 = vperm.xlu0 %2187, %v2174
  %v2189 = vpop.permute.xlu0 %2188
  %2192 = vset.pattern.permute.xlu0 0
  %2193 = vperm.xlu0 %2192, %v2175
  %v2194 = vpop.permute.xlu0 %2193
  %2197 = vset.pattern.permute.xlu0 0
  %2198 = vperm.xlu0 %2197, %v2176
  %v2199 = vpop.permute.xlu0 %2198
  %2202 = vset.pattern.permute.xlu0 0
  %2203 = vperm.xlu0 %2202, %v2177
  %v2204 = vpop.permute.xlu0 %2203
  %2207 = vset.pattern.permute.xlu0 0
  %2208 = vperm.xlu0 %2207, %v2178
  %v2209 = vpop.permute.xlu0 %2208
  %2212 = vset.pattern.permute.xlu0 0
  %2213 = vperm.xlu0 %2212, %v2179
  %v2214 = vpop.permute.xlu0 %2213
  %2217 = vset.pattern.permute.xlu0 0
  %2218 = vperm.xlu0 %2217, %v2180
  %v2219 = vpop.permute.xlu0 %2218
  %v2237 = vunpack.c.l.b16 %v2157
  %v2238 = vunpack.c.h.b16 %v2157
  %v2239 = vunpack.c.l.b16 %v2158
  %v2240 = vunpack.c.l.b16 %v2159
  %v2241 = vunpack.c.h.b16 %v2159
  %v2242 = vunpack.c.l.b16 %v2160
  %v2243 = vunpack.c.l.b16 %v2161
  %v2244 = vunpack.c.h.b16 %v2161
  %v2245 = vunpack.c.l.b16 %v2162
  %v2246 = vunpack.c.l.b16 %v2163
  %v2247 = vunpack.c.h.b16 %v2163
  %v2248 = vunpack.c.l.b16 %v2164
  %v2249 = vunpack.c.l.b16 %v2165
  %v2250 = vunpack.c.h.b16 %v2165
  %v2251 = vunpack.c.l.b16 %v2166
  %v2252 = vunpack.c.l.b16 %v2167
  %v2253 = vunpack.c.h.b16 %v2167
  %v2254 = vunpack.c.l.b16 %v2168
  %v2255 = vunpack.c.l.b16 %v2169
  %v2256 = vunpack.c.h.b16 %v2169
  %v2257 = vunpack.c.l.b16 %v2170
  %v2258 = vunpack.c.l.b16 %v2171
  %v2259 = vunpack.c.h.b16 %v2171
  %v2260 = vunpack.c.l.b16 %v2172
  %v2261 = vpack.c.b16 %v2240, %v2237
  %v2262 = vpack.c.b16 %v2241, %v2238
  %v2263 = vpack.c.b16 %v2242, %v2239
  %v2264 = vpack.c.b16 %v2246, %v2243
  %v2265 = vpack.c.b16 %v2247, %v2244
  %v2266 = vpack.c.b16 %v2248, %v2245
  %v2267 = vpack.c.b16 %v2252, %v2249
  %v2268 = vpack.c.b16 %v2253, %v2250
  %v2269 = vpack.c.b16 %v2254, %v2251
  %v2270 = vpack.c.b16 %v2258, %v2255
  %v2271 = vpack.c.b16 %v2259, %v2256
  %v2272 = vpack.c.b16 %v2260, %v2257
  %v2282 = vsel %vm1228, %v2263, 0
  %v2285 = vsel %vm1228, %v2266, 0
  %v2288 = vsel %vm1228, %v2269, 0
  %v2291 = vsel %vm1228, %v2272, 0
  %2293 = vmatprep.subr.bf16.mxu0 %v1694
  %2294 = vmatpush1.bf16.msra.mxu0 %v1693
  %2295 = vmatprep.subr.bf16.mxu0 %v1698
  %2296 = vmatpush1.bf16.msra.mxu0 %v1697
  %2297 = vmatprep.subr.bf16.mxu0 %v1702
  %2298 = vmatpush1.bf16.msra.mxu0 %v1701
  %2299 = vmatprep.subr.bf16.mxu0 %v1706
  %2300 = vmatpush1.bf16.msra.mxu0 %v1705
  %2301 = vmatprep.subr.bf16.mxu0 %v1838
  %2302 = vmatpush1.bf16.msra.mxu0 %v1837
  %2303 = vmatprep.subr.bf16.mxu0 %v1842
  %2304 = vmatpush1.bf16.msra.mxu0 %v1841
  %2305 = vmatprep.subr.bf16.mxu0 %v1846
  %2306 = vmatpush1.bf16.msra.mxu0 %v1845
  %2307 = vmatprep.subr.bf16.mxu0 %v1850
  %2308 = vmatpush1.bf16.msra.mxu0 %v1849
  %2309 = vmatprep.subr.bf16.mxu0 %v1854
  %2310 = vmatpush1.bf16.msra.mxu0 %v1853
  %2311 = vmatprep.subr.bf16.mxu0 %v1858
  %2312 = vmatpush1.bf16.msra.mxu0 %v1857
  %2313 = vmatprep.subr.bf16.mxu0 %v1862
  %2314 = vmatpush1.bf16.msra.mxu0 %v1861
  %2315 = vmatprep.subr.bf16.mxu0 %v1866
  %2316 = vmatpush1.bf16.msra.mxu0 %v1865
  %2317 = vmatprep.subr.bf16.mxu0 %v1998
  %2318 = vmatpush1.bf16.msra.mxu0 %v1997
  %2319 = vmatprep.subr.bf16.mxu0 %v2002
  %2320 = vmatpush1.bf16.msra.mxu0 %v2001
  %2321 = vmatprep.subr.bf16.mxu0 %v2006
  %2322 = vmatpush1.bf16.msra.mxu0 %v2005
  %2323 = vmatprep.subr.bf16.mxu0 %v2010
  %2324 = vmatpush1.bf16.msra.mxu0 %v2009
  %2325 = vmatprep.mubr.bf16.mxu0 %v2262
  %2326 = vmatmul.mubr.bf16.gmra.mrb[0].mxu0 %v2261
  %v2327 = vpop.f32.mrb[0].mxu0
  %v2328 = vadd.f32 %v2184, %v2327
  %v2329 = vpop.f32.mrb[0].mxu0
  %v2330 = vadd.f32 %v2184, %v2329
  %v2331 = vpop.f32.mrb[0].mxu0
  %v2332 = vadd.f32 %v2189, %v2331
  %v2333 = vpop.f32.mrb[0].mxu0
  %v2334 = vadd.f32 %v2189, %v2333
  %2335 = vmatprep.mubr.bf16.mxu0 %v2265
  %2336 = vmatmul.mubr.bf16.gmra.mrb[0].mxu0 %v2264
  %v2337 = vpop.f32.mrb[0].mxu0
  %v2338 = vadd.f32 %v2194, %v2337
  %v2339 = vpop.f32.mrb[0].mxu0
  %v2340 = vadd.f32 %v2194, %v2339
  %v2341 = vpop.f32.mrb[0].mxu0
  %v2342 = vadd.f32 %v2199, %v2341
  %v2343 = vpop.f32.mrb[0].mxu0
  %v2344 = vadd.f32 %v2199, %v2343
  %2345 = vmatprep.mubr.bf16.mxu0 %v2268
  %2346 = vmatmul.mubr.bf16.gmra.mrb[0].mxu0 %v2267
  %v2347 = vpop.f32.mrb[0].mxu0
  %v2348 = vadd.f32 %v2204, %v2347
  %v2349 = vpop.f32.mrb[0].mxu0
  %v2350 = vadd.f32 %v2204, %v2349
  %v2351 = vpop.f32.mrb[0].mxu0
  %v2352 = vadd.f32 %v2209, %v2351
  %v2353 = vpop.f32.mrb[0].mxu0
  %v2354 = vadd.f32 %v2209, %v2353
  %2355 = vmatprep.mubr.bf16.mxu0 %v2271
  %2356 = vmatmul.mubr.bf16.gmra.mrb[0].mxu0 %v2270
  %v2357 = vpop.f32.mrb[0].mxu0
  %v2358 = vadd.f32 %v2214, %v2357
  %v2359 = vpop.f32.mrb[0].mxu0
  %v2360 = vadd.f32 %v2214, %v2359
  %v2361 = vpop.f32.mrb[0].mxu0
  %v2362 = vadd.f32 %v2219, %v2361
  %v2363 = vpop.f32.mrb[0].mxu0
  %v2364 = vadd.f32 %v2219, %v2363
  %2365 = vdwg.mxu0
  %2366 = vmatprep.subr.bf16.mxu0 %v2142
  %2367 = vmatpush1.bf16.msra.mxu0 %v2141
  %2368 = vmatprep.subr.bf16.mxu0 %v2146
  %2369 = vmatpush1.bf16.msra.mxu0 %v2145
  %2370 = vmatprep.subr.bf16.mxu0 %v2150
  %2371 = vmatpush1.bf16.msra.mxu0 %v2149
  %2372 = vmatprep.subr.bf16.mxu0 %v2154
  %2373 = vmatpush1.bf16.msra.mxu0 %v2153
  %2374 = vmatprep.subr.bf16.mxu0 0
  %2375 = vmatpush1.bf16.msra.mxu0 0
  %2376 = vmatprep.subr.bf16.mxu0 0
  %2377 = vmatpush1.bf16.msra.mxu0 0
  %2378 = vmatprep.subr.bf16.mxu0 0
  %2379 = vmatpush1.bf16.msra.mxu0 0
  %2380 = vmatprep.subr.bf16.mxu0 0
  %2381 = vmatpush1.bf16.msra.mxu0 0
  %2382 = vmatprep.subr.bf16.mxu0 0
  %2383 = vmatpush1.bf16.msra.mxu0 0
  %2384 = vmatprep.subr.bf16.mxu0 0
  %2385 = vmatpush1.bf16.msra.mxu0 0
  %2386 = vmatprep.subr.bf16.mxu0 0
  %2387 = vmatpush1.bf16.msra.mxu0 0
  %2388 = vmatprep.subr.bf16.mxu0 0
  %2389 = vmatpush1.bf16.msra.mxu0 0
  %2390 = vmatprep.subr.bf16.mxu0 0
  %2391 = vmatpush1.bf16.msra.mxu0 0
  %2392 = vmatprep.subr.bf16.mxu0 0
  %2393 = vmatpush1.bf16.msra.mxu0 0
  %2394 = vmatprep.subr.bf16.mxu0 0
  %2395 = vmatpush1.bf16.msra.mxu0 0
  %2396 = vmatprep.subr.bf16.mxu0 0
  %2397 = vmatpush1.bf16.msra.mxu0 0
  %2398 = vmatprep.mubr.bf16.mxu0 0
  %2399 = vmatmul.mubr.bf16.gmra.mrb[0].mxu0 %v2282
  %v2400 = vpop.f32.mrb[0].mxu0
  %v2401 = vadd.f32 %v2328, %v2400
  %v2402 = vpop.f32.mrb[0].mxu0
  %v2403 = vadd.f32 %v2330, %v2402
  %v2404 = vpop.f32.mrb[0].mxu0
  %v2405 = vadd.f32 %v2332, %v2404
  %v2406 = vpop.f32.mrb[0].mxu0
  %v2407 = vadd.f32 %v2334, %v2406
  %2408 = vmatprep.mubr.bf16.mxu0 0
  %2409 = vmatmul.mubr.bf16.gmra.mrb[0].mxu0 %v2285
  %v2410 = vpop.f32.mrb[0].mxu0
  %v2411 = vadd.f32 %v2338, %v2410
  %v2412 = vpop.f32.mrb[0].mxu0
  %v2413 = vadd.f32 %v2340, %v2412
  %v2414 = vpop.f32.mrb[0].mxu0
  %v2415 = vadd.f32 %v2342, %v2414
  %v2416 = vpop.f32.mrb[0].mxu0
  %v2417 = vadd.f32 %v2344, %v2416
  %2418 = vmatprep.mubr.bf16.mxu0 0
  %2419 = vmatmul.mubr.bf16.gmra.mrb[0].mxu0 %v2288
  %v2420 = vpop.f32.mrb[0].mxu0
  %v2421 = vadd.f32 %v2348, %v2420
  %v2422 = vpop.f32.mrb[0].mxu0
  %v2423 = vadd.f32 %v2350, %v2422
  %v2424 = vpop.f32.mrb[0].mxu0
  %v2425 = vadd.f32 %v2352, %v2424
  %v2426 = vpop.f32.mrb[0].mxu0
  %v2427 = vadd.f32 %v2354, %v2426
  %2428 = vmatprep.mubr.bf16.mxu0 0
  %2429 = vmatmul.mubr.bf16.gmra.mrb[0].mxu0 %v2291
  %v2430 = vpop.f32.mrb[0].mxu0
  %v2431 = vadd.f32 %v2358, %v2430
  %v2432 = vpop.f32.mrb[0].mxu0
  %v2433 = vadd.f32 %v2360, %v2432
  %v2434 = vpop.f32.mrb[0].mxu0
  %v2435 = vadd.f32 %v2362, %v2434
  %v2436 = vpop.f32.mrb[0].mxu0
  %v2437 = vadd.f32 %v2364, %v2436
  %2438 = vdwg.mxu0
  %2439 = vmatprep.subr.bf16.mxu0 %v1696
  %2440 = vmatpush1.bf16.msra.mxu0 %v1695
  %2441 = vmatprep.subr.bf16.mxu0 %v1700
  %2442 = vmatpush1.bf16.msra.mxu0 %v1699
  %2443 = vmatprep.subr.bf16.mxu0 %v1704
  %2444 = vmatpush1.bf16.msra.mxu0 %v1703
  %2445 = vmatprep.subr.bf16.mxu0 %v1708
  %2446 = vmatpush1.bf16.msra.mxu0 %v1707
  %2447 = vmatprep.subr.bf16.mxu0 %v1840
  %2448 = vmatpush1.bf16.msra.mxu0 %v1839
  %2449 = vmatprep.subr.bf16.mxu0 %v1844
  %2450 = vmatpush1.bf16.msra.mxu0 %v1843
  %2451 = vmatprep.subr.bf16.mxu0 %v1848
  %2452 = vmatpush1.bf16.msra.mxu0 %v1847
  %2453 = vmatprep.subr.bf16.mxu0 %v1852
  %2454 = vmatpush1.bf16.msra.mxu0 %v1851
  %2455 = vmatprep.subr.bf16.mxu0 %v1856
  %2456 = vmatpush1.bf16.msra.mxu0 %v1855
  %2457 = vmatprep.subr.bf16.mxu0 %v1860
  %2458 = vmatpush1.bf16.msra.mxu0 %v1859
  %2459 = vmatprep.subr.bf16.mxu0 %v1864
  %2460 = vmatpush1.bf16.msra.mxu0 %v1863
  %2461 = vmatprep.subr.bf16.mxu0 %v1868
  %2462 = vmatpush1.bf16.msra.mxu0 %v1867
  %2463 = vmatprep.subr.bf16.mxu0 %v2000
  %2464 = vmatpush1.bf16.msra.mxu0 %v1999
  %2465 = vmatprep.subr.bf16.mxu0 %v2004
  %2466 = vmatpush1.bf16.msra.mxu0 %v2003
  %2467 = vmatprep.subr.bf16.mxu0 %v2008
  %2468 = vmatpush1.bf16.msra.mxu0 %v2007
  %2469 = vmatprep.subr.bf16.mxu0 %v2012
  %2470 = vmatpush1.bf16.msra.mxu0 %v2011
  %2471 = vmatprep.mubr.bf16.mxu0 %v2262
  %2472 = vmatmul.mubr.bf16.gmra.mrb[0].mxu0 %v2261
  %v2473 = vpop.f32.mrb[0].mxu0
  %v2474 = vadd.f32 %v2184, %v2473
  %v2475 = vpop.f32.mrb[0].mxu0
  %v2476 = vadd.f32 %v2184, %v2475
  %v2477 = vpop.f32.mrb[0].mxu0
  %v2478 = vadd.f32 %v2189, %v2477
  %v2479 = vpop.f32.mrb[0].mxu0
  %v2480 = vadd.f32 %v2189, %v2479
  %2481 = vmatprep.mubr.bf16.mxu0 %v2265
  %2482 = vmatmul.mubr.bf16.gmra.mrb[0].mxu0 %v2264
  %v2483 = vpop.f32.mrb[0].mxu0
  %v2484 = vadd.f32 %v2194, %v2483
  %v2485 = vpop.f32.mrb[0].mxu0
  %v2486 = vadd.f32 %v2194, %v2485
  %v2487 = vpop.f32.mrb[0].mxu0
  %v2488 = vadd.f32 %v2199, %v2487
  %v2489 = vpop.f32.mrb[0].mxu0
  %v2490 = vadd.f32 %v2199, %v2489
  %2491 = vmatprep.mubr.bf16.mxu0 %v2268
  %2492 = vmatmul.mubr.bf16.gmra.mrb[0].mxu0 %v2267
  %v2493 = vpop.f32.mrb[0].mxu0
  %v2494 = vadd.f32 %v2204, %v2493
  %v2495 = vpop.f32.mrb[0].mxu0
  %v2496 = vadd.f32 %v2204, %v2495
  %v2497 = vpop.f32.mrb[0].mxu0
  %v2498 = vadd.f32 %v2209, %v2497
  %v2499 = vpop.f32.mrb[0].mxu0
  %v2500 = vadd.f32 %v2209, %v2499
  %2501 = vmatprep.mubr.bf16.mxu0 %v2271
  %2502 = vmatmul.mubr.bf16.gmra.mrb[0].mxu0 %v2270
  %v2503 = vpop.f32.mrb[0].mxu0
  %v2504 = vadd.f32 %v2214, %v2503
  %v2505 = vpop.f32.mrb[0].mxu0
  %v2506 = vadd.f32 %v2214, %v2505
  %v2507 = vpop.f32.mrb[0].mxu0
  %v2508 = vadd.f32 %v2219, %v2507
  %v2509 = vpop.f32.mrb[0].mxu0
  %v2510 = vadd.f32 %v2219, %v2509
  %2511 = vdwg.mxu0
  %2512 = vmatprep.subr.bf16.mxu0 %v2144
  %2513 = vmatpush1.bf16.msra.mxu0 %v2143
  %2514 = vmatprep.subr.bf16.mxu0 %v2148
  %2515 = vmatpush1.bf16.msra.mxu0 %v2147
  %2516 = vmatprep.subr.bf16.mxu0 %v2152
  %2517 = vmatpush1.bf16.msra.mxu0 %v2151
  %2518 = vmatprep.subr.bf16.mxu0 %v2156
  %2519 = vmatpush1.bf16.msra.mxu0 %v2155
  %2520 = vmatprep.subr.bf16.mxu0 0
  %2521 = vmatpush1.bf16.msra.mxu0 0
  %2522 = vmatprep.subr.bf16.mxu0 0
  %2523 = vmatpush1.bf16.msra.mxu0 0
  %2524 = vmatprep.subr.bf16.mxu0 0
  %2525 = vmatpush1.bf16.msra.mxu0 0
  %2526 = vmatprep.subr.bf16.mxu0 0
  %2527 = vmatpush1.bf16.msra.mxu0 0
  %2528 = vmatprep.subr.bf16.mxu0 0
  %2529 = vmatpush1.bf16.msra.mxu0 0
  %2530 = vmatprep.subr.bf16.mxu0 0
  %2531 = vmatpush1.bf16.msra.mxu0 0
  %2532 = vmatprep.subr.bf16.mxu0 0
  %2533 = vmatpush1.bf16.msra.mxu0 0
  %2534 = vmatprep.subr.bf16.mxu0 0
  %2535 = vmatpush1.bf16.msra.mxu0 0
  %2536 = vmatprep.subr.bf16.mxu0 0
  %2537 = vmatpush1.bf16.msra.mxu0 0
  %2538 = vmatprep.subr.bf16.mxu0 0
  %2539 = vmatpush1.bf16.msra.mxu0 0
  %2540 = vmatprep.subr.bf16.mxu0 0
  %2541 = vmatpush1.bf16.msra.mxu0 0
  %2542 = vmatprep.subr.bf16.mxu0 0
  %2543 = vmatpush1.bf16.msra.mxu0 0
  %2544 = vmatprep.mubr.bf16.mxu0 0
  %2545 = vmatmul.mubr.bf16.gmra.mrb[0].mxu0 %v2282
  %v2546 = vpop.f32.mrb[0].mxu0
  %v2547 = vadd.f32 %v2474, %v2546
  %v2548 = vpop.f32.mrb[0].mxu0
  %v2549 = vadd.f32 %v2476, %v2548
  %v2550 = vpop.f32.mrb[0].mxu0
  %v2551 = vadd.f32 %v2478, %v2550
  %v2552 = vpop.f32.mrb[0].mxu0
  %v2553 = vadd.f32 %v2480, %v2552
  %2554 = vmatprep.mubr.bf16.mxu0 0
  %2555 = vmatmul.mubr.bf16.gmra.mrb[0].mxu0 %v2285
  %v2556 = vpop.f32.mrb[0].mxu0
  %v2557 = vadd.f32 %v2484, %v2556
  %v2558 = vpop.f32.mrb[0].mxu0
  %v2559 = vadd.f32 %v2486, %v2558
  %v2560 = vpop.f32.mrb[0].mxu0
  %v2561 = vadd.f32 %v2488, %v2560
  %v2562 = vpop.f32.mrb[0].mxu0
  %v2563 = vadd.f32 %v2490, %v2562
  %2564 = vmatprep.mubr.bf16.mxu0 0
  %2565 = vmatmul.mubr.bf16.gmra.mrb[0].mxu0 %v2288
  %v2566 = vpop.f32.mrb[0].mxu0
  %v2567 = vadd.f32 %v2494, %v2566
  %v2568 = vpop.f32.mrb[0].mxu0
  %v2569 = vadd.f32 %v2496, %v2568
  %v2570 = vpop.f32.mrb[0].mxu0
  %v2571 = vadd.f32 %v2498, %v2570
  %v2572 = vpop.f32.mrb[0].mxu0
  %v2573 = vadd.f32 %v2500, %v2572
  %2574 = vmatprep.mubr.bf16.mxu0 0
  %2575 = vmatmul.mubr.bf16.gmra.mrb[0].mxu0 %v2291
  %v2576 = vpop.f32.mrb[0].mxu0
  %v2577 = vadd.f32 %v2504, %v2576
  %v2578 = vpop.f32.mrb[0].mxu0
  %v2579 = vadd.f32 %v2506, %v2578
  %v2580 = vpop.f32.mrb[0].mxu0
  %v2581 = vadd.f32 %v2508, %v2580
  %v2582 = vpop.f32.mrb[0].mxu0
  %v2583 = vadd.f32 %v2510, %v2582
  %2584 = vdwg.mxu0
  %v2585 = vmax.f32 %v2401, 0.0
  %v2586 = vmax.f32 %v2403, 0.0
  %v2587 = vmax.f32 %v2547, 0.0
  %v2588 = vmax.f32 %v2549, 0.0
  %v2589 = vmax.f32 %v2405, 0.0
  %v2590 = vmax.f32 %v2407, 0.0
  %v2591 = vmax.f32 %v2551, 0.0
  %v2592 = vmax.f32 %v2553, 0.0
  %v2593 = vmax.f32 %v2411, 0.0
  %v2594 = vmax.f32 %v2413, 0.0
  %v2595 = vmax.f32 %v2557, 0.0
  %v2596 = vmax.f32 %v2559, 0.0
  %v2597 = vmax.f32 %v2415, 0.0
  %v2598 = vmax.f32 %v2417, 0.0
  %v2599 = vmax.f32 %v2561, 0.0
  %v2600 = vmax.f32 %v2563, 0.0
  %v2601 = vmax.f32 %v2421, 0.0
  %v2602 = vmax.f32 %v2423, 0.0
  %v2603 = vmax.f32 %v2567, 0.0
  %v2604 = vmax.f32 %v2569, 0.0
  %v2605 = vmax.f32 %v2425, 0.0
  %v2606 = vmax.f32 %v2427, 0.0
  %v2607 = vmax.f32 %v2571, 0.0
  %v2608 = vmax.f32 %v2573, 0.0
  %v2609 = vmax.f32 %v2431, 0.0
  %v2610 = vmax.f32 %v2433, 0.0
  %v2611 = vmax.f32 %v2577, 0.0
  %v2612 = vmax.f32 %v2579, 0.0
  %v2613 = vmax.f32 %v2435, 0.0
  %v2614 = vmax.f32 %v2437, 0.0
  %v2615 = vmax.f32 %v2581, 0.0
  %v2616 = vmax.f32 %v2583, 0.0
  %2617 = vrot.lane.b32.xlu0 %v2585, 1
  %v2618 = vpop.permute.xlu0 %2617
  %2619 = vrot.lane.b32.xlu0 %v2589, 1
  %v2620 = vpop.permute.xlu0 %2619
  %2621 = vrot.lane.b32.xlu0 %v2593, 1
  %v2622 = vpop.permute.xlu0 %2621
  %2623 = vrot.lane.b32.xlu0 %v2597, 1
  %v2624 = vpop.permute.xlu0 %2623
  %2625 = vrot.lane.b32.xlu0 %v2601, 1
  %v2626 = vpop.permute.xlu0 %2625
  %2627 = vrot.lane.b32.xlu0 %v2605, 1
  %v2628 = vpop.permute.xlu0 %2627
  %2629 = vrot.lane.b32.xlu0 %v2609, 1
  %v2630 = vpop.permute.xlu0 %2629
  %2631 = vrot.lane.b32.xlu0 %v2613, 1
  %v2632 = vpop.permute.xlu0 %2631
  %2633 = vrot.lane.b32.xlu0 %v2586, 1
  %v2634 = vpop.permute.xlu0 %2633
  %2635 = vrot.lane.b32.xlu0 %v2590, 1
  %v2636 = vpop.permute.xlu0 %2635
  %2637 = vrot.lane.b32.xlu0 %v2594, 1
  %v2638 = vpop.permute.xlu0 %2637
  %2639 = vrot.lane.b32.xlu0 %v2598, 1
  %v2640 = vpop.permute.xlu0 %2639
  %2641 = vrot.lane.b32.xlu0 %v2602, 1
  %v2642 = vpop.permute.xlu0 %2641
  %2643 = vrot.lane.b32.xlu0 %v2606, 1
  %v2644 = vpop.permute.xlu0 %2643
  %2645 = vrot.lane.b32.xlu0 %v2610, 1
  %v2646 = vpop.permute.xlu0 %2645
  %2647 = vrot.lane.b32.xlu0 %v2614, 1
  %v2648 = vpop.permute.xlu0 %2647
  %2649 = vrot.lane.b32.xlu0 %v2587, 1
  %v2650 = vpop.permute.xlu0 %2649
  %2651 = vrot.lane.b32.xlu0 %v2591, 1
  %v2652 = vpop.permute.xlu0 %2651
  %2653 = vrot.lane.b32.xlu0 %v2595, 1
  %v2654 = vpop.permute.xlu0 %2653
  %2655 = vrot.lane.b32.xlu0 %v2599, 1
  %v2656 = vpop.permute.xlu0 %2655
  %2657 = vrot.lane.b32.xlu0 %v2603, 1
  %v2658 = vpop.permute.xlu0 %2657
  %2659 = vrot.lane.b32.xlu0 %v2607, 1
  %v2660 = vpop.permute.xlu0 %2659
  %2661 = vrot.lane.b32.xlu0 %v2611, 1
  %v2662 = vpop.permute.xlu0 %2661
  %2663 = vrot.lane.b32.xlu0 %v2615, 1
  %v2664 = vpop.permute.xlu0 %2663
  %2665 = vrot.lane.b32.xlu0 %v2588, 1
  %v2666 = vpop.permute.xlu0 %2665
  %2667 = vrot.lane.b32.xlu0 %v2592, 1
  %v2668 = vpop.permute.xlu0 %2667
  %2669 = vrot.lane.b32.xlu0 %v2596, 1
  %v2670 = vpop.permute.xlu0 %2669
  %2671 = vrot.lane.b32.xlu0 %v2600, 1
  %v2672 = vpop.permute.xlu0 %2671
  %2673 = vrot.lane.b32.xlu0 %v2604, 1
  %v2674 = vpop.permute.xlu0 %2673
  %2675 = vrot.lane.b32.xlu0 %v2608, 1
  %v2676 = vpop.permute.xlu0 %2675
  %2677 = vrot.lane.b32.xlu0 %v2612, 1
  %v2678 = vpop.permute.xlu0 %2677
  %2679 = vrot.lane.b32.xlu0 %v2616, 1
  %v2680 = vpop.permute.xlu0 %2679
  %v2681 = vsel %vm508, %v2650, %v2666
  %v2682 = vsel %vm508, %v2652, %v2668
  %v2683 = vsel %vm508, %v2654, %v2670
  %v2684 = vsel %vm508, %v2656, %v2672
  %v2685 = vsel %vm508, %v2658, %v2674
  %v2686 = vsel %vm508, %v2660, %v2676
  %v2687 = vsel %vm508, %v2662, %v2678
  %v2688 = vsel %vm508, %v2664, %v2680
  %v2689 = vsel %vm508, %v2634, %v2650
  %v2690 = vsel %vm508, %v2636, %v2652
  %v2691 = vsel %vm508, %v2638, %v2654
  %v2692 = vsel %vm508, %v2640, %v2656
  %v2693 = vsel %vm508, %v2642, %v2658
  %v2694 = vsel %vm508, %v2644, %v2660
  %v2695 = vsel %vm508, %v2646, %v2662
  %v2696 = vsel %vm508, %v2648, %v2664
  %v2697 = vsel %vm508, %v2618, %v2634
  %v2698 = vsel %vm508, %v2620, %v2636
  %v2699 = vsel %vm508, %v2622, %v2638
  %v2700 = vsel %vm508, %v2624, %v2640
  %v2701 = vsel %vm508, %v2626, %v2642
  %v2702 = vsel %vm508, %v2628, %v2644
  %v2703 = vsel %vm508, %v2630, %v2646
  %v2704 = vsel %vm508, %v2632, %v2648
  %v2705 = vsel %vm508, %v2666, %v2618
  %v2706 = vsel %vm508, %v2668, %v2620
  %v2707 = vsel %vm508, %v2670, %v2622
  %v2708 = vsel %vm508, %v2672, %v2624
  %v2709 = vsel %vm508, %v2674, %v2626
  %v2710 = vsel %vm508, %v2676, %v2628
  %v2711 = vsel %vm508, %v2678, %v2630
  %v2712 = vsel %vm508, %v2680, %v2632
  %v2713 = vsel %vm549, %v2705, 0.0
  %v2714 = vsel %vm550, %v2697, 0.0
  %v2715 = vsel %vm551, %v2689, 0.0
  %v2716 = vsel %vm552, %v2681, 0.0
  %v2717 = vsel %vm549, %v2706, 0.0
  %v2718 = vsel %vm550, %v2698, 0.0
  %v2719 = vsel %vm551, %v2690, 0.0
  %v2720 = vsel %vm552, %v2682, 0.0
  %v2721 = vsel %vm549, %v2707, 0.0
  %v2722 = vsel %vm550, %v2699, 0.0
  %v2723 = vsel %vm551, %v2691, 0.0
  %v2724 = vsel %vm552, %v2683, 0.0
  %v2725 = vsel %vm549, %v2708, 0.0
  %v2726 = vsel %vm550, %v2700, 0.0
  %v2727 = vsel %vm551, %v2692, 0.0
  %v2728 = vsel %vm552, %v2684, 0.0
  %v2729 = vsel %vm549, %v2709, 0.0
  %v2730 = vsel %vm550, %v2701, 0.0
  %v2731 = vsel %vm551, %v2693, 0.0
  %v2732 = vsel %vm552, %v2685, 0.0
  %v2733 = vsel %vm549, %v2710, 0.0
  %v2734 = vsel %vm550, %v2702, 0.0
  %v2735 = vsel %vm551, %v2694, 0.0
  %v2736 = vsel %vm552, %v2686, 0.0
  %v2737 = vsel %vm549, %v2711, 0.0
  %v2738 = vsel %vm550, %v2703, 0.0
  %v2739 = vsel %vm551, %v2695, 0.0
  %v2740 = vsel %vm552, %v2687, 0.0
  %v2741 = vsel %vm549, %v2712, 0.0
  %v2742 = vsel %vm550, %v2704, 0.0
  %v2743 = vsel %vm551, %v2696, 0.0
  %v2744 = vsel %vm552, %v2688, 0.0
  %v2745 = vpack.c.bf16 %v2717, %v2713
  %v2746 = vpack.c.bf16 %v2718, %v2714
  %v2747 = vpack.c.bf16 %v2719, %v2715
  %v2748 = vpack.c.bf16 %v2720, %v2716
  %v2749 = vpack.c.bf16 %v2725, %v2721
  %v2750 = vpack.c.bf16 %v2726, %v2722
  %v2751 = vpack.c.bf16 %v2727, %v2723
  %v2752 = vpack.c.bf16 %v2728, %v2724
  %v2753 = vpack.c.bf16 %v2733, %v2729
  %v2754 = vpack.c.bf16 %v2734, %v2730
  %v2755 = vpack.c.bf16 %v2735, %v2731
  %v2756 = vpack.c.bf16 %v2736, %v2732
  %v2757 = vpack.c.bf16 %v2741, %v2737
  %v2758 = vpack.c.bf16 %v2742, %v2738
  %v2759 = vpack.c.bf16 %v2743, %v2739
  %v2760 = vpack.c.bf16 %v2744, %v2740
  %v2761 = vpack.c.bf16 %v2589, %v2585
  %v2762 = vpack.c.bf16 %v2590, %v2586
  %v2763 = vpack.c.bf16 %v2591, %v2587
  %v2764 = vpack.c.bf16 %v2592, %v2588
  %v2765 = vpack.c.bf16 %v2597, %v2593
  %v2766 = vpack.c.bf16 %v2598, %v2594
  %v2767 = vpack.c.bf16 %v2599, %v2595
  %v2768 = vpack.c.bf16 %v2600, %v2596
  %v2769 = vpack.c.bf16 %v2605, %v2601
  %v2770 = vpack.c.bf16 %v2606, %v2602
  %v2771 = vpack.c.bf16 %v2607, %v2603
  %v2772 = vpack.c.bf16 %v2608, %v2604
  %v2773 = vpack.c.bf16 %v2613, %v2609
  %v2774 = vpack.c.bf16 %v2614, %v2610
  %v2775 = vpack.c.bf16 %v2615, %v2611
  %v2776 = vpack.c.bf16 %v2616, %v2612
  %2777 = vrot.lane.b32.xlu0 %v2585, 127
  %v2778 = vpop.permute.xlu0 %2777
  %2779 = vrot.lane.b32.xlu0 %v2589, 127
  %v2780 = vpop.permute.xlu0 %2779
  %2781 = vrot.lane.b32.xlu0 %v2593, 127
  %v2782 = vpop.permute.xlu0 %2781
  %2783 = vrot.lane.b32.xlu0 %v2597, 127
  %v2784 = vpop.permute.xlu0 %2783
  %2785 = vrot.lane.b32.xlu0 %v2601, 127
  %v2786 = vpop.permute.xlu0 %2785
  %2787 = vrot.lane.b32.xlu0 %v2605, 127
  %v2788 = vpop.permute.xlu0 %2787
  %2789 = vrot.lane.b32.xlu0 %v2609, 127
  %v2790 = vpop.permute.xlu0 %2789
  %2791 = vrot.lane.b32.xlu0 %v2613, 127
  %v2792 = vpop.permute.xlu0 %2791
  %2793 = vrot.lane.b32.xlu0 %v2586, 127
  %v2794 = vpop.permute.xlu0 %2793
  %2795 = vrot.lane.b32.xlu0 %v2590, 127
  %v2796 = vpop.permute.xlu0 %2795
  %2797 = vrot.lane.b32.xlu0 %v2594, 127
  %v2798 = vpop.permute.xlu0 %2797
  %2799 = vrot.lane.b32.xlu0 %v2598, 127
  %v2800 = vpop.permute.xlu0 %2799
  %2801 = vrot.lane.b32.xlu0 %v2602, 127
  %v2802 = vpop.permute.xlu0 %2801
  %2803 = vrot.lane.b32.xlu0 %v2606, 127
  %v2804 = vpop.permute.xlu0 %2803
  %2805 = vrot.lane.b32.xlu0 %v2610, 127
  %v2806 = vpop.permute.xlu0 %2805
  %2807 = vrot.lane.b32.xlu0 %v2614, 127
  %v2808 = vpop.permute.xlu0 %2807
  %2809 = vrot.lane.b32.xlu0 %v2587, 127
  %v2810 = vpop.permute.xlu0 %2809
  %2811 = vrot.lane.b32.xlu0 %v2591, 127
  %v2812 = vpop.permute.xlu0 %2811
  %2813 = vrot.lane.b32.xlu0 %v2595, 127
  %v2814 = vpop.permute.xlu0 %2813
  %2815 = vrot.lane.b32.xlu0 %v2599, 127
  %v2816 = vpop.permute.xlu0 %2815
  %2817 = vrot.lane.b32.xlu0 %v2603, 127
  %v2818 = vpop.permute.xlu0 %2817
  %2819 = vrot.lane.b32.xlu0 %v2607, 127
  %v2820 = vpop.permute.xlu0 %2819
  %2821 = vrot.lane.b32.xlu0 %v2611, 127
  %v2822 = vpop.permute.xlu0 %2821
  %2823 = vrot.lane.b32.xlu0 %v2615, 127
  %v2824 = vpop.permute.xlu0 %2823
  %2825 = vrot.lane.b32.xlu0 %v2588, 127
  %v2826 = vpop.permute.xlu0 %2825
  %2827 = vrot.lane.b32.xlu0 %v2592, 127
  %v2828 = vpop.permute.xlu0 %2827
  %2829 = vrot.lane.b32.xlu0 %v2596, 127
  %v2830 = vpop.permute.xlu0 %2829
  %2831 = vrot.lane.b32.xlu0 %v2600, 127
  %v2832 = vpop.permute.xlu0 %2831
  %2833 = vrot.lane.b32.xlu0 %v2604, 127
  %v2834 = vpop.permute.xlu0 %2833
  %2835 = vrot.lane.b32.xlu0 %v2608, 127
  %v2836 = vpop.permute.xlu0 %2835
  %2837 = vrot.lane.b32.xlu0 %v2612, 127
  %v2838 = vpop.permute.xlu0 %2837
  %2839 = vrot.lane.b32.xlu0 %v2616, 127
  %v2840 = vpop.permute.xlu0 %2839
  %v2841 = vsel %vm681, %v2810, %v2826
  %v2842 = vsel %vm681, %v2812, %v2828
  %v2843 = vsel %vm681, %v2814, %v2830
  %v2844 = vsel %vm681, %v2816, %v2832
  %v2845 = vsel %vm681, %v2818, %v2834
  %v2846 = vsel %vm681, %v2820, %v2836
  %v2847 = vsel %vm681, %v2822, %v2838
  %v2848 = vsel %vm681, %v2824, %v2840
  %v2849 = vsel %vm681, %v2794, %v2810
  %v2850 = vsel %vm681, %v2796, %v2812
  %v2851 = vsel %vm681, %v2798, %v2814
  %v2852 = vsel %vm681, %v2800, %v2816
  %v2853 = vsel %vm681, %v2802, %v2818
  %v2854 = vsel %vm681, %v2804, %v2820
  %v2855 = vsel %vm681, %v2806, %v2822
  %v2856 = vsel %vm681, %v2808, %v2824
  %v2857 = vsel %vm681, %v2778, %v2794
  %v2858 = vsel %vm681, %v2780, %v2796
  %v2859 = vsel %vm681, %v2782, %v2798
  %v2860 = vsel %vm681, %v2784, %v2800
  %v2861 = vsel %vm681, %v2786, %v2802
  %v2862 = vsel %vm681, %v2788, %v2804
  %v2863 = vsel %vm681, %v2790, %v2806
  %v2864 = vsel %vm681, %v2792, %v2808
  %v2865 = vsel %vm681, %v2826, %v2778
  %v2866 = vsel %vm681, %v2828, %v2780
  %v2867 = vsel %vm681, %v2830, %v2782
  %v2868 = vsel %vm681, %v2832, %v2784
  %v2869 = vsel %vm681, %v2834, %v2786
  %v2870 = vsel %vm681, %v2836, %v2788
  %v2871 = vsel %vm681, %v2838, %v2790
  %v2872 = vsel %vm681, %v2840, %v2792
  %v2873 = vsel %vm722, %v2857, 0.0
  %v2874 = vsel %vm723, %v2849, 0.0
  %v2875 = vsel %vm724, %v2841, 0.0
  %v2876 = vsel %vm725, %v2865, 0.0
  %v2877 = vsel %vm722, %v2858, 0.0
  %v2878 = vsel %vm723, %v2850, 0.0
  %v2879 = vsel %vm724, %v2842, 0.0
  %v2880 = vsel %vm725, %v2866, 0.0
  %v2881 = vsel %vm722, %v2859, 0.0
  %v2882 = vsel %vm723, %v2851, 0.0
  %v2883 = vsel %vm724, %v2843, 0.0
  %v2884 = vsel %vm725, %v2867, 0.0
  %v2885 = vsel %vm722, %v2860, 0.0
  %v2886 = vsel %vm723, %v2852, 0.0
  %v2887 = vsel %vm724, %v2844, 0.0
  %v2888 = vsel %vm725, %v2868, 0.0
  %v2889 = vsel %vm722, %v2861, 0.0
  %v2890 = vsel %vm723, %v2853, 0.0
  %v2891 = vsel %vm724, %v2845, 0.0
  %v2892 = vsel %vm725, %v2869, 0.0
  %v2893 = vsel %vm722, %v2862, 0.0
  %v2894 = vsel %vm723, %v2854, 0.0
  %v2895 = vsel %vm724, %v2846, 0.0
  %v2896 = vsel %vm725, %v2870, 0.0
  %v2897 = vsel %vm722, %v2863, 0.0
  %v2898 = vsel %vm723, %v2855, 0.0
  %v2899 = vsel %vm724, %v2847, 0.0
  %v2900 = vsel %vm725, %v2871, 0.0
  %v2901 = vsel %vm722, %v2864, 0.0
  %v2902 = vsel %vm723, %v2856, 0.0
  %v2903 = vsel %vm724, %v2848, 0.0
  %v2904 = vsel %vm725, %v2872, 0.0
  %v2905 = vpack.c.bf16 %v2877, %v2873
  %v2906 = vpack.c.bf16 %v2878, %v2874
  %v2907 = vpack.c.bf16 %v2879, %v2875
  %v2908 = vpack.c.bf16 %v2880, %v2876
  %v2909 = vpack.c.bf16 %v2885, %v2881
  %v2910 = vpack.c.bf16 %v2886, %v2882
  %v2911 = vpack.c.bf16 %v2887, %v2883
  %v2912 = vpack.c.bf16 %v2888, %v2884
  %v2913 = vpack.c.bf16 %v2893, %v2889
  %v2914 = vpack.c.bf16 %v2894, %v2890
  %v2915 = vpack.c.bf16 %v2895, %v2891
  %v2916 = vpack.c.bf16 %v2896, %v2892
  %v2917 = vpack.c.bf16 %v2901, %v2897
  %v2918 = vpack.c.bf16 %v2902, %v2898
  %v2919 = vpack.c.bf16 %v2903, %v2899
  %v2920 = vpack.c.bf16 %v2904, %v2900
  %v2921 = vld [vmem:[%s5] sm:$0xff]
  %v2922 = vld [vmem:[%s5 + $0x8] sm:$0xff]
  %v2923 = vld [vmem:[%s5 + $0x10] sm:$0xff]
  %v2924 = vld [vmem:[%s5 + $0x18] sm:$0xff]
  %v2925 = vld [vmem:[%s5 + $0x20] sm:$0xff]
  %v2926 = vld [vmem:[%s5 + $0x28] sm:$0xff]
  %v2927 = vld [vmem:[%s5 + $0x30] sm:$0xff]
  %v2928 = vld [vmem:[%s5 + $0x38] sm:$0xff]
  %v2929 = vld [vmem:[%s6] sm:$0xff]
  %v2930 = vld [vmem:[%s6 + $0x8] sm:$0xff]
  %v2931 = vld [vmem:[%s6 + $0x10] sm:$0xff]
  %v2932 = vld [vmem:[%s6 + $0x18] sm:$0xff]
  %v2933 = vld [vmem:[%s6 + $0x20] sm:$0xff]
  %v2934 = vld [vmem:[%s6 + $0x28] sm:$0xff]
  %v2935 = vld [vmem:[%s6 + $0x30] sm:$0xff]
  %v2936 = vld [vmem:[%s6 + $0x38] sm:$0xff]
  %2938 = vset.pattern.permute.xlu0 0
  %2939 = vperm.xlu0 %2938, %v2929
  %v2940 = vpop.permute.xlu0 %2939
  %2943 = vset.pattern.permute.xlu0 0
  %2944 = vperm.xlu0 %2943, %v2930
  %v2945 = vpop.permute.xlu0 %2944
  %2948 = vset.pattern.permute.xlu0 0
  %2949 = vperm.xlu0 %2948, %v2931
  %v2950 = vpop.permute.xlu0 %2949
  %2953 = vset.pattern.permute.xlu0 0
  %2954 = vperm.xlu0 %2953, %v2932
  %v2955 = vpop.permute.xlu0 %2954
  %2958 = vset.pattern.permute.xlu0 0
  %2959 = vperm.xlu0 %2958, %v2933
  %v2960 = vpop.permute.xlu0 %2959
  %2963 = vset.pattern.permute.xlu0 0
  %2964 = vperm.xlu0 %2963, %v2934
  %v2965 = vpop.permute.xlu0 %2964
  %2968 = vset.pattern.permute.xlu0 0
  %2969 = vperm.xlu0 %2968, %v2935
  %v2970 = vpop.permute.xlu0 %2969
  %2973 = vset.pattern.permute.xlu0 0
  %2974 = vperm.xlu0 %2973, %v2936
  %v2975 = vpop.permute.xlu0 %2974
  %v2985 = vunpack.c.l.b16 %v2921
  %v2986 = vunpack.c.h.b16 %v2921
  %v2987 = vunpack.c.l.b16 %v2922
  %v2988 = vunpack.c.h.b16 %v2922
  %v2989 = vunpack.c.l.b16 %v2923
  %v2990 = vunpack.c.h.b16 %v2923
  %v2991 = vunpack.c.l.b16 %v2924
  %v2992 = vunpack.c.h.b16 %v2924
  %v2993 = vunpack.c.l.b16 %v2925
  %v2994 = vunpack.c.h.b16 %v2925
  %v2995 = vunpack.c.l.b16 %v2926
  %v2996 = vunpack.c.h.b16 %v2926
  %v2997 = vunpack.c.l.b16 %v2927
  %v2998 = vunpack.c.h.b16 %v2927
  %v2999 = vunpack.c.l.b16 %v2928
  %v3000 = vunpack.c.h.b16 %v2928
  %v3001 = vpack.c.b16 %v2987, %v2985
  %v3002 = vpack.c.b16 %v2988, %v2986
  %v3003 = vpack.c.b16 %v2991, %v2989
  %v3004 = vpack.c.b16 %v2992, %v2990
  %v3005 = vpack.c.b16 %v2995, %v2993
  %v3006 = vpack.c.b16 %v2996, %v2994
  %v3007 = vpack.c.b16 %v2999, %v2997
  %v3008 = vpack.c.b16 %v3000, %v2998
  %v3014 = vsel %vm1228, %v3002, 0
  %v3017 = vsel %vm1228, %v3004, 0
  %v3020 = vsel %vm1228, %v3006, 0
  %v3023 = vsel %vm1228, %v3008, 0
  %3025 = vmatprep.subr.bf16.mxu0 %v2746
  %3026 = vmatpush1.bf16.msra.mxu0 %v2745
  %3027 = vmatprep.subr.bf16.mxu0 %v2750
  %3028 = vmatpush1.bf16.msra.mxu0 %v2749
  %3029 = vmatprep.subr.bf16.mxu0 %v2754
  %3030 = vmatpush1.bf16.msra.mxu0 %v2753
  %3031 = vmatprep.subr.bf16.mxu0 %v2758
  %3032 = vmatpush1.bf16.msra.mxu0 %v2757
  %3033 = vmatprep.subr.bf16.mxu0 %v2762
  %3034 = vmatpush1.bf16.msra.mxu0 %v2761
  %3035 = vmatprep.subr.bf16.mxu0 %v2766
  %3036 = vmatpush1.bf16.msra.mxu0 %v2765
  %3037 = vmatprep.subr.bf16.mxu0 %v2770
  %3038 = vmatpush1.bf16.msra.mxu0 %v2769
  %3039 = vmatprep.subr.bf16.mxu0 %v2774
  %3040 = vmatpush1.bf16.msra.mxu0 %v2773
  %3041 = vmatprep.subr.bf16.mxu0 %v2906
  %3042 = vmatpush1.bf16.msra.mxu0 %v2905
  %3043 = vmatprep.subr.bf16.mxu0 %v2910
  %3044 = vmatpush1.bf16.msra.mxu0 %v2909
  %3045 = vmatprep.subr.bf16.mxu0 %v2914
  %3046 = vmatpush1.bf16.msra.mxu0 %v2913
  %3047 = vmatprep.subr.bf16.mxu0 %v2918
  %3048 = vmatpush1.bf16.msra.mxu0 %v2917
  %3049 = vmatprep.subr.bf16.mxu0 0
  %3050 = vmatpush1.bf16.msra.mxu0 0
  %3051 = vmatprep.subr.bf16.mxu0 0
  %3052 = vmatpush1.bf16.msra.mxu0 0
  %3053 = vmatprep.subr.bf16.mxu0 0
  %3054 = vmatpush1.bf16.msra.mxu0 0
  %3055 = vmatprep.subr.bf16.mxu0 0
  %3056 = vmatpush1.bf16.msra.mxu0 0
  %3057 = vmatprep.mubr.bf16.mxu0 %v3014
  %3058 = vmatmul.mubr.bf16.gmra.mrb[0].mxu0 %v3001
  %v3059 = vpop.f32.mrb[0].mxu0
  %v3060 = vadd.f32 %v2940, %v3059
  %v3061 = vpop.f32.mrb[0].mxu0
  %v3062 = vadd.f32 %v2940, %v3061
  %v3063 = vpop.f32.mrb[0].mxu0
  %v3064 = vadd.f32 %v2945, %v3063
  %v3065 = vpop.f32.mrb[0].mxu0
  %v3066 = vadd.f32 %v2945, %v3065
  %3067 = vmatprep.mubr.bf16.mxu0 %v3017
  %3068 = vmatmul.mubr.bf16.gmra.mrb[0].mxu0 %v3003
  %v3069 = vpop.f32.mrb[0].mxu0
  %v3070 = vadd.f32 %v2950, %v3069
  %v3071 = vpop.f32.mrb[0].mxu0
  %v3072 = vadd.f32 %v2950, %v3071
  %v3073 = vpop.f32.mrb[0].mxu0
  %v3074 = vadd.f32 %v2955, %v3073
  %v3075 = vpop.f32.mrb[0].mxu0
  %v3076 = vadd.f32 %v2955, %v3075
  %3077 = vmatprep.mubr.bf16.mxu0 %v3020
  %3078 = vmatmul.mubr.bf16.gmra.mrb[0].mxu0 %v3005
  %v3079 = vpop.f32.mrb[0].mxu0
  %v3080 = vadd.f32 %v2960, %v3079
  %v3081 = vpop.f32.mrb[0].mxu0
  %v3082 = vadd.f32 %v2960, %v3081
  %v3083 = vpop.f32.mrb[0].mxu0
  %v3084 = vadd.f32 %v2965, %v3083
  %v3085 = vpop.f32.mrb[0].mxu0
  %v3086 = vadd.f32 %v2965, %v3085
  %3087 = vmatprep.mubr.bf16.mxu0 %v3023
  %3088 = vmatmul.mubr.bf16.gmra.mrb[0].mxu0 %v3007
  %v3089 = vpop.f32.mrb[0].mxu0
  %v3090 = vadd.f32 %v2970, %v3089
  %v3091 = vpop.f32.mrb[0].mxu0
  %v3092 = vadd.f32 %v2970, %v3091
  %v3093 = vpop.f32.mrb[0].mxu0
  %v3094 = vadd.f32 %v2975, %v3093
  %v3095 = vpop.f32.mrb[0].mxu0
  %v3096 = vadd.f32 %v2975, %v3095
  %3097 = vdwg.mxu0
  %3098 = vmatprep.subr.bf16.mxu0 %v2748
  %3099 = vmatpush1.bf16.msra.mxu0 %v2747
  %3100 = vmatprep.subr.bf16.mxu0 %v2752
  %3101 = vmatpush1.bf16.msra.mxu0 %v2751
  %3102 = vmatprep.subr.bf16.mxu0 %v2756
  %3103 = vmatpush1.bf16.msra.mxu0 %v2755
  %3104 = vmatprep.subr.bf16.mxu0 %v2760
  %3105 = vmatpush1.bf16.msra.mxu0 %v2759
  %3106 = vmatprep.subr.bf16.mxu0 %v2764
  %3107 = vmatpush1.bf16.msra.mxu0 %v2763
  %3108 = vmatprep.subr.bf16.mxu0 %v2768
  %3109 = vmatpush1.bf16.msra.mxu0 %v2767
  %3110 = vmatprep.subr.bf16.mxu0 %v2772
  %3111 = vmatpush1.bf16.msra.mxu0 %v2771
  %3112 = vmatprep.subr.bf16.mxu0 %v2776
  %3113 = vmatpush1.bf16.msra.mxu0 %v2775
  %3114 = vmatprep.subr.bf16.mxu0 %v2908
  %3115 = vmatpush1.bf16.msra.mxu0 %v2907
  %3116 = vmatprep.subr.bf16.mxu0 %v2912
  %3117 = vmatpush1.bf16.msra.mxu0 %v2911
  %3118 = vmatprep.subr.bf16.mxu0 %v2916
  %3119 = vmatpush1.bf16.msra.mxu0 %v2915
  %3120 = vmatprep.subr.bf16.mxu0 %v2920
  %3121 = vmatpush1.bf16.msra.mxu0 %v2919
  %3122 = vmatprep.subr.bf16.mxu0 0
  %3123 = vmatpush1.bf16.msra.mxu0 0
  %3124 = vmatprep.subr.bf16.mxu0 0
  %3125 = vmatpush1.bf16.msra.mxu0 0
  %3126 = vmatprep.subr.bf16.mxu0 0
  %3127 = vmatpush1.bf16.msra.mxu0 0
  %3128 = vmatprep.subr.bf16.mxu0 0
  %3129 = vmatpush1.bf16.msra.mxu0 0
  %3130 = vmatprep.mubr.bf16.mxu0 %v3014
  %3131 = vmatmul.mubr.bf16.gmra.mrb[0].mxu0 %v3001
  %v3132 = vpop.f32.mrb[0].mxu0
  %v3133 = vadd.f32 %v2940, %v3132
  %v3134 = vpop.f32.mrb[0].mxu0
  %v3135 = vadd.f32 %v2940, %v3134
  %v3136 = vpop.f32.mrb[0].mxu0
  %v3137 = vadd.f32 %v2945, %v3136
  %v3138 = vpop.f32.mrb[0].mxu0
  %v3139 = vadd.f32 %v2945, %v3138
  %3140 = vmatprep.mubr.bf16.mxu0 %v3017
  %3141 = vmatmul.mubr.bf16.gmra.mrb[0].mxu0 %v3003
  %v3142 = vpop.f32.mrb[0].mxu0
  %v3143 = vadd.f32 %v2950, %v3142
  %v3144 = vpop.f32.mrb[0].mxu0
  %v3145 = vadd.f32 %v2950, %v3144
  %v3146 = vpop.f32.mrb[0].mxu0
  %v3147 = vadd.f32 %v2955, %v3146
  %v3148 = vpop.f32.mrb[0].mxu0
  %v3149 = vadd.f32 %v2955, %v3148
  %3150 = vmatprep.mubr.bf16.mxu0 %v3020
  %3151 = vmatmul.mubr.bf16.gmra.mrb[0].mxu0 %v3005
  %v3152 = vpop.f32.mrb[0].mxu0
  %v3153 = vadd.f32 %v2960, %v3152
  %v3154 = vpop.f32.mrb[0].mxu0
  %v3155 = vadd.f32 %v2960, %v3154
  %v3156 = vpop.f32.mrb[0].mxu0
  %v3157 = vadd.f32 %v2965, %v3156
  %v3158 = vpop.f32.mrb[0].mxu0
  %v3159 = vadd.f32 %v2965, %v3158
  %3160 = vmatprep.mubr.bf16.mxu0 %v3023
  %3161 = vmatmul.mubr.bf16.gmra.mrb[0].mxu0 %v3007
  %v3162 = vpop.f32.mrb[0].mxu0
  %v3163 = vadd.f32 %v2970, %v3162
  %v3164 = vpop.f32.mrb[0].mxu0
  %v3165 = vadd.f32 %v2970, %v3164
  %v3166 = vpop.f32.mrb[0].mxu0
  %v3167 = vadd.f32 %v2975, %v3166
  %v3168 = vpop.f32.mrb[0].mxu0
  %v3169 = vadd.f32 %v2975, %v3168
  %3170 = vdwg.mxu0
  %v3171 = vmax.f32 %v3060, 0.0
  %v3172 = vmax.f32 %v3062, 0.0
  %v3173 = vmax.f32 %v3133, 0.0
  %v3174 = vmax.f32 %v3135, 0.0
  %v3175 = vmax.f32 %v3064, 0.0
  %v3176 = vmax.f32 %v3066, 0.0
  %v3177 = vmax.f32 %v3137, 0.0
  %v3178 = vmax.f32 %v3139, 0.0
  %v3179 = vmax.f32 %v3070, 0.0
  %v3180 = vmax.f32 %v3072, 0.0
  %v3181 = vmax.f32 %v3143, 0.0
  %v3182 = vmax.f32 %v3145, 0.0
  %v3183 = vmax.f32 %v3074, 0.0
  %v3184 = vmax.f32 %v3076, 0.0
  %v3185 = vmax.f32 %v3147, 0.0
  %v3186 = vmax.f32 %v3149, 0.0
  %v3187 = vmax.f32 %v3080, 0.0
  %v3188 = vmax.f32 %v3082, 0.0
  %v3189 = vmax.f32 %v3153, 0.0
  %v3190 = vmax.f32 %v3155, 0.0
  %v3191 = vmax.f32 %v3084, 0.0
  %v3192 = vmax.f32 %v3086, 0.0
  %v3193 = vmax.f32 %v3157, 0.0
  %v3194 = vmax.f32 %v3159, 0.0
  %v3195 = vmax.f32 %v3090, 0.0
  %v3196 = vmax.f32 %v3092, 0.0
  %v3197 = vmax.f32 %v3163, 0.0
  %v3198 = vmax.f32 %v3165, 0.0
  %v3199 = vmax.f32 %v3094, 0.0
  %v3200 = vmax.f32 %v3096, 0.0
  %v3201 = vmax.f32 %v3167, 0.0
  %v3202 = vmax.f32 %v3169, 0.0
  %v3203 = vld [vmem:[%s11] sm:$0xf]
  %v3204 = vld [vmem:[%s11 + $0x4] sm:$0xf]
  %v3205 = vld [vmem:[%s11 + $0x8] sm:$0xf]
  %v3206 = vld [vmem:[%s11 + $0xc] sm:$0xf]
  %v3207 = vld [vmem:[%s11 + $0x10] sm:$0xf]
  %v3208 = vld [vmem:[%s11 + $0x14] sm:$0xf]
  %v3209 = vld [vmem:[%s11 + $0x18] sm:$0xf]
  %v3210 = vld [vmem:[%s11 + $0x1c] sm:$0xf]
  %v3211 = vld [vmem:[%s12] sm:$0xff]
  %v3212 = vld [vmem:[%s12 + $0x8] sm:$0xff]
  %v3213 = vld [vmem:[%s12 + $0x10] sm:$0xff]
  %v3214 = vld [vmem:[%s12 + $0x18] sm:$0xff]
  %v3215 = vld [vmem:[%s12 + $0x20] sm:$0xff]
  %v3216 = vld [vmem:[%s12 + $0x28] sm:$0xff]
  %v3217 = vld [vmem:[%s12 + $0x30] sm:$0xff]
  %v3218 = vld [vmem:[%s12 + $0x38] sm:$0xff]
  %3220 = vset.pattern.permute.xlu0 0
  %3221 = vperm.xlu0 %3220, %v3211
  %v3222 = vpop.permute.xlu0 %3221
  %3225 = vset.pattern.permute.xlu0 0
  %3226 = vperm.xlu0 %3225, %v3212
  %v3227 = vpop.permute.xlu0 %3226
  %3230 = vset.pattern.permute.xlu0 0
  %3231 = vperm.xlu0 %3230, %v3213
  %v3232 = vpop.permute.xlu0 %3231
  %3235 = vset.pattern.permute.xlu0 0
  %3236 = vperm.xlu0 %3235, %v3214
  %v3237 = vpop.permute.xlu0 %3236
  %3240 = vset.pattern.permute.xlu0 0
  %3241 = vperm.xlu0 %3240, %v3215
  %v3242 = vpop.permute.xlu0 %3241
  %3245 = vset.pattern.permute.xlu0 0
  %3246 = vperm.xlu0 %3245, %v3216
  %v3247 = vpop.permute.xlu0 %3246
  %3250 = vset.pattern.permute.xlu0 0
  %3251 = vperm.xlu0 %3250, %v3217
  %v3252 = vpop.permute.xlu0 %3251
  %3255 = vset.pattern.permute.xlu0 0
  %3256 = vperm.xlu0 %3255, %v3218
  %v3257 = vpop.permute.xlu0 %3256
  %v3267 = vunpack.c.l.b16 %v3203
  %v3268 = vunpack.c.l.b16 %v3204
  %v3269 = vunpack.c.l.b16 %v3205
  %v3270 = vunpack.c.l.b16 %v3206
  %v3271 = vunpack.c.l.b16 %v3207
  %v3272 = vunpack.c.l.b16 %v3208
  %v3273 = vunpack.c.l.b16 %v3209
  %v3274 = vunpack.c.l.b16 %v3210
  %v3275 = vpack.c.b16 %v3268, %v3267
  %v3276 = vpack.c.b16 %v3270, %v3269
  %v3277 = vpack.c.b16 %v3272, %v3271
  %v3278 = vpack.c.b16 %v3274, %v3273
  %v3280 = vsel %vm1228, %v3275, 0
  %v3283 = vsel %vm1228, %v3276, 0
  %v3286 = vsel %vm1228, %v3277, 0
  %v3289 = vsel %vm1228, %v3278, 0
  %3291 = vmatprep.subr.bf16.mxu0 %v602
  %3292 = vmatpush1.bf16.msra.mxu0 %v601
  %3293 = vmatprep.subr.bf16.mxu0 %v606
  %3294 = vmatpush1.bf16.msra.mxu0 %v605
  %3295 = vmatprep.subr.bf16.mxu0 %v610
  %3296 = vmatpush1.bf16.msra.mxu0 %v609
  %3297 = vmatprep.subr.bf16.mxu0 %v614
  %3298 = vmatpush1.bf16.msra.mxu0 %v613
  %3299 = vmatprep.subr.bf16.mxu0 0
  %3300 = vmatpush1.bf16.msra.mxu0 0
  %3301 = vmatprep.subr.bf16.mxu0 0
  %3302 = vmatpush1.bf16.msra.mxu0 0
  %3303 = vmatprep.subr.bf16.mxu0 0
  %3304 = vmatpush1.bf16.msra.mxu0 0
  %3305 = vmatprep.subr.bf16.mxu0 0
  %3306 = vmatpush1.bf16.msra.mxu0 0
  %3307 = vmatprep.subr.bf16.mxu0 0
  %3308 = vmatpush1.bf16.msra.mxu0 0
  %3309 = vmatprep.subr.bf16.mxu0 0
  %3310 = vmatpush1.bf16.msra.mxu0 0
  %3311 = vmatprep.subr.bf16.mxu0 0
  %3312 = vmatpush1.bf16.msra.mxu0 0
  %3313 = vmatprep.subr.bf16.mxu0 0
  %3314 = vmatpush1.bf16.msra.mxu0 0
  %3315 = vmatprep.subr.bf16.mxu0 0
  %3316 = vmatpush1.bf16.msra.mxu0 0
  %3317 = vmatprep.subr.bf16.mxu0 0
  %3318 = vmatpush1.bf16.msra.mxu0 0
  %3319 = vmatprep.subr.bf16.mxu0 0
  %3320 = vmatpush1.bf16.msra.mxu0 0
  %3321 = vmatprep.subr.bf16.mxu0 0
  %3322 = vmatpush1.bf16.msra.mxu0 0
  %3323 = vmatprep.mubr.bf16.mxu0 0
  %3324 = vmatmul.mubr.bf16.gmra.mrb[0].mxu0 %v3280
  %v3325 = vpop.f32.mrb[0].mxu0
  %v3326 = vadd.f32 %v3222, %v3325
  %v3327 = vpop.f32.mrb[0].mxu0
  %v3328 = vadd.f32 %v3222, %v3327
  %v3329 = vpop.f32.mrb[0].mxu0
  %v3330 = vadd.f32 %v3227, %v3329
  %v3331 = vpop.f32.mrb[0].mxu0
  %v3332 = vadd.f32 %v3227, %v3331
  %3333 = vmatprep.mubr.bf16.mxu0 0
  %3334 = vmatmul.mubr.bf16.gmra.mrb[0].mxu0 %v3283
  %v3335 = vpop.f32.mrb[0].mxu0
  %v3336 = vadd.f32 %v3232, %v3335
  %v3337 = vpop.f32.mrb[0].mxu0
  %v3338 = vadd.f32 %v3232, %v3337
  %v3339 = vpop.f32.mrb[0].mxu0
  %v3340 = vadd.f32 %v3237, %v3339
  %v3341 = vpop.f32.mrb[0].mxu0
  %v3342 = vadd.f32 %v3237, %v3341
  %3343 = vmatprep.mubr.bf16.mxu0 0
  %3344 = vmatmul.mubr.bf16.gmra.mrb[0].mxu0 %v3286
  %v3345 = vpop.f32.mrb[0].mxu0
  %v3346 = vadd.f32 %v3242, %v3345
  %v3347 = vpop.f32.mrb[0].mxu0
  %v3348 = vadd.f32 %v3242, %v3347
  %v3349 = vpop.f32.mrb[0].mxu0
  %v3350 = vadd.f32 %v3247, %v3349
  %v3351 = vpop.f32.mrb[0].mxu0
  %v3352 = vadd.f32 %v3247, %v3351
  %3353 = vmatprep.mubr.bf16.mxu0 0
  %3354 = vmatmul.mubr.bf16.gmra.mrb[0].mxu0 %v3289
  %v3355 = vpop.f32.mrb[0].mxu0
  %v3356 = vadd.f32 %v3252, %v3355
  %v3357 = vpop.f32.mrb[0].mxu0
  %v3358 = vadd.f32 %v3252, %v3357
  %v3359 = vpop.f32.mrb[0].mxu0
  %v3360 = vadd.f32 %v3257, %v3359
  %v3361 = vpop.f32.mrb[0].mxu0
  %v3362 = vadd.f32 %v3257, %v3361
  %3363 = vdwg.mxu0
  %3364 = vmatprep.subr.bf16.mxu0 %v604
  %3365 = vmatpush1.bf16.msra.mxu0 %v603
  %3366 = vmatprep.subr.bf16.mxu0 %v608
  %3367 = vmatpush1.bf16.msra.mxu0 %v607
  %3368 = vmatprep.subr.bf16.mxu0 %v612
  %3369 = vmatpush1.bf16.msra.mxu0 %v611
  %3370 = vmatprep.subr.bf16.mxu0 %v616
  %3371 = vmatpush1.bf16.msra.mxu0 %v615
  %3372 = vmatprep.subr.bf16.mxu0 0
  %3373 = vmatpush1.bf16.msra.mxu0 0
  %3374 = vmatprep.subr.bf16.mxu0 0
  %3375 = vmatpush1.bf16.msra.mxu0 0
  %3376 = vmatprep.subr.bf16.mxu0 0
  %3377 = vmatpush1.bf16.msra.mxu0 0
  %3378 = vmatprep.subr.bf16.mxu0 0
  %3379 = vmatpush1.bf16.msra.mxu0 0
  %3380 = vmatprep.subr.bf16.mxu0 0
  %3381 = vmatpush1.bf16.msra.mxu0 0
  %3382 = vmatprep.subr.bf16.mxu0 0
  %3383 = vmatpush1.bf16.msra.mxu0 0
  %3384 = vmatprep.subr.bf16.mxu0 0
  %3385 = vmatpush1.bf16.msra.mxu0 0
  %3386 = vmatprep.subr.bf16.mxu0 0
  %3387 = vmatpush1.bf16.msra.mxu0 0
  %3388 = vmatprep.subr.bf16.mxu0 0
  %3389 = vmatpush1.bf16.msra.mxu0 0
  %3390 = vmatprep.subr.bf16.mxu0 0
  %3391 = vmatpush1.bf16.msra.mxu0 0
  %3392 = vmatprep.subr.bf16.mxu0 0
  %3393 = vmatpush1.bf16.msra.mxu0 0
  %3394 = vmatprep.subr.bf16.mxu0 0
  %3395 = vmatpush1.bf16.msra.mxu0 0
  %3396 = vmatprep.mubr.bf16.mxu0 0
  %3397 = vmatmul.mubr.bf16.gmra.mrb[0].mxu0 %v3280
  %v3398 = vpop.f32.mrb[0].mxu0
  %v3399 = vadd.f32 %v3222, %v3398
  %v3400 = vpop.f32.mrb[0].mxu0
  %v3401 = vadd.f32 %v3222, %v3400
  %v3402 = vpop.f32.mrb[0].mxu0
  %v3403 = vadd.f32 %v3227, %v3402
  %v3404 = vpop.f32.mrb[0].mxu0
  %v3405 = vadd.f32 %v3227, %v3404
  %3406 = vmatprep.mubr.bf16.mxu0 0
  %3407 = vmatmul.mubr.bf16.gmra.mrb[0].mxu0 %v3283
  %v3408 = vpop.f32.mrb[0].mxu0
  %v3409 = vadd.f32 %v3232, %v3408
  %v3410 = vpop.f32.mrb[0].mxu0
  %v3411 = vadd.f32 %v3232, %v3410
  %v3412 = vpop.f32.mrb[0].mxu0
  %v3413 = vadd.f32 %v3237, %v3412
  %v3414 = vpop.f32.mrb[0].mxu0
  %v3415 = vadd.f32 %v3237, %v3414
  %3416 = vmatprep.mubr.bf16.mxu0 0
  %3417 = vmatmul.mubr.bf16.gmra.mrb[0].mxu0 %v3286
  %v3418 = vpop.f32.mrb[0].mxu0
  %v3419 = vadd.f32 %v3242, %v3418
  %v3420 = vpop.f32.mrb[0].mxu0
  %v3421 = vadd.f32 %v3242, %v3420
  %v3422 = vpop.f32.mrb[0].mxu0
  %v3423 = vadd.f32 %v3247, %v3422
  %v3424 = vpop.f32.mrb[0].mxu0
  %v3425 = vadd.f32 %v3247, %v3424
  %3426 = vmatprep.mubr.bf16.mxu0 0
  %3427 = vmatmul.mubr.bf16.gmra.mrb[0].mxu0 %v3289
  %v3428 = vpop.f32.mrb[0].mxu0
  %v3429 = vadd.f32 %v3252, %v3428
  %v3430 = vpop.f32.mrb[0].mxu0
  %v3431 = vadd.f32 %v3252, %v3430
  %v3432 = vpop.f32.mrb[0].mxu0
  %v3433 = vadd.f32 %v3257, %v3432
  %v3434 = vpop.f32.mrb[0].mxu0
  %v3435 = vadd.f32 %v3257, %v3434
  %3436 = vdwg.mxu0
  %v3437 = vld [vmem:[%s7] sm:$0xff]
  %v3438 = vld [vmem:[%s8] sm:$0xff]
  %v3439 = vld [vmem:[%s9] sm:$0xff]
  %v3440 = vld [vmem:[%s9 + $0x8] sm:$0xff]
  %v3441 = vld [vmem:[%s9 + $0x10] sm:$0xff]
  %v3442 = vld [vmem:[%s9 + $0x18] sm:$0xff]
  %v3443 = vld [vmem:[%s9 + $0x20] sm:$0xff]
  %v3444 = vld [vmem:[%s9 + $0x28] sm:$0xff]
  %v3445 = vld [vmem:[%s9 + $0x30] sm:$0xff]
  %v3446 = vld [vmem:[%s9 + $0x38] sm:$0xff]
  %v3447 = vld [vmem:[%s10] sm:$0xff]
  %v3448 = vld [vmem:[%s10 + $0x8] sm:$0xff]
  %v3449 = vld [vmem:[%s10 + $0x10] sm:$0xff]
  %v3450 = vld [vmem:[%s10 + $0x18] sm:$0xff]
  %v3451 = vld [vmem:[%s10 + $0x20] sm:$0xff]
  %v3452 = vld [vmem:[%s10 + $0x28] sm:$0xff]
  %v3453 = vld [vmem:[%s10 + $0x30] sm:$0xff]
  %v3454 = vld [vmem:[%s10 + $0x38] sm:$0xff]
  %3455 = vadd.xlane.f32.xlu0 %v3171
  %v3456 = vpop.xlane.xlu0 %3455
  %3457 = vadd.xlane.f32.xlu0 %v3175
  %v3458 = vpop.xlane.xlu0 %3457
  %3459 = vadd.xlane.f32.xlu0 %v3179
  %v3460 = vpop.xlane.xlu0 %3459
  %3461 = vadd.xlane.f32.xlu0 %v3183
  %v3462 = vpop.xlane.xlu0 %3461
  %3463 = vadd.xlane.f32.xlu0 %v3187
  %v3464 = vpop.xlane.xlu0 %3463
  %3465 = vadd.xlane.f32.xlu0 %v3191
  %v3466 = vpop.xlane.xlu0 %3465
  %3467 = vadd.xlane.f32.xlu0 %v3195
  %v3468 = vpop.xlane.xlu0 %3467
  %3469 = vadd.xlane.f32.xlu0 %v3199
  %v3470 = vpop.xlane.xlu0 %3469
  %v3471 = vrcp.pop 128.0
  %v3472 = vmul.f32 %v3456, %v3471
  %v3473 = vmul.f32 %v3458, %v3471
  %v3474 = vmul.f32 %v3460, %v3471
  %v3475 = vmul.f32 %v3462, %v3471
  %v3476 = vmul.f32 %v3464, %v3471
  %v3477 = vmul.f32 %v3466, %v3471
  %v3478 = vmul.f32 %v3468, %v3471
  %v3479 = vmul.f32 %v3470, %v3471
  %v3481 = vsel %vm1228, %v3437, 0
  %3483 = vmatprep.subr.mxu0 0.0
  %3484 = vmatpush1.msra.mxu0 %v3472
  %3485 = vmatprep.subr.mxu0 0.0
  %3486 = vmatpush1.msra.mxu0 %v3473
  %3487 = vmatprep.subr.mxu0 0.0
  %3488 = vmatpush1.msra.mxu0 %v3474
  %3489 = vmatprep.subr.mxu0 0.0
  %3490 = vmatpush1.msra.mxu0 %v3475
  %3491 = vmatprep.subr.mxu0 0.0
  %3492 = vmatpush1.msra.mxu0 %v3476
  %3493 = vmatprep.subr.mxu0 0.0
  %3494 = vmatpush1.msra.mxu0 %v3477
  %3495 = vmatprep.subr.mxu0 0.0
  %3496 = vmatpush1.msra.mxu0 %v3478
  %3497 = vmatprep.subr.mxu0 0.0
  %3498 = vmatpush1.msra.mxu0 %v3479
  %3499 = vmatprep.subr.mxu0 0.0
  %3500 = vmatpush1.msra.mxu0 0.0
  %3501 = vmatprep.subr.mxu0 0.0
  %3502 = vmatpush1.msra.mxu0 0.0
  %3503 = vmatprep.subr.mxu0 0.0
  %3504 = vmatpush1.msra.mxu0 0.0
  %3505 = vmatprep.subr.mxu0 0.0
  %3506 = vmatpush1.msra.mxu0 0.0
  %3507 = vmatprep.subr.mxu0 0.0
  %3508 = vmatpush1.msra.mxu0 0.0
  %3509 = vmatprep.subr.mxu0 0.0
  %3510 = vmatpush1.msra.mxu0 0.0
  %3511 = vmatprep.subr.mxu0 0.0
  %3512 = vmatpush1.msra.mxu0 0.0
  %3513 = vmatprep.subr.mxu0 0.0
  %3514 = vmatpush1.msra.mxu0 0.0
  %3515 = vmatprep.subr.mxu0 0.0
  %3516 = vmatpush1.msra.mxu0 0.0
  %3517 = vmatprep.subr.mxu0 0.0
  %3518 = vmatpush1.msra.mxu0 0.0
  %3519 = vmatprep.subr.mxu0 0.0
  %3520 = vmatpush1.msra.mxu0 0.0
  %3521 = vmatprep.subr.mxu0 0.0
  %3522 = vmatpush1.msra.mxu0 0.0
  %3523 = vmatprep.subr.mxu0 0.0
  %3524 = vmatpush1.msra.mxu0 0.0
  %3525 = vmatprep.subr.mxu0 0.0
  %3526 = vmatpush1.msra.mxu0 0.0
  %3527 = vmatprep.subr.mxu0 0.0
  %3528 = vmatpush1.msra.mxu0 0.0
  %3529 = vmatprep.subr.mxu0 0.0
  %3530 = vmatpush1.msra.mxu0 0.0
  %3531 = vmatprep.subr.mxu0 0.0
  %3532 = vmatpush1.msra.mxu0 0.0
  %3533 = vmatprep.subr.mxu0 0.0
  %3534 = vmatpush1.msra.mxu0 0.0
  %3535 = vmatprep.subr.mxu0 0.0
  %3536 = vmatpush1.msra.mxu0 0.0
  %3537 = vmatprep.subr.mxu0 0.0
  %3538 = vmatpush1.msra.mxu0 0.0
  %3539 = vmatprep.subr.mxu0 0.0
  %3540 = vmatpush1.msra.mxu0 0.0
  %3541 = vmatprep.subr.mxu0 0.0
  %3542 = vmatpush1.msra.mxu0 0.0
  %3543 = vmatprep.subr.mxu0 0.0
  %3544 = vmatpush1.msra.mxu0 0.0
  %3545 = vmatprep.subr.mxu0 0.0
  %3546 = vmatpush1.msra.mxu0 0.0
  %3547 = vmatprep.mubr.f32.mxu0 0.0
  %3548 = vmatmul.mubr.f32.gmra.mrb[0].mxu0 %v3481
  %v3549 = vpop.f32.mrb[0].mxu0
  %v3550 = vadd.f32 %v3438, %v3549
  %v3551 = vpop.f32.mrb[0].mxu0
  %3552 = vdwg.mxu0
  %v3553 = vmax.f32 %v3550, 0.0
  %vm3554 = vcmask 64512
  %v3556 = vsel %vm3554, %v3439, 0
  %v3559 = vsel %vm3554, %v3440, 0
  %v3562 = vsel %vm3554, %v3441, 0
  %v3565 = vsel %vm3554, %v3442, 0
  %v3568 = vsel %vm3554, %v3443, 0
  %v3571 = vsel %vm3554, %v3444, 0
  %v3574 = vsel %vm3554, %v3445, 0
  %v3577 = vsel %vm3554, %v3446, 0
  %3579 = vmatprep.subr.mxu0 0.0
  %3580 = vmatpush1.msra.mxu0 %v3553
  %3581 = vmatprep.subr.mxu0 0.0
  %3582 = vmatpush1.msra.mxu0 0.0
  %3583 = vmatprep.subr.mxu0 0.0
  %3584 = vmatpush1.msra.mxu0 0.0
  %3585 = vmatprep.subr.mxu0 0.0
  %3586 = vmatpush1.msra.mxu0 0.0
  %3587 = vmatprep.subr.mxu0 0.0
  %3588 = vmatpush1.msra.mxu0 0.0
  %3589 = vmatprep.subr.mxu0 0.0
  %3590 = vmatpush1.msra.mxu0 0.0
  %3591 = vmatprep.subr.mxu0 0.0
  %3592 = vmatpush1.msra.mxu0 0.0
  %3593 = vmatprep.subr.mxu0 0.0
  %3594 = vmatpush1.msra.mxu0 0.0
  %3595 = vmatprep.subr.mxu0 0.0
  %3596 = vmatpush1.msra.mxu0 0.0
  %3597 = vmatprep.subr.mxu0 0.0
  %3598 = vmatpush1.msra.mxu0 0.0
  %3599 = vmatprep.subr.mxu0 0.0
  %3600 = vmatpush1.msra.mxu0 0.0
  %3601 = vmatprep.subr.mxu0 0.0
  %3602 = vmatpush1.msra.mxu0 0.0
  %3603 = vmatprep.subr.mxu0 0.0
  %3604 = vmatpush1.msra.mxu0 0.0
  %3605 = vmatprep.subr.mxu0 0.0
  %3606 = vmatpush1.msra.mxu0 0.0
  %3607 = vmatprep.subr.mxu0 0.0
  %3608 = vmatpush1.msra.mxu0 0.0
  %3609 = vmatprep.subr.mxu0 0.0
  %3610 = vmatpush1.msra.mxu0 0.0
  %3611 = vmatprep.subr.mxu0 0.0
  %3612 = vmatpush1.msra.mxu0 0.0
  %3613 = vmatprep.subr.mxu0 0.0
  %3614 = vmatpush1.msra.mxu0 0.0
  %3615 = vmatprep.subr.mxu0 0.0
  %3616 = vmatpush1.msra.mxu0 0.0
  %3617 = vmatprep.subr.mxu0 0.0
  %3618 = vmatpush1.msra.mxu0 0.0
  %3619 = vmatprep.subr.mxu0 0.0
  %3620 = vmatpush1.msra.mxu0 0.0
  %3621 = vmatprep.subr.mxu0 0.0
  %3622 = vmatpush1.msra.mxu0 0.0
  %3623 = vmatprep.subr.mxu0 0.0
  %3624 = vmatpush1.msra.mxu0 0.0
  %3625 = vmatprep.subr.mxu0 0.0
  %3626 = vmatpush1.msra.mxu0 0.0
  %3627 = vmatprep.subr.mxu0 0.0
  %3628 = vmatpush1.msra.mxu0 0.0
  %3629 = vmatprep.subr.mxu0 0.0
  %3630 = vmatpush1.msra.mxu0 0.0
  %3631 = vmatprep.subr.mxu0 0.0
  %3632 = vmatpush1.msra.mxu0 0.0
  %3633 = vmatprep.subr.mxu0 0.0
  %3634 = vmatpush1.msra.mxu0 0.0
  %3635 = vmatprep.subr.mxu0 0.0
  %3636 = vmatpush1.msra.mxu0 0.0
  %3637 = vmatprep.subr.mxu0 0.0
  %3638 = vmatpush1.msra.mxu0 0.0
  %3639 = vmatprep.subr.mxu0 0.0
  %3640 = vmatpush1.msra.mxu0 0.0
  %3641 = vmatprep.subr.mxu0 0.0
  %3642 = vmatpush1.msra.mxu0 0.0
  %3643 = vmatprep.mubr.f32.mxu0 0.0
  %3644 = vmatmul.mubr.f32.gmra.mrb[0].mxu0 %v3556
  %v3645 = vpop.f32.mrb[0].mxu0
  %v3646 = vadd.f32 %v3447, %v3645
  %v3647 = vpop.f32.mrb[0].mxu0
  %3648 = vmatprep.mubr.f32.mxu0 0.0
  %3649 = vmatmul.mubr.f32.gmra.mrb[0].mxu0 %v3559
  %v3650 = vpop.f32.mrb[0].mxu0
  %v3651 = vadd.f32 %v3448, %v3650
  %v3652 = vpop.f32.mrb[0].mxu0
  %3653 = vmatprep.mubr.f32.mxu0 0.0
  %3654 = vmatmul.mubr.f32.gmra.mrb[0].mxu0 %v3562
  %v3655 = vpop.f32.mrb[0].mxu0
  %v3656 = vadd.f32 %v3449, %v3655
  %v3657 = vpop.f32.mrb[0].mxu0
  %3658 = vmatprep.mubr.f32.mxu0 0.0
  %3659 = vmatmul.mubr.f32.gmra.mrb[0].mxu0 %v3565
  %v3660 = vpop.f32.mrb[0].mxu0
  %v3661 = vadd.f32 %v3450, %v3660
  %v3662 = vpop.f32.mrb[0].mxu0
  %3663 = vmatprep.mubr.f32.mxu0 0.0
  %3664 = vmatmul.mubr.f32.gmra.mrb[0].mxu0 %v3568
  %v3665 = vpop.f32.mrb[0].mxu0
  %v3666 = vadd.f32 %v3451, %v3665
  %v3667 = vpop.f32.mrb[0].mxu0
  %3668 = vmatprep.mubr.f32.mxu0 0.0
  %3669 = vmatmul.mubr.f32.gmra.mrb[0].mxu0 %v3571
  %v3670 = vpop.f32.mrb[0].mxu0
  %v3671 = vadd.f32 %v3452, %v3670
  %v3672 = vpop.f32.mrb[0].mxu0
  %3673 = vmatprep.mubr.f32.mxu0 0.0
  %3674 = vmatmul.mubr.f32.gmra.mrb[0].mxu0 %v3574
  %v3675 = vpop.f32.mrb[0].mxu0
  %v3676 = vadd.f32 %v3453, %v3675
  %v3677 = vpop.f32.mrb[0].mxu0
  %3678 = vmatprep.mubr.f32.mxu0 0.0
  %3679 = vmatmul.mubr.f32.gmra.mrb[0].mxu0 %v3577
  %v3680 = vpop.f32.mrb[0].mxu0
  %v3681 = vadd.f32 %v3454, %v3680
  %v3682 = vpop.f32.mrb[0].mxu0
  %3683 = vdwg.mxu0
  %v3684 = vxor.u32 %v3646, 2147483648
  %v3685 = vxor.u32 %v3651, 2147483648
  %v3686 = vxor.u32 %v3656, 2147483648
  %v3687 = vxor.u32 %v3661, 2147483648
  %v3688 = vxor.u32 %v3666, 2147483648
  %v3689 = vxor.u32 %v3671, 2147483648
  %v3690 = vxor.u32 %v3676, 2147483648
  %v3691 = vxor.u32 %v3681, 2147483648
  %v3692 = vmul.f32 %v3684, 1.442695
  %v3693 = vpow.pop %v3692
  %v3694 = vmul.f32 %v3685, 1.442695
  %v3695 = vpow.pop %v3694
  %v3696 = vmul.f32 %v3686, 1.442695
  %v3697 = vpow.pop %v3696
  %v3698 = vmul.f32 %v3687, 1.442695
  %v3699 = vpow.pop %v3698
  %v3700 = vmul.f32 %v3688, 1.442695
  %v3701 = vpow.pop %v3700
  %v3702 = vmul.f32 %v3689, 1.442695
  %v3703 = vpow.pop %v3702
  %v3704 = vmul.f32 %v3690, 1.442695
  %v3705 = vpow.pop %v3704
  %v3706 = vmul.f32 %v3691, 1.442695
  %v3707 = vpow.pop %v3706
  %v3708 = vadd.f32 %v3693, 1.0
  %v3709 = vadd.f32 %v3695, 1.0
  %v3710 = vadd.f32 %v3697, 1.0
  %v3711 = vadd.f32 %v3699, 1.0
  %v3712 = vadd.f32 %v3701, 1.0
  %v3713 = vadd.f32 %v3703, 1.0
  %v3714 = vadd.f32 %v3705, 1.0
  %v3715 = vadd.f32 %v3707, 1.0
  %v3716 = vrcp.pop %v3708
  %v3717 = vmul.f32 1.0, %v3716
  %v3718 = vrcp.pop %v3709
  %v3719 = vmul.f32 1.0, %v3718
  %v3720 = vrcp.pop %v3710
  %v3721 = vmul.f32 1.0, %v3720
  %v3722 = vrcp.pop %v3711
  %v3723 = vmul.f32 1.0, %v3722
  %v3724 = vrcp.pop %v3712
  %v3725 = vmul.f32 1.0, %v3724
  %v3726 = vrcp.pop %v3713
  %v3727 = vmul.f32 1.0, %v3726
  %v3728 = vrcp.pop %v3714
  %v3729 = vmul.f32 1.0, %v3728
  %v3730 = vrcp.pop %v3715
  %v3731 = vmul.f32 1.0, %v3730
  %3733 = vset.pattern.permute.xlu0 0
  %3734 = vperm.xlu0 %3733, %v3717
  %v3735 = vpop.permute.xlu0 %3734
  %3738 = vset.pattern.permute.xlu0 0
  %3739 = vperm.xlu0 %3738, %v3719
  %v3740 = vpop.permute.xlu0 %3739
  %3743 = vset.pattern.permute.xlu0 0
  %3744 = vperm.xlu0 %3743, %v3721
  %v3745 = vpop.permute.xlu0 %3744
  %3748 = vset.pattern.permute.xlu0 0
  %3749 = vperm.xlu0 %3748, %v3723
  %v3750 = vpop.permute.xlu0 %3749
  %3753 = vset.pattern.permute.xlu0 0
  %3754 = vperm.xlu0 %3753, %v3725
  %v3755 = vpop.permute.xlu0 %3754
  %3758 = vset.pattern.permute.xlu0 0
  %3759 = vperm.xlu0 %3758, %v3727
  %v3760 = vpop.permute.xlu0 %3759
  %3763 = vset.pattern.permute.xlu0 0
  %3764 = vperm.xlu0 %3763, %v3729
  %v3765 = vpop.permute.xlu0 %3764
  %3768 = vset.pattern.permute.xlu0 0
  %3769 = vperm.xlu0 %3768, %v3731
  %v3770 = vpop.permute.xlu0 %3769
  %v3772 = vmul.f32 %v3171, %v3735
  %v3773 = vmul.f32 %v3175, %v3740
  %v3774 = vmul.f32 %v3179, %v3745
  %v3775 = vmul.f32 %v3183, %v3750
  %v3776 = vmul.f32 %v3187, %v3755
  %v3777 = vmul.f32 %v3191, %v3760
  %v3778 = vmul.f32 %v3195, %v3765
  %v3779 = vmul.f32 %v3199, %v3770
  %v3780 = vadd.f32 %v3772, %v3326
  %v3781 = vadd.f32 %v3773, %v3330
  %v3782 = vadd.f32 %v3774, %v3336
  %v3783 = vadd.f32 %v3775, %v3340
  %v3784 = vadd.f32 %v3776, %v3346
  %v3785 = vadd.f32 %v3777, %v3350
  %v3786 = vadd.f32 %v3778, %v3356
  %v3787 = vadd.f32 %v3779, %v3360
  %v3788 = vmax.f32 %v3780, 0.0
  %v3789 = vmax.f32 %v3781, 0.0
  %v3790 = vmax.f32 %v3782, 0.0
  %v3791 = vmax.f32 %v3783, 0.0
  %v3792 = vmax.f32 %v3784, 0.0
  %v3793 = vmax.f32 %v3785, 0.0
  %v3794 = vmax.f32 %v3786, 0.0
  %v3795 = vmax.f32 %v3787, 0.0
  %3796 = vst [vmem:[%s13] sm:$0xff] %v3788
  %3797 = vst [vmem:[%s13 + $0x20] sm:$0xff] %v3789
  %3798 = vst [vmem:[%s13 + $0x40] sm:$0xff] %v3790
  %3799 = vst [vmem:[%s13 + $0x60] sm:$0xff] %v3791
  %3800 = vst [vmem:[%s13 + $0x80] sm:$0xff] %v3792
  %3801 = vst [vmem:[%s13 + $0xa0] sm:$0xff] %v3793
  %3802 = vst [vmem:[%s13 + $0xc0] sm:$0xff] %v3794
  %3803 = vst [vmem:[%s13 + $0xe0] sm:$0xff] %v3795
  %3804 = vadd.xlane.f32.xlu0 %v3172
  %v3805 = vpop.xlane.xlu0 %3804
  %3806 = vadd.xlane.f32.xlu0 %v3176
  %v3807 = vpop.xlane.xlu0 %3806
  %3808 = vadd.xlane.f32.xlu0 %v3180
  %v3809 = vpop.xlane.xlu0 %3808
  %3810 = vadd.xlane.f32.xlu0 %v3184
  %v3811 = vpop.xlane.xlu0 %3810
  %3812 = vadd.xlane.f32.xlu0 %v3188
  %v3813 = vpop.xlane.xlu0 %3812
  %3814 = vadd.xlane.f32.xlu0 %v3192
  %v3815 = vpop.xlane.xlu0 %3814
  %3816 = vadd.xlane.f32.xlu0 %v3196
  %v3817 = vpop.xlane.xlu0 %3816
  %3818 = vadd.xlane.f32.xlu0 %v3200
  %v3819 = vpop.xlane.xlu0 %3818
  %v3820 = vmul.f32 %v3805, %v3471
  %v3821 = vmul.f32 %v3807, %v3471
  %v3822 = vmul.f32 %v3809, %v3471
  %v3823 = vmul.f32 %v3811, %v3471
  %v3824 = vmul.f32 %v3813, %v3471
  %v3825 = vmul.f32 %v3815, %v3471
  %v3826 = vmul.f32 %v3817, %v3471
  %v3827 = vmul.f32 %v3819, %v3471
  %3828 = vmatprep.subr.mxu0 0.0
  %3829 = vmatpush1.msra.mxu0 %v3820
  %3830 = vmatprep.subr.mxu0 0.0
  %3831 = vmatpush1.msra.mxu0 %v3821
  %3832 = vmatprep.subr.mxu0 0.0
  %3833 = vmatpush1.msra.mxu0 %v3822
  %3834 = vmatprep.subr.mxu0 0.0
  %3835 = vmatpush1.msra.mxu0 %v3823
  %3836 = vmatprep.subr.mxu0 0.0
  %3837 = vmatpush1.msra.mxu0 %v3824
  %3838 = vmatprep.subr.mxu0 0.0
  %3839 = vmatpush1.msra.mxu0 %v3825
  %3840 = vmatprep.subr.mxu0 0.0
  %3841 = vmatpush1.msra.mxu0 %v3826
  %3842 = vmatprep.subr.mxu0 0.0
  %3843 = vmatpush1.msra.mxu0 %v3827
  %3844 = vmatprep.subr.mxu0 0.0
  %3845 = vmatpush1.msra.mxu0 0.0
  %3846 = vmatprep.subr.mxu0 0.0
  %3847 = vmatpush1.msra.mxu0 0.0
  %3848 = vmatprep.subr.mxu0 0.0
  %3849 = vmatpush1.msra.mxu0 0.0
  %3850 = vmatprep.subr.mxu0 0.0
  %3851 = vmatpush1.msra.mxu0 0.0
  %3852 = vmatprep.subr.mxu0 0.0
  %3853 = vmatpush1.msra.mxu0 0.0
  %3854 = vmatprep.subr.mxu0 0.0
  %3855 = vmatpush1.msra.mxu0 0.0
  %3856 = vmatprep.subr.mxu0 0.0
  %3857 = vmatpush1.msra.mxu0 0.0
  %3858 = vmatprep.subr.mxu0 0.0
  %3859 = vmatpush1.msra.mxu0 0.0
  %3860 = vmatprep.subr.mxu0 0.0
  %3861 = vmatpush1.msra.mxu0 0.0
  %3862 = vmatprep.subr.mxu0 0.0
  %3863 = vmatpush1.msra.mxu0 0.0
  %3864 = vmatprep.subr.mxu0 0.0
  %3865 = vmatpush1.msra.mxu0 0.0
  %3866 = vmatprep.subr.mxu0 0.0
  %3867 = vmatpush1.msra.mxu0 0.0
  %3868 = vmatprep.subr.mxu0 0.0
  %3869 = vmatpush1.msra.mxu0 0.0
  %3870 = vmatprep.subr.mxu0 0.0
  %3871 = vmatpush1.msra.mxu0 0.0
  %3872 = vmatprep.subr.mxu0 0.0
  %3873 = vmatpush1.msra.mxu0 0.0
  %3874 = vmatprep.subr.mxu0 0.0
  %3875 = vmatpush1.msra.mxu0 0.0
  %3876 = vmatprep.subr.mxu0 0.0
  %3877 = vmatpush1.msra.mxu0 0.0
  %3878 = vmatprep.subr.mxu0 0.0
  %3879 = vmatpush1.msra.mxu0 0.0
  %3880 = vmatprep.subr.mxu0 0.0
  %3881 = vmatpush1.msra.mxu0 0.0
  %3882 = vmatprep.subr.mxu0 0.0
  %3883 = vmatpush1.msra.mxu0 0.0
  %3884 = vmatprep.subr.mxu0 0.0
  %3885 = vmatpush1.msra.mxu0 0.0
  %3886 = vmatprep.subr.mxu0 0.0
  %3887 = vmatpush1.msra.mxu0 0.0
  %3888 = vmatprep.subr.mxu0 0.0
  %3889 = vmatpush1.msra.mxu0 0.0
  %3890 = vmatprep.subr.mxu0 0.0
  %3891 = vmatpush1.msra.mxu0 0.0
  %3892 = vmatprep.mubr.f32.mxu0 0.0
  %3893 = vmatmul.mubr.f32.gmra.mrb[0].mxu0 %v3481
  %v3894 = vpop.f32.mrb[0].mxu0
  %v3895 = vadd.f32 %v3438, %v3894
  %v3896 = vpop.f32.mrb[0].mxu0
  %3897 = vdwg.mxu0
  %v3898 = vmax.f32 %v3895, 0.0
  %3899 = vmatprep.subr.mxu0 0.0
  %3900 = vmatpush1.msra.mxu0 %v3898
  %3901 = vmatprep.subr.mxu0 0.0
  %3902 = vmatpush1.msra.mxu0 0.0
  %3903 = vmatprep.subr.mxu0 0.0
  %3904 = vmatpush1.msra.mxu0 0.0
  %3905 = vmatprep.subr.mxu0 0.0
  %3906 = vmatpush1.msra.mxu0 0.0
  %3907 = vmatprep.subr.mxu0 0.0
  %3908 = vmatpush1.msra.mxu0 0.0
  %3909 = vmatprep.subr.mxu0 0.0
  %3910 = vmatpush1.msra.mxu0 0.0
  %3911 = vmatprep.subr.mxu0 0.0
  %3912 = vmatpush1.msra.mxu0 0.0
  %3913 = vmatprep.subr.mxu0 0.0
  %3914 = vmatpush1.msra.mxu0 0.0
  %3915 = vmatprep.subr.mxu0 0.0
  %3916 = vmatpush1.msra.mxu0 0.0
  %3917 = vmatprep.subr.mxu0 0.0
  %3918 = vmatpush1.msra.mxu0 0.0
  %3919 = vmatprep.subr.mxu0 0.0
  %3920 = vmatpush1.msra.mxu0 0.0
  %3921 = vmatprep.subr.mxu0 0.0
  %3922 = vmatpush1.msra.mxu0 0.0
  %3923 = vmatprep.subr.mxu0 0.0
  %3924 = vmatpush1.msra.mxu0 0.0
  %3925 = vmatprep.subr.mxu0 0.0
  %3926 = vmatpush1.msra.mxu0 0.0
  %3927 = vmatprep.subr.mxu0 0.0
  %3928 = vmatpush1.msra.mxu0 0.0
  %3929 = vmatprep.subr.mxu0 0.0
  %3930 = vmatpush1.msra.mxu0 0.0
  %3931 = vmatprep.subr.mxu0 0.0
  %3932 = vmatpush1.msra.mxu0 0.0
  %3933 = vmatprep.subr.mxu0 0.0
  %3934 = vmatpush1.msra.mxu0 0.0
  %3935 = vmatprep.subr.mxu0 0.0
  %3936 = vmatpush1.msra.mxu0 0.0
  %3937 = vmatprep.subr.mxu0 0.0
  %3938 = vmatpush1.msra.mxu0 0.0
  %3939 = vmatprep.subr.mxu0 0.0
  %3940 = vmatpush1.msra.mxu0 0.0
  %3941 = vmatprep.subr.mxu0 0.0
  %3942 = vmatpush1.msra.mxu0 0.0
  %3943 = vmatprep.subr.mxu0 0.0
  %3944 = vmatpush1.msra.mxu0 0.0
  %3945 = vmatprep.subr.mxu0 0.0
  %3946 = vmatpush1.msra.mxu0 0.0
  %3947 = vmatprep.subr.mxu0 0.0
  %3948 = vmatpush1.msra.mxu0 0.0
  %3949 = vmatprep.subr.mxu0 0.0
  %3950 = vmatpush1.msra.mxu0 0.0
  %3951 = vmatprep.subr.mxu0 0.0
  %3952 = vmatpush1.msra.mxu0 0.0
  %3953 = vmatprep.subr.mxu0 0.0
  %3954 = vmatpush1.msra.mxu0 0.0
  %3955 = vmatprep.subr.mxu0 0.0
  %3956 = vmatpush1.msra.mxu0 0.0
  %3957 = vmatprep.subr.mxu0 0.0
  %3958 = vmatpush1.msra.mxu0 0.0
  %3959 = vmatprep.subr.mxu0 0.0
  %3960 = vmatpush1.msra.mxu0 0.0
  %3961 = vmatprep.subr.mxu0 0.0
  %3962 = vmatpush1.msra.mxu0 0.0
  %3963 = vmatprep.mubr.f32.mxu0 0.0
  %3964 = vmatmul.mubr.f32.gmra.mrb[0].mxu0 %v3556
  %v3965 = vpop.f32.mrb[0].mxu0
  %v3966 = vadd.f32 %v3447, %v3965
  %v3967 = vpop.f32.mrb[0].mxu0
  %3968 = vmatprep.mubr.f32.mxu0 0.0
  %3969 = vmatmul.mubr.f32.gmra.mrb[0].mxu0 %v3559
  %v3970 = vpop.f32.mrb[0].mxu0
  %v3971 = vadd.f32 %v3448, %v3970
  %v3972 = vpop.f32.mrb[0].mxu0
  %3973 = vmatprep.mubr.f32.mxu0 0.0
  %3974 = vmatmul.mubr.f32.gmra.mrb[0].mxu0 %v3562
  %v3975 = vpop.f32.mrb[0].mxu0
  %v3976 = vadd.f32 %v3449, %v3975
  %v3977 = vpop.f32.mrb[0].mxu0
  %3978 = vmatprep.mubr.f32.mxu0 0.0
  %3979 = vmatmul.mubr.f32.gmra.mrb[0].mxu0 %v3565
  %v3980 = vpop.f32.mrb[0].mxu0
  %v3981 = vadd.f32 %v3450, %v3980
  %v3982 = vpop.f32.mrb[0].mxu0
  %3983 = vmatprep.mubr.f32.mxu0 0.0
  %3984 = vmatmul.mubr.f32.gmra.mrb[0].mxu0 %v3568
  %v3985 = vpop.f32.mrb[0].mxu0
  %v3986 = vadd.f32 %v3451, %v3985
  %v3987 = vpop.f32.mrb[0].mxu0
  %3988 = vmatprep.mubr.f32.mxu0 0.0
  %3989 = vmatmul.mubr.f32.gmra.mrb[0].mxu0 %v3571
  %v3990 = vpop.f32.mrb[0].mxu0
  %v3991 = vadd.f32 %v3452, %v3990
  %v3992 = vpop.f32.mrb[0].mxu0
  %3993 = vmatprep.mubr.f32.mxu0 0.0
  %3994 = vmatmul.mubr.f32.gmra.mrb[0].mxu0 %v3574
  %v3995 = vpop.f32.mrb[0].mxu0
  %v3996 = vadd.f32 %v3453, %v3995
  %v3997 = vpop.f32.mrb[0].mxu0
  %3998 = vmatprep.mubr.f32.mxu0 0.0
  %3999 = vmatmul.mubr.f32.gmra.mrb[0].mxu0 %v3577
  %v4000 = vpop.f32.mrb[0].mxu0
  %v4001 = vadd.f32 %v3454, %v4000
  %v4002 = vpop.f32.mrb[0].mxu0
  %4003 = vdwg.mxu0
  %v4004 = vxor.u32 %v3966, 2147483648
  %v4005 = vxor.u32 %v3971, 2147483648
  %v4006 = vxor.u32 %v3976, 2147483648
  %v4007 = vxor.u32 %v3981, 2147483648
  %v4008 = vxor.u32 %v3986, 2147483648
  %v4009 = vxor.u32 %v3991, 2147483648
  %v4010 = vxor.u32 %v3996, 2147483648
  %v4011 = vxor.u32 %v4001, 2147483648
  %v4012 = vmul.f32 %v4004, 1.442695
  %v4013 = vpow.pop %v4012
  %v4014 = vmul.f32 %v4005, 1.442695
  %v4015 = vpow.pop %v4014
  %v4016 = vmul.f32 %v4006, 1.442695
  %v4017 = vpow.pop %v4016
  %v4018 = vmul.f32 %v4007, 1.442695
  %v4019 = vpow.pop %v4018
  %v4020 = vmul.f32 %v4008, 1.442695
  %v4021 = vpow.pop %v4020
  %v4022 = vmul.f32 %v4009, 1.442695
  %v4023 = vpow.pop %v4022
  %v4024 = vmul.f32 %v4010, 1.442695
  %v4025 = vpow.pop %v4024
  %v4026 = vmul.f32 %v4011, 1.442695
  %v4027 = vpow.pop %v4026
  %v4028 = vadd.f32 %v4013, 1.0
  %v4029 = vadd.f32 %v4015, 1.0
  %v4030 = vadd.f32 %v4017, 1.0
  %v4031 = vadd.f32 %v4019, 1.0
  %v4032 = vadd.f32 %v4021, 1.0
  %v4033 = vadd.f32 %v4023, 1.0
  %v4034 = vadd.f32 %v4025, 1.0
  %v4035 = vadd.f32 %v4027, 1.0
  %v4036 = vrcp.pop %v4028
  %v4037 = vmul.f32 1.0, %v4036
  %v4038 = vrcp.pop %v4029
  %v4039 = vmul.f32 1.0, %v4038
  %v4040 = vrcp.pop %v4030
  %v4041 = vmul.f32 1.0, %v4040
  %v4042 = vrcp.pop %v4031
  %v4043 = vmul.f32 1.0, %v4042
  %v4044 = vrcp.pop %v4032
  %v4045 = vmul.f32 1.0, %v4044
  %v4046 = vrcp.pop %v4033
  %v4047 = vmul.f32 1.0, %v4046
  %v4048 = vrcp.pop %v4034
  %v4049 = vmul.f32 1.0, %v4048
  %v4050 = vrcp.pop %v4035
  %v4051 = vmul.f32 1.0, %v4050
  %4053 = vset.pattern.permute.xlu0 0
  %4054 = vperm.xlu0 %4053, %v4037
  %v4055 = vpop.permute.xlu0 %4054
  %4058 = vset.pattern.permute.xlu0 0
  %4059 = vperm.xlu0 %4058, %v4039
  %v4060 = vpop.permute.xlu0 %4059
  %4063 = vset.pattern.permute.xlu0 0
  %4064 = vperm.xlu0 %4063, %v4041
  %v4065 = vpop.permute.xlu0 %4064
  %4068 = vset.pattern.permute.xlu0 0
  %4069 = vperm.xlu0 %4068, %v4043
  %v4070 = vpop.permute.xlu0 %4069
  %4073 = vset.pattern.permute.xlu0 0
  %4074 = vperm.xlu0 %4073, %v4045
  %v4075 = vpop.permute.xlu0 %4074
  %4078 = vset.pattern.permute.xlu0 0
  %4079 = vperm.xlu0 %4078, %v4047
  %v4080 = vpop.permute.xlu0 %4079
  %4083 = vset.pattern.permute.xlu0 0
  %4084 = vperm.xlu0 %4083, %v4049
  %v4085 = vpop.permute.xlu0 %4084
  %4088 = vset.pattern.permute.xlu0 0
  %4089 = vperm.xlu0 %4088, %v4051
  %v4090 = vpop.permute.xlu0 %4089
  %v4092 = vmul.f32 %v3172, %v4055
  %v4093 = vmul.f32 %v3176, %v4060
  %v4094 = vmul.f32 %v3180, %v4065
  %v4095 = vmul.f32 %v3184, %v4070
  %v4096 = vmul.f32 %v3188, %v4075
  %v4097 = vmul.f32 %v3192, %v4080
  %v4098 = vmul.f32 %v3196, %v4085
  %v4099 = vmul.f32 %v3200, %v4090
  %v4100 = vadd.f32 %v4092, %v3328
  %v4101 = vadd.f32 %v4093, %v3332
  %v4102 = vadd.f32 %v4094, %v3338
  %v4103 = vadd.f32 %v4095, %v3342
  %v4104 = vadd.f32 %v4096, %v3348
  %v4105 = vadd.f32 %v4097, %v3352
  %v4106 = vadd.f32 %v4098, %v3358
  %v4107 = vadd.f32 %v4099, %v3362
  %v4108 = vmax.f32 %v4100, 0.0
  %v4109 = vmax.f32 %v4101, 0.0
  %v4110 = vmax.f32 %v4102, 0.0
  %v4111 = vmax.f32 %v4103, 0.0
  %v4112 = vmax.f32 %v4104, 0.0
  %v4113 = vmax.f32 %v4105, 0.0
  %v4114 = vmax.f32 %v4106, 0.0
  %v4115 = vmax.f32 %v4107, 0.0
  %4116 = vst [vmem:[%s13 + $0x8] sm:$0xff] %v4108
  %4117 = vst [vmem:[%s13 + $0x28] sm:$0xff] %v4109
  %4118 = vst [vmem:[%s13 + $0x48] sm:$0xff] %v4110
  %4119 = vst [vmem:[%s13 + $0x68] sm:$0xff] %v4111
  %4120 = vst [vmem:[%s13 + $0x88] sm:$0xff] %v4112
  %4121 = vst [vmem:[%s13 + $0xa8] sm:$0xff] %v4113
  %4122 = vst [vmem:[%s13 + $0xc8] sm:$0xff] %v4114
  %4123 = vst [vmem:[%s13 + $0xe8] sm:$0xff] %v4115
  %4124 = vadd.xlane.f32.xlu0 %v3173
  %v4125 = vpop.xlane.xlu0 %4124
  %4126 = vadd.xlane.f32.xlu0 %v3177
  %v4127 = vpop.xlane.xlu0 %4126
  %4128 = vadd.xlane.f32.xlu0 %v3181
  %v4129 = vpop.xlane.xlu0 %4128
  %4130 = vadd.xlane.f32.xlu0 %v3185
  %v4131 = vpop.xlane.xlu0 %4130
  %4132 = vadd.xlane.f32.xlu0 %v3189
  %v4133 = vpop.xlane.xlu0 %4132
  %4134 = vadd.xlane.f32.xlu0 %v3193
  %v4135 = vpop.xlane.xlu0 %4134
  %4136 = vadd.xlane.f32.xlu0 %v3197
  %v4137 = vpop.xlane.xlu0 %4136
  %4138 = vadd.xlane.f32.xlu0 %v3201
  %v4139 = vpop.xlane.xlu0 %4138
  %v4140 = vmul.f32 %v4125, %v3471
  %v4141 = vmul.f32 %v4127, %v3471
  %v4142 = vmul.f32 %v4129, %v3471
  %v4143 = vmul.f32 %v4131, %v3471
  %v4144 = vmul.f32 %v4133, %v3471
  %v4145 = vmul.f32 %v4135, %v3471
  %v4146 = vmul.f32 %v4137, %v3471
  %v4147 = vmul.f32 %v4139, %v3471
  %4148 = vmatprep.subr.mxu0 0.0
  %4149 = vmatpush1.msra.mxu0 %v4140
  %4150 = vmatprep.subr.mxu0 0.0
  %4151 = vmatpush1.msra.mxu0 %v4141
  %4152 = vmatprep.subr.mxu0 0.0
  %4153 = vmatpush1.msra.mxu0 %v4142
  %4154 = vmatprep.subr.mxu0 0.0
  %4155 = vmatpush1.msra.mxu0 %v4143
  %4156 = vmatprep.subr.mxu0 0.0
  %4157 = vmatpush1.msra.mxu0 %v4144
  %4158 = vmatprep.subr.mxu0 0.0
  %4159 = vmatpush1.msra.mxu0 %v4145
  %4160 = vmatprep.subr.mxu0 0.0
  %4161 = vmatpush1.msra.mxu0 %v4146
  %4162 = vmatprep.subr.mxu0 0.0
  %4163 = vmatpush1.msra.mxu0 %v4147
  %4164 = vmatprep.subr.mxu0 0.0
  %4165 = vmatpush1.msra.mxu0 0.0
  %4166 = vmatprep.subr.mxu0 0.0
  %4167 = vmatpush1.msra.mxu0 0.0
  %4168 = vmatprep.subr.mxu0 0.0
  %4169 = vmatpush1.msra.mxu0 0.0
  %4170 = vmatprep.subr.mxu0 0.0
  %4171 = vmatpush1.msra.mxu0 0.0
  %4172 = vmatprep.subr.mxu0 0.0
  %4173 = vmatpush1.msra.mxu0 0.0
  %4174 = vmatprep.subr.mxu0 0.0
  %4175 = vmatpush1.msra.mxu0 0.0
  %4176 = vmatprep.subr.mxu0 0.0
  %4177 = vmatpush1.msra.mxu0 0.0
  %4178 = vmatprep.subr.mxu0 0.0
  %4179 = vmatpush1.msra.mxu0 0.0
  %4180 = vmatprep.subr.mxu0 0.0
  %4181 = vmatpush1.msra.mxu0 0.0
  %4182 = vmatprep.subr.mxu0 0.0
  %4183 = vmatpush1.msra.mxu0 0.0
  %4184 = vmatprep.subr.mxu0 0.0
  %4185 = vmatpush1.msra.mxu0 0.0
  %4186 = vmatprep.subr.mxu0 0.0
  %4187 = vmatpush1.msra.mxu0 0.0
  %4188 = vmatprep.subr.mxu0 0.0
  %4189 = vmatpush1.msra.mxu0 0.0
  %4190 = vmatprep.subr.mxu0 0.0
  %4191 = vmatpush1.msra.mxu0 0.0
  %4192 = vmatprep.subr.mxu0 0.0
  %4193 = vmatpush1.msra.mxu0 0.0
  %4194 = vmatprep.subr.mxu0 0.0
  %4195 = vmatpush1.msra.mxu0 0.0
  %4196 = vmatprep.subr.mxu0 0.0
  %4197 = vmatpush1.msra.mxu0 0.0
  %4198 = vmatprep.subr.mxu0 0.0
  %4199 = vmatpush1.msra.mxu0 0.0
  %4200 = vmatprep.subr.mxu0 0.0
  %4201 = vmatpush1.msra.mxu0 0.0
  %4202 = vmatprep.subr.mxu0 0.0
  %4203 = vmatpush1.msra.mxu0 0.0
  %4204 = vmatprep.subr.mxu0 0.0
  %4205 = vmatpush1.msra.mxu0 0.0
  %4206 = vmatprep.subr.mxu0 0.0
  %4207 = vmatpush1.msra.mxu0 0.0
  %4208 = vmatprep.subr.mxu0 0.0
  %4209 = vmatpush1.msra.mxu0 0.0
  %4210 = vmatprep.subr.mxu0 0.0
  %4211 = vmatpush1.msra.mxu0 0.0
  %4212 = vmatprep.mubr.f32.mxu0 0.0
  %4213 = vmatmul.mubr.f32.gmra.mrb[0].mxu0 %v3481
  %v4214 = vpop.f32.mrb[0].mxu0
  %v4215 = vadd.f32 %v3438, %v4214
  %v4216 = vpop.f32.mrb[0].mxu0
  %4217 = vdwg.mxu0
  %v4218 = vmax.f32 %v4215, 0.0
  %4219 = vmatprep.subr.mxu0 0.0
  %4220 = vmatpush1.msra.mxu0 %v4218
  %4221 = vmatprep.subr.mxu0 0.0
  %4222 = vmatpush1.msra.mxu0 0.0
  %4223 = vmatprep.subr.mxu0 0.0
  %4224 = vmatpush1.msra.mxu0 0.0
  %4225 = vmatprep.subr.mxu0 0.0
  %4226 = vmatpush1.msra.mxu0 0.0
  %4227 = vmatprep.subr.mxu0 0.0
  %4228 = vmatpush1.msra.mxu0 0.0
  %4229 = vmatprep.subr.mxu0 0.0
  %4230 = vmatpush1.msra.mxu0 0.0
  %4231 = vmatprep.subr.mxu0 0.0
  %4232 = vmatpush1.msra.mxu0 0.0
  %4233 = vmatprep.subr.mxu0 0.0
  %4234 = vmatpush1.msra.mxu0 0.0
  %4235 = vmatprep.subr.mxu0 0.0
  %4236 = vmatpush1.msra.mxu0 0.0
  %4237 = vmatprep.subr.mxu0 0.0
  %4238 = vmatpush1.msra.mxu0 0.0
  %4239 = vmatprep.subr.mxu0 0.0
  %4240 = vmatpush1.msra.mxu0 0.0
  %4241 = vmatprep.subr.mxu0 0.0
  %4242 = vmatpush1.msra.mxu0 0.0
  %4243 = vmatprep.subr.mxu0 0.0
  %4244 = vmatpush1.msra.mxu0 0.0
  %4245 = vmatprep.subr.mxu0 0.0
  %4246 = vmatpush1.msra.mxu0 0.0
  %4247 = vmatprep.subr.mxu0 0.0
  %4248 = vmatpush1.msra.mxu0 0.0
  %4249 = vmatprep.subr.mxu0 0.0
  %4250 = vmatpush1.msra.mxu0 0.0
  %4251 = vmatprep.subr.mxu0 0.0
  %4252 = vmatpush1.msra.mxu0 0.0
  %4253 = vmatprep.subr.mxu0 0.0
  %4254 = vmatpush1.msra.mxu0 0.0
  %4255 = vmatprep.subr.mxu0 0.0
  %4256 = vmatpush1.msra.mxu0 0.0
  %4257 = vmatprep.subr.mxu0 0.0
  %4258 = vmatpush1.msra.mxu0 0.0
  %4259 = vmatprep.subr.mxu0 0.0
  %4260 = vmatpush1.msra.mxu0 0.0
  %4261 = vmatprep.subr.mxu0 0.0
  %4262 = vmatpush1.msra.mxu0 0.0
  %4263 = vmatprep.subr.mxu0 0.0
  %4264 = vmatpush1.msra.mxu0 0.0
  %4265 = vmatprep.subr.mxu0 0.0
  %4266 = vmatpush1.msra.mxu0 0.0
  %4267 = vmatprep.subr.mxu0 0.0
  %4268 = vmatpush1.msra.mxu0 0.0
  %4269 = vmatprep.subr.mxu0 0.0
  %4270 = vmatpush1.msra.mxu0 0.0
  %4271 = vmatprep.subr.mxu0 0.0
  %4272 = vmatpush1.msra.mxu0 0.0
  %4273 = vmatprep.subr.mxu0 0.0
  %4274 = vmatpush1.msra.mxu0 0.0
  %4275 = vmatprep.subr.mxu0 0.0
  %4276 = vmatpush1.msra.mxu0 0.0
  %4277 = vmatprep.subr.mxu0 0.0
  %4278 = vmatpush1.msra.mxu0 0.0
  %4279 = vmatprep.subr.mxu0 0.0
  %4280 = vmatpush1.msra.mxu0 0.0
  %4281 = vmatprep.subr.mxu0 0.0
  %4282 = vmatpush1.msra.mxu0 0.0
  %4283 = vmatprep.mubr.f32.mxu0 0.0
  %4284 = vmatmul.mubr.f32.gmra.mrb[0].mxu0 %v3556
  %v4285 = vpop.f32.mrb[0].mxu0
  %v4286 = vadd.f32 %v3447, %v4285
  %v4287 = vpop.f32.mrb[0].mxu0
  %4288 = vmatprep.mubr.f32.mxu0 0.0
  %4289 = vmatmul.mubr.f32.gmra.mrb[0].mxu0 %v3559
  %v4290 = vpop.f32.mrb[0].mxu0
  %v4291 = vadd.f32 %v3448, %v4290
  %v4292 = vpop.f32.mrb[0].mxu0
  %4293 = vmatprep.mubr.f32.mxu0 0.0
  %4294 = vmatmul.mubr.f32.gmra.mrb[0].mxu0 %v3562
  %v4295 = vpop.f32.mrb[0].mxu0
  %v4296 = vadd.f32 %v3449, %v4295
  %v4297 = vpop.f32.mrb[0].mxu0
  %4298 = vmatprep.mubr.f32.mxu0 0.0
  %4299 = vmatmul.mubr.f32.gmra.mrb[0].mxu0 %v3565
  %v4300 = vpop.f32.mrb[0].mxu0
  %v4301 = vadd.f32 %v3450, %v4300
  %v4302 = vpop.f32.mrb[0].mxu0
  %4303 = vmatprep.mubr.f32.mxu0 0.0
  %4304 = vmatmul.mubr.f32.gmra.mrb[0].mxu0 %v3568
  %v4305 = vpop.f32.mrb[0].mxu0
  %v4306 = vadd.f32 %v3451, %v4305
  %v4307 = vpop.f32.mrb[0].mxu0
  %4308 = vmatprep.mubr.f32.mxu0 0.0
  %4309 = vmatmul.mubr.f32.gmra.mrb[0].mxu0 %v3571
  %v4310 = vpop.f32.mrb[0].mxu0
  %v4311 = vadd.f32 %v3452, %v4310
  %v4312 = vpop.f32.mrb[0].mxu0
  %4313 = vmatprep.mubr.f32.mxu0 0.0
  %4314 = vmatmul.mubr.f32.gmra.mrb[0].mxu0 %v3574
  %v4315 = vpop.f32.mrb[0].mxu0
  %v4316 = vadd.f32 %v3453, %v4315
  %v4317 = vpop.f32.mrb[0].mxu0
  %4318 = vmatprep.mubr.f32.mxu0 0.0
  %4319 = vmatmul.mubr.f32.gmra.mrb[0].mxu0 %v3577
  %v4320 = vpop.f32.mrb[0].mxu0
  %v4321 = vadd.f32 %v3454, %v4320
  %v4322 = vpop.f32.mrb[0].mxu0
  %4323 = vdwg.mxu0
  %v4324 = vxor.u32 %v4286, 2147483648
  %v4325 = vxor.u32 %v4291, 2147483648
  %v4326 = vxor.u32 %v4296, 2147483648
  %v4327 = vxor.u32 %v4301, 2147483648
  %v4328 = vxor.u32 %v4306, 2147483648
  %v4329 = vxor.u32 %v4311, 2147483648
  %v4330 = vxor.u32 %v4316, 2147483648
  %v4331 = vxor.u32 %v4321, 2147483648
  %v4332 = vmul.f32 %v4324, 1.442695
  %v4333 = vpow.pop %v4332
  %v4334 = vmul.f32 %v4325, 1.442695
  %v4335 = vpow.pop %v4334
  %v4336 = vmul.f32 %v4326, 1.442695
  %v4337 = vpow.pop %v4336
  %v4338 = vmul.f32 %v4327, 1.442695
  %v4339 = vpow.pop %v4338
  %v4340 = vmul.f32 %v4328, 1.442695
  %v4341 = vpow.pop %v4340
  %v4342 = vmul.f32 %v4329, 1.442695
  %v4343 = vpow.pop %v4342
  %v4344 = vmul.f32 %v4330, 1.442695
  %v4345 = vpow.pop %v4344
  %v4346 = vmul.f32 %v4331, 1.442695
  %v4347 = vpow.pop %v4346
  %v4348 = vadd.f32 %v4333, 1.0
  %v4349 = vadd.f32 %v4335, 1.0
  %v4350 = vadd.f32 %v4337, 1.0
  %v4351 = vadd.f32 %v4339, 1.0
  %v4352 = vadd.f32 %v4341, 1.0
  %v4353 = vadd.f32 %v4343, 1.0
  %v4354 = vadd.f32 %v4345, 1.0
  %v4355 = vadd.f32 %v4347, 1.0
  %v4356 = vrcp.pop %v4348
  %v4357 = vmul.f32 1.0, %v4356
  %v4358 = vrcp.pop %v4349
  %v4359 = vmul.f32 1.0, %v4358
  %v4360 = vrcp.pop %v4350
  %v4361 = vmul.f32 1.0, %v4360
  %v4362 = vrcp.pop %v4351
  %v4363 = vmul.f32 1.0, %v4362
  %v4364 = vrcp.pop %v4352
  %v4365 = vmul.f32 1.0, %v4364
  %v4366 = vrcp.pop %v4353
  %v4367 = vmul.f32 1.0, %v4366
  %v4368 = vrcp.pop %v4354
  %v4369 = vmul.f32 1.0, %v4368
  %v4370 = vrcp.pop %v4355
  %v4371 = vmul.f32 1.0, %v4370
  %4373 = vset.pattern.permute.xlu0 0
  %4374 = vperm.xlu0 %4373, %v4357
  %v4375 = vpop.permute.xlu0 %4374
  %4378 = vset.pattern.permute.xlu0 0
  %4379 = vperm.xlu0 %4378, %v4359
  %v4380 = vpop.permute.xlu0 %4379
  %4383 = vset.pattern.permute.xlu0 0
  %4384 = vperm.xlu0 %4383, %v4361
  %v4385 = vpop.permute.xlu0 %4384
  %4388 = vset.pattern.permute.xlu0 0
  %4389 = vperm.xlu0 %4388, %v4363
  %v4390 = vpop.permute.xlu0 %4389
  %4393 = vset.pattern.permute.xlu0 0
  %4394 = vperm.xlu0 %4393, %v4365
  %v4395 = vpop.permute.xlu0 %4394
  %4398 = vset.pattern.permute.xlu0 0
  %4399 = vperm.xlu0 %4398, %v4367
  %v4400 = vpop.permute.xlu0 %4399
  %4403 = vset.pattern.permute.xlu0 0
  %4404 = vperm.xlu0 %4403, %v4369
  %v4405 = vpop.permute.xlu0 %4404
  %4408 = vset.pattern.permute.xlu0 0
  %4409 = vperm.xlu0 %4408, %v4371
  %v4410 = vpop.permute.xlu0 %4409
  %v4412 = vmul.f32 %v3173, %v4375
  %v4413 = vmul.f32 %v3177, %v4380
  %v4414 = vmul.f32 %v3181, %v4385
  %v4415 = vmul.f32 %v3185, %v4390
  %v4416 = vmul.f32 %v3189, %v4395
  %v4417 = vmul.f32 %v3193, %v4400
  %v4418 = vmul.f32 %v3197, %v4405
  %v4419 = vmul.f32 %v3201, %v4410
  %v4420 = vadd.f32 %v4412, %v3399
  %v4421 = vadd.f32 %v4413, %v3403
  %v4422 = vadd.f32 %v4414, %v3409
  %v4423 = vadd.f32 %v4415, %v3413
  %v4424 = vadd.f32 %v4416, %v3419
  %v4425 = vadd.f32 %v4417, %v3423
  %v4426 = vadd.f32 %v4418, %v3429
  %v4427 = vadd.f32 %v4419, %v3433
  %v4428 = vmax.f32 %v4420, 0.0
  %v4429 = vmax.f32 %v4421, 0.0
  %v4430 = vmax.f32 %v4422, 0.0
  %v4431 = vmax.f32 %v4423, 0.0
  %v4432 = vmax.f32 %v4424, 0.0
  %v4433 = vmax.f32 %v4425, 0.0
  %v4434 = vmax.f32 %v4426, 0.0
  %v4435 = vmax.f32 %v4427, 0.0
  %4436 = vst [vmem:[%s13 + $0x10] sm:$0xff] %v4428
  %4437 = vst [vmem:[%s13 + $0x30] sm:$0xff] %v4429
  %4438 = vst [vmem:[%s13 + $0x50] sm:$0xff] %v4430
  %4439 = vst [vmem:[%s13 + $0x70] sm:$0xff] %v4431
  %4440 = vst [vmem:[%s13 + $0x90] sm:$0xff] %v4432
  %4441 = vst [vmem:[%s13 + $0xb0] sm:$0xff] %v4433
  %4442 = vst [vmem:[%s13 + $0xd0] sm:$0xff] %v4434
  %4443 = vst [vmem:[%s13 + $0xf0] sm:$0xff] %v4435
  %4444 = vadd.xlane.f32.xlu0 %v3174
  %v4445 = vpop.xlane.xlu0 %4444
  %4446 = vadd.xlane.f32.xlu0 %v3178
  %v4447 = vpop.xlane.xlu0 %4446
  %4448 = vadd.xlane.f32.xlu0 %v3182
  %v4449 = vpop.xlane.xlu0 %4448
  %4450 = vadd.xlane.f32.xlu0 %v3186
  %v4451 = vpop.xlane.xlu0 %4450
  %4452 = vadd.xlane.f32.xlu0 %v3190
  %v4453 = vpop.xlane.xlu0 %4452
  %4454 = vadd.xlane.f32.xlu0 %v3194
  %v4455 = vpop.xlane.xlu0 %4454
  %4456 = vadd.xlane.f32.xlu0 %v3198
  %v4457 = vpop.xlane.xlu0 %4456
  %4458 = vadd.xlane.f32.xlu0 %v3202
  %v4459 = vpop.xlane.xlu0 %4458
  %v4460 = vmul.f32 %v4445, %v3471
  %v4461 = vmul.f32 %v4447, %v3471
  %v4462 = vmul.f32 %v4449, %v3471
  %v4463 = vmul.f32 %v4451, %v3471
  %v4464 = vmul.f32 %v4453, %v3471
  %v4465 = vmul.f32 %v4455, %v3471
  %v4466 = vmul.f32 %v4457, %v3471
  %v4467 = vmul.f32 %v4459, %v3471
  %4468 = vmatprep.subr.mxu0 0.0
  %4469 = vmatpush1.msra.mxu0 %v4460
  %4470 = vmatprep.subr.mxu0 0.0
  %4471 = vmatpush1.msra.mxu0 %v4461
  %4472 = vmatprep.subr.mxu0 0.0
  %4473 = vmatpush1.msra.mxu0 %v4462
  %4474 = vmatprep.subr.mxu0 0.0
  %4475 = vmatpush1.msra.mxu0 %v4463
  %4476 = vmatprep.subr.mxu0 0.0
  %4477 = vmatpush1.msra.mxu0 %v4464
  %4478 = vmatprep.subr.mxu0 0.0
  %4479 = vmatpush1.msra.mxu0 %v4465
  %4480 = vmatprep.subr.mxu0 0.0
  %4481 = vmatpush1.msra.mxu0 %v4466
  %4482 = vmatprep.subr.mxu0 0.0
  %4483 = vmatpush1.msra.mxu0 %v4467
  %4484 = vmatprep.subr.mxu0 0.0
  %4485 = vmatpush1.msra.mxu0 0.0
  %4486 = vmatprep.subr.mxu0 0.0
  %4487 = vmatpush1.msra.mxu0 0.0
  %4488 = vmatprep.subr.mxu0 0.0
  %4489 = vmatpush1.msra.mxu0 0.0
  %4490 = vmatprep.subr.mxu0 0.0
  %4491 = vmatpush1.msra.mxu0 0.0
  %4492 = vmatprep.subr.mxu0 0.0
  %4493 = vmatpush1.msra.mxu0 0.0
  %4494 = vmatprep.subr.mxu0 0.0
  %4495 = vmatpush1.msra.mxu0 0.0
  %4496 = vmatprep.subr.mxu0 0.0
  %4497 = vmatpush1.msra.mxu0 0.0
  %4498 = vmatprep.subr.mxu0 0.0
  %4499 = vmatpush1.msra.mxu0 0.0
  %4500 = vmatprep.subr.mxu0 0.0
  %4501 = vmatpush1.msra.mxu0 0.0
  %4502 = vmatprep.subr.mxu0 0.0
  %4503 = vmatpush1.msra.mxu0 0.0
  %4504 = vmatprep.subr.mxu0 0.0
  %4505 = vmatpush1.msra.mxu0 0.0
  %4506 = vmatprep.subr.mxu0 0.0
  %4507 = vmatpush1.msra.mxu0 0.0
  %4508 = vmatprep.subr.mxu0 0.0
  %4509 = vmatpush1.msra.mxu0 0.0
  %4510 = vmatprep.subr.mxu0 0.0
  %4511 = vmatpush1.msra.mxu0 0.0
  %4512 = vmatprep.subr.mxu0 0.0
  %4513 = vmatpush1.msra.mxu0 0.0
  %4514 = vmatprep.subr.mxu0 0.0
  %4515 = vmatpush1.msra.mxu0 0.0
  %4516 = vmatprep.subr.mxu0 0.0
  %4517 = vmatpush1.msra.mxu0 0.0
  %4518 = vmatprep.subr.mxu0 0.0
  %4519 = vmatpush1.msra.mxu0 0.0
  %4520 = vmatprep.subr.mxu0 0.0
  %4521 = vmatpush1.msra.mxu0 0.0
  %4522 = vmatprep.subr.mxu0 0.0
  %4523 = vmatpush1.msra.mxu0 0.0
  %4524 = vmatprep.subr.mxu0 0.0
  %4525 = vmatpush1.msra.mxu0 0.0
  %4526 = vmatprep.subr.mxu0 0.0
  %4527 = vmatpush1.msra.mxu0 0.0
  %4528 = vmatprep.subr.mxu0 0.0
  %4529 = vmatpush1.msra.mxu0 0.0
  %4530 = vmatprep.subr.mxu0 0.0
  %4531 = vmatpush1.msra.mxu0 0.0
  %4532 = vmatprep.mubr.f32.mxu0 0.0
  %4533 = vmatmul.mubr.f32.gmra.mrb[0].mxu0 %v3481
  %v4534 = vpop.f32.mrb[0].mxu0
  %v4535 = vadd.f32 %v3438, %v4534
  %v4536 = vpop.f32.mrb[0].mxu0
  %4537 = vdwg.mxu0
  %v4538 = vmax.f32 %v4535, 0.0
  %4539 = vmatprep.subr.mxu0 0.0
  %4540 = vmatpush1.msra.mxu0 %v4538
  %4541 = vmatprep.subr.mxu0 0.0
  %4542 = vmatpush1.msra.mxu0 0.0
  %4543 = vmatprep.subr.mxu0 0.0
  %4544 = vmatpush1.msra.mxu0 0.0
  %4545 = vmatprep.subr.mxu0 0.0
  %4546 = vmatpush1.msra.mxu0 0.0
  %4547 = vmatprep.subr.mxu0 0.0
  %4548 = vmatpush1.msra.mxu0 0.0
  %4549 = vmatprep.subr.mxu0 0.0
  %4550 = vmatpush1.msra.mxu0 0.0
  %4551 = vmatprep.subr.mxu0 0.0
  %4552 = vmatpush1.msra.mxu0 0.0
  %4553 = vmatprep.subr.mxu0 0.0
  %4554 = vmatpush1.msra.mxu0 0.0
  %4555 = vmatprep.subr.mxu0 0.0
  %4556 = vmatpush1.msra.mxu0 0.0
  %4557 = vmatprep.subr.mxu0 0.0
  %4558 = vmatpush1.msra.mxu0 0.0
  %4559 = vmatprep.subr.mxu0 0.0
  %4560 = vmatpush1.msra.mxu0 0.0
  %4561 = vmatprep.subr.mxu0 0.0
  %4562 = vmatpush1.msra.mxu0 0.0
  %4563 = vmatprep.subr.mxu0 0.0
  %4564 = vmatpush1.msra.mxu0 0.0
  %4565 = vmatprep.subr.mxu0 0.0
  %4566 = vmatpush1.msra.mxu0 0.0
  %4567 = vmatprep.subr.mxu0 0.0
  %4568 = vmatpush1.msra.mxu0 0.0
  %4569 = vmatprep.subr.mxu0 0.0
  %4570 = vmatpush1.msra.mxu0 0.0
  %4571 = vmatprep.subr.mxu0 0.0
  %4572 = vmatpush1.msra.mxu0 0.0
  %4573 = vmatprep.subr.mxu0 0.0
  %4574 = vmatpush1.msra.mxu0 0.0
  %4575 = vmatprep.subr.mxu0 0.0
  %4576 = vmatpush1.msra.mxu0 0.0
  %4577 = vmatprep.subr.mxu0 0.0
  %4578 = vmatpush1.msra.mxu0 0.0
  %4579 = vmatprep.subr.mxu0 0.0
  %4580 = vmatpush1.msra.mxu0 0.0
  %4581 = vmatprep.subr.mxu0 0.0
  %4582 = vmatpush1.msra.mxu0 0.0
  %4583 = vmatprep.subr.mxu0 0.0
  %4584 = vmatpush1.msra.mxu0 0.0
  %4585 = vmatprep.subr.mxu0 0.0
  %4586 = vmatpush1.msra.mxu0 0.0
  %4587 = vmatprep.subr.mxu0 0.0
  %4588 = vmatpush1.msra.mxu0 0.0
  %4589 = vmatprep.subr.mxu0 0.0
  %4590 = vmatpush1.msra.mxu0 0.0
  %4591 = vmatprep.subr.mxu0 0.0
  %4592 = vmatpush1.msra.mxu0 0.0
  %4593 = vmatprep.subr.mxu0 0.0
  %4594 = vmatpush1.msra.mxu0 0.0
  %4595 = vmatprep.subr.mxu0 0.0
  %4596 = vmatpush1.msra.mxu0 0.0
  %4597 = vmatprep.subr.mxu0 0.0
  %4598 = vmatpush1.msra.mxu0 0.0
  %4599 = vmatprep.subr.mxu0 0.0
  %4600 = vmatpush1.msra.mxu0 0.0
  %4601 = vmatprep.subr.mxu0 0.0
  %4602 = vmatpush1.msra.mxu0 0.0
  %4603 = vmatprep.mubr.f32.mxu0 0.0
  %4604 = vmatmul.mubr.f32.gmra.mrb[0].mxu0 %v3556
  %v4605 = vpop.f32.mrb[0].mxu0
  %v4606 = vadd.f32 %v3447, %v4605
  %v4607 = vpop.f32.mrb[0].mxu0
  %4608 = vmatprep.mubr.f32.mxu0 0.0
  %4609 = vmatmul.mubr.f32.gmra.mrb[0].mxu0 %v3559
  %v4610 = vpop.f32.mrb[0].mxu0
  %v4611 = vadd.f32 %v3448, %v4610
  %v4612 = vpop.f32.mrb[0].mxu0
  %4613 = vmatprep.mubr.f32.mxu0 0.0
  %4614 = vmatmul.mubr.f32.gmra.mrb[0].mxu0 %v3562
  %v4615 = vpop.f32.mrb[0].mxu0
  %v4616 = vadd.f32 %v3449, %v4615
  %v4617 = vpop.f32.mrb[0].mxu0
  %4618 = vmatprep.mubr.f32.mxu0 0.0
  %4619 = vmatmul.mubr.f32.gmra.mrb[0].mxu0 %v3565
  %v4620 = vpop.f32.mrb[0].mxu0
  %v4621 = vadd.f32 %v3450, %v4620
  %v4622 = vpop.f32.mrb[0].mxu0
  %4623 = vmatprep.mubr.f32.mxu0 0.0
  %4624 = vmatmul.mubr.f32.gmra.mrb[0].mxu0 %v3568
  %v4625 = vpop.f32.mrb[0].mxu0
  %v4626 = vadd.f32 %v3451, %v4625
  %v4627 = vpop.f32.mrb[0].mxu0
  %4628 = vmatprep.mubr.f32.mxu0 0.0
  %4629 = vmatmul.mubr.f32.gmra.mrb[0].mxu0 %v3571
  %v4630 = vpop.f32.mrb[0].mxu0
  %v4631 = vadd.f32 %v3452, %v4630
  %v4632 = vpop.f32.mrb[0].mxu0
  %4633 = vmatprep.mubr.f32.mxu0 0.0
  %4634 = vmatmul.mubr.f32.gmra.mrb[0].mxu0 %v3574
  %v4635 = vpop.f32.mrb[0].mxu0
  %v4636 = vadd.f32 %v3453, %v4635
  %v4637 = vpop.f32.mrb[0].mxu0
  %4638 = vmatprep.mubr.f32.mxu0 0.0
  %4639 = vmatmul.mubr.f32.gmra.mrb[0].mxu0 %v3577
  %v4640 = vpop.f32.mrb[0].mxu0
  %v4641 = vadd.f32 %v3454, %v4640
  %v4642 = vpop.f32.mrb[0].mxu0
  %4643 = vdwg.mxu0
  %v4644 = vxor.u32 %v4606, 2147483648
  %v4645 = vxor.u32 %v4611, 2147483648
  %v4646 = vxor.u32 %v4616, 2147483648
  %v4647 = vxor.u32 %v4621, 2147483648
  %v4648 = vxor.u32 %v4626, 2147483648
  %v4649 = vxor.u32 %v4631, 2147483648
  %v4650 = vxor.u32 %v4636, 2147483648
  %v4651 = vxor.u32 %v4641, 2147483648
  %v4652 = vmul.f32 %v4644, 1.442695
  %v4653 = vpow.pop %v4652
  %v4654 = vmul.f32 %v4645, 1.442695
  %v4655 = vpow.pop %v4654
  %v4656 = vmul.f32 %v4646, 1.442695
  %v4657 = vpow.pop %v4656
  %v4658 = vmul.f32 %v4647, 1.442695
  %v4659 = vpow.pop %v4658
  %v4660 = vmul.f32 %v4648, 1.442695
  %v4661 = vpow.pop %v4660
  %v4662 = vmul.f32 %v4649, 1.442695
  %v4663 = vpow.pop %v4662
  %v4664 = vmul.f32 %v4650, 1.442695
  %v4665 = vpow.pop %v4664
  %v4666 = vmul.f32 %v4651, 1.442695
  %v4667 = vpow.pop %v4666
  %v4668 = vadd.f32 %v4653, 1.0
  %v4669 = vadd.f32 %v4655, 1.0
  %v4670 = vadd.f32 %v4657, 1.0
  %v4671 = vadd.f32 %v4659, 1.0
  %v4672 = vadd.f32 %v4661, 1.0
  %v4673 = vadd.f32 %v4663, 1.0
  %v4674 = vadd.f32 %v4665, 1.0
  %v4675 = vadd.f32 %v4667, 1.0
  %v4676 = vrcp.pop %v4668
  %v4677 = vmul.f32 1.0, %v4676
  %v4678 = vrcp.pop %v4669
  %v4679 = vmul.f32 1.0, %v4678
  %v4680 = vrcp.pop %v4670
  %v4681 = vmul.f32 1.0, %v4680
  %v4682 = vrcp.pop %v4671
  %v4683 = vmul.f32 1.0, %v4682
  %v4684 = vrcp.pop %v4672
  %v4685 = vmul.f32 1.0, %v4684
  %v4686 = vrcp.pop %v4673
  %v4687 = vmul.f32 1.0, %v4686
  %v4688 = vrcp.pop %v4674
  %v4689 = vmul.f32 1.0, %v4688
  %v4690 = vrcp.pop %v4675
  %v4691 = vmul.f32 1.0, %v4690
  %4693 = vset.pattern.permute.xlu0 0
  %4694 = vperm.xlu0 %4693, %v4677
  %v4695 = vpop.permute.xlu0 %4694
  %4698 = vset.pattern.permute.xlu0 0
  %4699 = vperm.xlu0 %4698, %v4679
  %v4700 = vpop.permute.xlu0 %4699
  %4703 = vset.pattern.permute.xlu0 0
  %4704 = vperm.xlu0 %4703, %v4681
  %v4705 = vpop.permute.xlu0 %4704
  %4708 = vset.pattern.permute.xlu0 0
  %4709 = vperm.xlu0 %4708, %v4683
  %v4710 = vpop.permute.xlu0 %4709
  %4713 = vset.pattern.permute.xlu0 0
  %4714 = vperm.xlu0 %4713, %v4685
  %v4715 = vpop.permute.xlu0 %4714
  %4718 = vset.pattern.permute.xlu0 0
  %4719 = vperm.xlu0 %4718, %v4687
  %v4720 = vpop.permute.xlu0 %4719
  %4723 = vset.pattern.permute.xlu0 0
  %4724 = vperm.xlu0 %4723, %v4689
  %v4725 = vpop.permute.xlu0 %4724
  %4728 = vset.pattern.permute.xlu0 0
  %4729 = vperm.xlu0 %4728, %v4691
  %v4730 = vpop.permute.xlu0 %4729
  %v4732 = vmul.f32 %v3174, %v4695
  %v4733 = vmul.f32 %v3178, %v4700
  %v4734 = vmul.f32 %v3182, %v4705
  %v4735 = vmul.f32 %v3186, %v4710
  %v4736 = vmul.f32 %v3190, %v4715
  %v4737 = vmul.f32 %v3194, %v4720
  %v4738 = vmul.f32 %v3198, %v4725
  %v4739 = vmul.f32 %v3202, %v4730
  %v4740 = vadd.f32 %v4732, %v3401
  %v4741 = vadd.f32 %v4733, %v3405
  %v4742 = vadd.f32 %v4734, %v3411
  %v4743 = vadd.f32 %v4735, %v3415
  %v4744 = vadd.f32 %v4736, %v3421
  %v4745 = vadd.f32 %v4737, %v3425
  %v4746 = vadd.f32 %v4738, %v3431
  %v4747 = vadd.f32 %v4739, %v3435
  %v4748 = vmax.f32 %v4740, 0.0
  %v4749 = vmax.f32 %v4741, 0.0
  %v4750 = vmax.f32 %v4742, 0.0
  %v4751 = vmax.f32 %v4743, 0.0
  %v4752 = vmax.f32 %v4744, 0.0
  %v4753 = vmax.f32 %v4745, 0.0
  %v4754 = vmax.f32 %v4746, 0.0
  %v4755 = vmax.f32 %v4747, 0.0
  %4756 = vst [vmem:[%s13 + $0x18] sm:$0xff] %v4748
  %4757 = vst [vmem:[%s13 + $0x38] sm:$0xff] %v4749
  %4758 = vst [vmem:[%s13 + $0x58] sm:$0xff] %v4750
  %4759 = vst [vmem:[%s13 + $0x78] sm:$0xff] %v4751
  %4760 = vst [vmem:[%s13 + $0x98] sm:$0xff] %v4752
  %4761 = vst [vmem:[%s13 + $0xb8] sm:$0xff] %v4753
  %4762 = vst [vmem:[%s13 + $0xd8] sm:$0xff] %v4754
  %4763 = vst [vmem:[%s13 + $0xf8] sm:$0xff] %v4755
  // Predicated region
  $region54: #{block_forward.1} parent=0 // pred_check
    _
  $region55: #{block_forward.1} parent=0 // pred_check_branch
    %4765 = sbr.rel (0) target = $region57
  $region56: #{block_forward.1} parent=0 // pred_region
    _
  $region57: #{block_forward.1} parent=0 // pred_fallthru
    _
  // Predicated region
  $region58: #{block_forward.1} parent=0 // pred_check
    _
  $region59: #{block_forward.1} parent=0 // pred_check_branch
    %4767 = sbr.rel (0) target = $region61
  $region60: #{block_forward.1} parent=0 // pred_region
    _
  $region61: #{block_forward.1} parent=0 // pred_fallthru
    _

</llo_original>
